<compile_context>
chip_gen: v6e
topology: v6e:2x2x1
jax: 0.10.0
libtpu: 0.0.40
codegen_flags: <defaults>
</compile_context>

<pallas_src>
import jax
import jax.numpy as jnp
from jax.experimental import pallas as pl
from jax.experimental.pallas import tpu as pltpu

_BN_EPS = 1e-5
_C_PAD = 128  # one lane tile


def _dense_block_kernel(x_ref, w_ref, b_ref, o_ref, apad_ref):
    # x_ref   : (N, H, W, C_PAD)          input, real channels in [0:Cin), rest zero
    # w_ref   : (num_convs, 9*C_PAD, C_PAD) im2col-flattened conv weights, zero-padded,
    #                                       output columns pre-shifted to the step's
    #                                       channel offset in the concat buffer
    # b_ref   : (num_convs, 1, C_PAD)       bias, zero-padded / offset the same way
    # o_ref   : (N, H, W, C_PAD)            concatenated activation (the DenseBlock output)
    # apad_ref: (N, H+2, W+2, C_PAD)        scratch: spatially zero-padded BN+ReLU activation
    N, H, W, C = x_ref.shape
    num_convs = w_ref.shape[0]
    inv_count = 1.0 / float(N * H * W)

    # The output ref doubles as the growing concat buffer (resident in VMEM).
    o_ref[...] = x_ref[...]
    # Zero the padded-activation scratch once; the interior is overwritten every step,
    # the 1-pixel border stays zero (== Conv2d's zero padding of the BN+ReLU output).
    apad_ref[...] = jnp.zeros_like(apad_ref)

    for t in range(num_convs):  # static unroll (num_convs = 2)
        a = o_ref[...]

        # BatchNorm2d (training-mode batch stats) per channel, fused sum / sum-of-squares.
        # Zero-padded channels give mean=0, var=0 -> normalize to 0 -> ReLU 0 (harmless).
        s1 = jnp.sum(a, axis=(0, 1, 2), keepdims=True)
        s2 = jnp.sum(a * a, axis=(0, 1, 2), keepdims=True)
        mean = s1 * inv_count
        var = jnp.maximum(s2 * inv_count - mean * mean, 0.0)  # biased variance
        act = jnp.maximum((a - mean) * jax.lax.rsqrt(var + _BN_EPS), 0.0)  # BN + ReLU

        # Zero-pad spatially inside the kernel (border already zero).
        apad_ref[:, 1:H + 1, 1:W + 1, :] = act
        ap = apad_ref[...]

        # im2col: (N*H*W, 9*C_PAD), then ONE MXU matmul per step.
        cols = [ap[:, dy:dy + H, dx:dx + W, :].reshape(N * H * W, C)
                for dy in range(3) for dx in range(3)]
        patches = jnp.concatenate(cols, axis=1)
        y = jnp.dot(patches, w_ref[t], preferred_element_type=jnp.float32)
        y = y + b_ref[t]  # (1, C_PAD) broadcast

        # "torch.cat([X, Y], dim=1)": y is zero except on this step's output-channel
        # lanes (weights/bias were placed at that offset), so concat == add.
        o_ref[...] = a + y.reshape(N, H, W, C)


def dense_block_forward(x_nchw, params, c_pad=_C_PAD):
    """DenseBlock.forward, fully fused in one Pallas kernel.

    x_nchw: (N, Cin, H, W) float32
    params: list of (w, b) with w: (3, 3, cin_t, cout), b: (cout,)
    """
    N, c_in, H, W = x_nchw.shape
    x = jnp.transpose(x_nchw, (0, 2, 3, 1)).astype(jnp.float32)  # NCHW -> NHWC
    x_pad = jnp.zeros((N, H, W, c_pad), jnp.float32).at[..., :c_in].set(x)

    # Layout plumbing for the weights, done once in the wrapper (not 9x inside the kernel):
    # flatten to im2col layout (9*C_PAD, C_PAD) with output columns at the channel offset
    # where this step's Y lands in the concat buffer; pad bias to lane width likewise.
    w_list, b_list = [], []
    off = c_in
    for (w, b) in params:
        kh, kw, cin, cout = w.shape
        assert off + cout <= c_pad, "total channels exceed lane padding"
        wp = jnp.zeros((kh, kw, c_pad, c_pad), jnp.float32)
        wp = wp.at[:, :, :cin, off:off + cout].set(w.astype(jnp.float32))
        w_list.append(wp.reshape(kh * kw * c_pad, c_pad))
        bp = jnp.zeros((1, c_pad), jnp.float32).at[0, off:off + cout].set(
            b.astype(jnp.float32))
        b_list.append(bp)
        off += cout
    w_flat = jnp.stack(w_list)   # (num_convs, 9*C_PAD, C_PAD)
    b_flat = jnp.stack(b_list)   # (num_convs, 1, C_PAD)

    vmem = pltpu.MemorySpace.VMEM
    out_pad = pl.pallas_call(
        _dense_block_kernel,
        out_shape=jax.ShapeDtypeStruct((N, H, W, c_pad), jnp.float32),
        in_specs=[
            pl.BlockSpec(memory_space=vmem),  # x (channel-padded)
            pl.BlockSpec(memory_space=vmem),  # stacked flat conv weights
            pl.BlockSpec(memory_space=vmem),  # stacked padded biases
        ],
        out_specs=pl.BlockSpec(memory_space=vmem),
        scratch_shapes=[pltpu.VMEM((N, H + 2, W + 2, c_pad), jnp.float32)],
    )(x_pad, w_flat, b_flat)

    out = out_pad[..., :off]                 # drop lane padding -> (N, H, W, 23)
    return jnp.transpose(out, (0, 3, 1, 2))  # NHWC -> NCHW


def init_dense_block(key, num_convs, input_channels, num_channels):
    """Deterministic parameter init. BN uses gamma=1, beta=0 (PyTorch defaults),
    so only conv weights/biases are materialized."""
    params = []
    cin = input_channels
    for _ in range(num_convs):
        key, kw, kb = jax.random.split(key, 3)
        w = 0.1 * jax.random.normal(kw, (3, 3, cin, num_channels), jnp.float32)
        b = 0.1 * jax.random.normal(kb, (num_channels,), jnp.float32)
        params.append((w, b))
        cin += num_channels
    return params


def _reference_forward(x_nchw, params):
    """Pure-JAX reference (BN train-mode + ReLU + Conv3x3 pad=1 + concat)."""
    x = jnp.transpose(x_nchw, (0, 2, 3, 1)).astype(jnp.float32)
    for (w, b) in params:
        mean = jnp.mean(x, axis=(0, 1, 2), keepdims=True)
        var = jnp.mean((x - mean) ** 2, axis=(0, 1, 2), keepdims=True)
        a = jnp.maximum((x - mean) * jax.lax.rsqrt(var + _BN_EPS), 0.0)
        y = jax.lax.conv_general_dilated(
            a, w, window_strides=(1, 1), padding=((1, 1), (1, 1)),
            dimension_numbers=("NHWC", "HWIO", "NHWC"),
            precision=jax.lax.Precision.HIGHEST) + b
        x = jnp.concatenate([x, y], axis=-1)
    return jnp.transpose(x, (0, 3, 1, 2))


if __name__ == "__main__":
    # Mirrors the module usage: X = torch.randn(4, 3, 8, 8); blk = DenseBlock(2, 3, 10)
    key = jax.random.PRNGKey(0)
    k_x, k_p = jax.random.split(key)
    x = jax.random.normal(k_x, (4, 3, 8, 8), jnp.float32)
    params = init_dense_block(k_p, num_convs=2, input_channels=3, num_channels=10)

    fwd = jax.jit(dense_block_forward)
    y = jax.block_until_ready(fwd(x, params))

    assert y.shape == (4, 3 + 2 * 10, 8, 8), y.shape
    assert bool(jnp.all(jnp.isfinite(y)))
    y_ref = _reference_forward(x, params)
    assert bool(jnp.allclose(y, y_ref, atol=5e-2, rtol=5e-2))
    print("KERNEL_OK")
</pallas_src>

<mosaic_0001>
module attributes {stable_mosaic.version = 11 : i64} {
  func.func @_dense_block_kernel(%arg0: memref<4x8x8x128xf32, #tpu.memory_space<vmem>>, %arg1: memref<2x1152x128xf32, #tpu.memory_space<vmem>>, %arg2: memref<2x1x128xf32, #tpu.memory_space<vmem>>, %arg3: memref<4x8x8x128xf32, #tpu.memory_space<vmem>>, %arg4: memref<4x10x10x128xf32, #tpu.memory_space<vmem>>) attributes {dimension_semantics = [], scalar_prefetch = 0 : i64, scratch_operands = 1 : i64, tpu.core_type = #tpu.core_type<tc>} {
    %c0 = arith.constant 0 : index
    %c0_0 = arith.constant 0 : index
    %c0_1 = arith.constant 0 : index
    %c0_2 = arith.constant 0 : index
    %0 = vector.load %arg0[%c0, %c0_0, %c0_1, %c0_2] : memref<4x8x8x128xf32, #tpu.memory_space<vmem>>, vector<4x8x8x128xf32>
    %c0_3 = arith.constant 0 : index
    %c0_4 = arith.constant 0 : index
    %c0_5 = arith.constant 0 : index
    %c0_6 = arith.constant 0 : index
    %1 = vector.load %arg3[%c0_3, %c0_4, %c0_5, %c0_6] : memref<4x8x8x128xf32, #tpu.memory_space<vmem>>, vector<4x8x8x128xf32>
    tpu.vector_store %arg3[%c0_3, %c0_4, %c0_5, %c0_6], %0 {strides = array<i32>} : memref<4x8x8x128xf32, #tpu.memory_space<vmem>>, vector<4x8x8x128xf32>,
    %cst = arith.constant 0.000000e+00 : f32
    %2 = vector.broadcast %cst : f32 to vector<4x10x10x128xf32>
    %c0_7 = arith.constant 0 : index
    %c0_8 = arith.constant 0 : index
    %c0_9 = arith.constant 0 : index
    %c0_10 = arith.constant 0 : index
    %3 = vector.load %arg4[%c0_7, %c0_8, %c0_9, %c0_10] : memref<4x10x10x128xf32, #tpu.memory_space<vmem>>, vector<4x10x10x128xf32>
    tpu.vector_store %arg4[%c0_7, %c0_8, %c0_9, %c0_10], %2 {strides = array<i32>} : memref<4x10x10x128xf32, #tpu.memory_space<vmem>>, vector<4x10x10x128xf32>,
    %c0_11 = arith.constant 0 : index
    %c0_12 = arith.constant 0 : index
    %c0_13 = arith.constant 0 : index
    %c0_14 = arith.constant 0 : index
    %4 = vector.load %arg3[%c0_11, %c0_12, %c0_13, %c0_14] : memref<4x8x8x128xf32, #tpu.memory_space<vmem>>, vector<4x8x8x128xf32>
    %cst_15 = arith.constant dense<0.000000e+00> : vector<128xf32>
    %5 = vector.multi_reduction <add>, %4, %cst_15 [0, 1, 2] : vector<4x8x8x128xf32> to vector<128xf32>
    %6 = vector.shape_cast %5 : vector<128xf32> to vector<1x1x1x128xf32>
    %7 = arith.mulf %4, %4 : vector<4x8x8x128xf32>
    %cst_16 = arith.constant dense<0.000000e+00> : vector<128xf32>
    %8 = vector.multi_reduction <add>, %7, %cst_16 [0, 1, 2] : vector<4x8x8x128xf32> to vector<128xf32>
    %9 = vector.shape_cast %8 : vector<128xf32> to vector<1x1x1x128xf32>
    %cst_17 = arith.constant 3.906250e-03 : f32
    %10 = vector.broadcast %cst_17 : f32 to vector<1x1x1x128xf32>
    %11 = arith.mulf %6, %10 : vector<1x1x1x128xf32>
    %cst_18 = arith.constant 3.906250e-03 : f32
    %12 = vector.broadcast %cst_18 : f32 to vector<1x1x1x128xf32>
    %13 = arith.mulf %9, %12 : vector<1x1x1x128xf32>
    %14 = arith.mulf %11, %11 : vector<1x1x1x128xf32>
    %15 = arith.subf %13, %14 : vector<1x1x1x128xf32>
    %cst_19 = arith.constant 0.000000e+00 : f32
    %16 = vector.broadcast %cst_19 : f32 to vector<1x1x1x128xf32>
    %17 = arith.maximumf %15, %16 : vector<1x1x1x128xf32>
    %18 = vector.broadcast %11 : vector<1x1x1x128xf32> to vector<4x8x8x128xf32>
    %19 = arith.subf %4, %18 : vector<4x8x8x128xf32>
    %cst_20 = arith.constant 9.99999974E-6 : f32
    %20 = vector.broadcast %cst_20 : f32 to vector<1x1x1x128xf32>
    %21 = arith.addf %17, %20 : vector<1x1x1x128xf32>
    %22 = math.rsqrt %21 : vector<1x1x1x128xf32>
    %23 = vector.broadcast %22 : vector<1x1x1x128xf32> to vector<4x8x8x128xf32>
    %24 = arith.mulf %19, %23 : vector<4x8x8x128xf32>
    %cst_21 = arith.constant 0.000000e+00 : f32
    %25 = vector.broadcast %cst_21 : f32 to vector<4x8x8x128xf32>
    %26 = arith.maximumf %24, %25 : vector<4x8x8x128xf32>
    %c0_22 = arith.constant 0 : index
    %c1 = arith.constant 1 : index
    %c1_23 = arith.constant 1 : index
    %c0_24 = arith.constant 0 : index
    %27 = vector.load %arg4[%c0_22, %c1, %c1_23, %c0_24] : memref<4x10x10x128xf32, #tpu.memory_space<vmem>>, vector<4x8x8x128xf32>
    tpu.vector_store %arg4[%c0_22, %c1, %c1_23, %c0_24], %26 {strides = array<i32>} : memref<4x10x10x128xf32, #tpu.memory_space<vmem>>, vector<4x8x8x128xf32>,
    %c0_25 = arith.constant 0 : index
    %c0_26 = arith.constant 0 : index
    %c0_27 = arith.constant 0 : index
    %c0_28 = arith.constant 0 : index
    %28 = vector.load %arg4[%c0_25, %c0_26, %c0_27, %c0_28] : memref<4x10x10x128xf32, #tpu.memory_space<vmem>>, vector<4x10x10x128xf32>
    %29 = vector.extract_strided_slice %28 {offsets = [0, 0, 0, 0], sizes = [4, 8, 8, 128], strides = [1, 1, 1, 1]} : vector<4x10x10x128xf32> to vector<4x8x8x128xf32>
    %30 = vector.shape_cast %29 : vector<4x8x8x128xf32> to vector<256x128xf32>
    %31 = vector.extract_strided_slice %28 {offsets = [0, 0, 1, 0], sizes = [4, 8, 8, 128], strides = [1, 1, 1, 1]} : vector<4x10x10x128xf32> to vector<4x8x8x128xf32>
    %32 = vector.shape_cast %31 : vector<4x8x8x128xf32> to vector<256x128xf32>
    %33 = vector.extract_strided_slice %28 {offsets = [0, 0, 2, 0], sizes = [4, 8, 8, 128], strides = [1, 1, 1, 1]} : vector<4x10x10x128xf32> to vector<4x8x8x128xf32>
    %34 = vector.shape_cast %33 : vector<4x8x8x128xf32> to vector<256x128xf32>
    %35 = vector.extract_strided_slice %28 {offsets = [0, 1, 0, 0], sizes = [4, 8, 8, 128], strides = [1, 1, 1, 1]} : vector<4x10x10x128xf32> to vector<4x8x8x128xf32>
    %36 = vector.shape_cast %35 : vector<4x8x8x128xf32> to vector<256x128xf32>
    %37 = vector.extract_strided_slice %28 {offsets = [0, 1, 1, 0], sizes = [4, 8, 8, 128], strides = [1, 1, 1, 1]} : vector<4x10x10x128xf32> to vector<4x8x8x128xf32>
    %38 = vector.shape_cast %37 : vector<4x8x8x128xf32> to vector<256x128xf32>
    %39 = vector.extract_strided_slice %28 {offsets = [0, 1, 2, 0], sizes = [4, 8, 8, 128], strides = [1, 1, 1, 1]} : vector<4x10x10x128xf32> to vector<4x8x8x128xf32>
    %40 = vector.shape_cast %39 : vector<4x8x8x128xf32> to vector<256x128xf32>
    %41 = vector.extract_strided_slice %28 {offsets = [0, 2, 0, 0], sizes = [4, 8, 8, 128], strides = [1, 1, 1, 1]} : vector<4x10x10x128xf32> to vector<4x8x8x128xf32>
    %42 = vector.shape_cast %41 : vector<4x8x8x128xf32> to vector<256x128xf32>
    %43 = vector.extract_strided_slice %28 {offsets = [0, 2, 1, 0], sizes = [4, 8, 8, 128], strides = [1, 1, 1, 1]} : vector<4x10x10x128xf32> to vector<4x8x8x128xf32>
    %44 = vector.shape_cast %43 : vector<4x8x8x128xf32> to vector<256x128xf32>
    %45 = vector.extract_strided_slice %28 {offsets = [0, 2, 2, 0], sizes = [4, 8, 8, 128], strides = [1, 1, 1, 1]} : vector<4x10x10x128xf32> to vector<4x8x8x128xf32>
    %46 = vector.shape_cast %45 : vector<4x8x8x128xf32> to vector<256x128xf32>
    %47 = tpu.concatenate %30, %32, %34, %36, %38, %40, %42, %44, %46 in 1 : vector<256x128xf32>, vector<256x128xf32>, vector<256x128xf32>, vector<256x128xf32>, vector<256x128xf32>, vector<256x128xf32>, vector<256x128xf32>, vector<256x128xf32>, vector<256x128xf32> -> vector<256x1152xf32>
    %c0_29 = arith.constant 0 : index
    %c0_30 = arith.constant 0 : index
    %c0_31 = arith.constant 0 : index
    %48 = vector.load %arg1[%c0_29, %c0_30, %c0_31] : memref<2x1152x128xf32, #tpu.memory_space<vmem>>, vector<1x1152x128xf32>
    %49 = vector.shape_cast %48 : vector<1x1152x128xf32> to vector<1152x128xf32>
    %cst_32 = arith.constant dense<0.000000e+00> : vector<256x128xf32>
    %50 = tpu.matmul %47, %49, %cst_32 {dimension_numbers = #tpu.dot_dimension_numbers<[1], [0], [0], [1], [0, 0, 1, 1], [], []>} : vector<256x1152xf32>, vector<1152x128xf32>, vector<256x128xf32> -> vector<256x128xf32>
    %c0_33 = arith.constant 0 : index
    %c0_34 = arith.constant 0 : index
    %c0_35 = arith.constant 0 : index
    %51 = vector.load %arg2[%c0_33, %c0_34, %c0_35] : memref<2x1x128xf32, #tpu.memory_space<vmem>>, vector<1x1x128xf32>
    %52 = vector.shape_cast %51 : vector<1x1x128xf32> to vector<1x128xf32>
    %53 = vector.broadcast %52 : vector<1x128xf32> to vector<256x128xf32>
    %54 = arith.addf %50, %53 : vector<256x128xf32>
    %55 = vector.shape_cast %54 : vector<256x128xf32> to vector<4x8x8x128xf32>
    %56 = arith.addf %4, %55 : vector<4x8x8x128xf32>
    %c0_36 = arith.constant 0 : index
    %c0_37 = arith.constant 0 : index
    %c0_38 = arith.constant 0 : index
    %c0_39 = arith.constant 0 : index
    %57 = vector.load %arg3[%c0_36, %c0_37, %c0_38, %c0_39] : memref<4x8x8x128xf32, #tpu.memory_space<vmem>>, vector<4x8x8x128xf32>
    tpu.vector_store %arg3[%c0_36, %c0_37, %c0_38, %c0_39], %56 {strides = array<i32>} : memref<4x8x8x128xf32, #tpu.memory_space<vmem>>, vector<4x8x8x128xf32>,
    %c0_40 = arith.constant 0 : index
    %c0_41 = arith.constant 0 : index
    %c0_42 = arith.constant 0 : index
    %c0_43 = arith.constant 0 : index
    %58 = vector.load %arg3[%c0_40, %c0_41, %c0_42, %c0_43] : memref<4x8x8x128xf32, #tpu.memory_space<vmem>>, vector<4x8x8x128xf32>
    %cst_44 = arith.constant dense<0.000000e+00> : vector<128xf32>
    %59 = vector.multi_reduction <add>, %58, %cst_44 [0, 1, 2] : vector<4x8x8x128xf32> to vector<128xf32>
    %60 = vector.shape_cast %59 : vector<128xf32> to vector<1x1x1x128xf32>
    %61 = arith.mulf %58, %58 : vector<4x8x8x128xf32>
    %cst_45 = arith.constant dense<0.000000e+00> : vector<128xf32>
    %62 = vector.multi_reduction <add>, %61, %cst_45 [0, 1, 2] : vector<4x8x8x128xf32> to vector<128xf32>
    %63 = vector.shape_cast %62 : vector<128xf32> to vector<1x1x1x128xf32>
    %cst_46 = arith.constant 3.906250e-03 : f32
    %64 = vector.broadcast %cst_46 : f32 to vector<1x1x1x128xf32>
    %65 = arith.mulf %60, %64 : vector<1x1x1x128xf32>
    %cst_47 = arith.constant 3.906250e-03 : f32
    %66 = vector.broadcast %cst_47 : f32 to vector<1x1x1x128xf32>
    %67 = arith.mulf %63, %66 : vector<1x1x1x128xf32>
    %68 = arith.mulf %65, %65 : vector<1x1x1x128xf32>
    %69 = arith.subf %67, %68 : vector<1x1x1x128xf32>
    %cst_48 = arith.constant 0.000000e+00 : f32
    %70 = vector.broadcast %cst_48 : f32 to vector<1x1x1x128xf32>
    %71 = arith.maximumf %69, %70 : vector<1x1x1x128xf32>
    %72 = vector.broadcast %65 : vector<1x1x1x128xf32> to vector<4x8x8x128xf32>
    %73 = arith.subf %58, %72 : vector<4x8x8x128xf32>
    %cst_49 = arith.constant 9.99999974E-6 : f32
    %74 = vector.broadcast %cst_49 : f32 to vector<1x1x1x128xf32>
    %75 = arith.addf %71, %74 : vector<1x1x1x128xf32>
    %76 = math.rsqrt %75 : vector<1x1x1x128xf32>
    %77 = vector.broadcast %76 : vector<1x1x1x128xf32> to vector<4x8x8x128xf32>
    %78 = arith.mulf %73, %77 : vector<4x8x8x128xf32>
    %cst_50 = arith.constant 0.000000e+00 : f32
    %79 = vector.broadcast %cst_50 : f32 to vector<4x8x8x128xf32>
    %80 = arith.maximumf %78, %79 : vector<4x8x8x128xf32>
    %c0_51 = arith.constant 0 : index
    %c1_52 = arith.constant 1 : index
    %c1_53 = arith.constant 1 : index
    %c0_54 = arith.constant 0 : index
    %81 = vector.load %arg4[%c0_51, %c1_52, %c1_53, %c0_54] : memref<4x10x10x128xf32, #tpu.memory_space<vmem>>, vector<4x8x8x128xf32>
    tpu.vector_store %arg4[%c0_51, %c1_52, %c1_53, %c0_54], %80 {strides = array<i32>} : memref<4x10x10x128xf32, #tpu.memory_space<vmem>>, vector<4x8x8x128xf32>,
    %c0_55 = arith.constant 0 : index
    %c0_56 = arith.constant 0 : index
    %c0_57 = arith.constant 0 : index
    %c0_58 = arith.constant 0 : index
    %82 = vector.load %arg4[%c0_55, %c0_56, %c0_57, %c0_58] : memref<4x10x10x128xf32, #tpu.memory_space<vmem>>, vector<4x10x10x128xf32>
    %83 = vector.extract_strided_slice %82 {offsets = [0, 0, 0, 0], sizes = [4, 8, 8, 128], strides = [1, 1, 1, 1]} : vector<4x10x10x128xf32> to vector<4x8x8x128xf32>
    %84 = vector.shape_cast %83 : vector<4x8x8x128xf32> to vector<256x128xf32>
    %85 = vector.extract_strided_slice %82 {offsets = [0, 0, 1, 0], sizes = [4, 8, 8, 128], strides = [1, 1, 1, 1]} : vector<4x10x10x128xf32> to vector<4x8x8x128xf32>
    %86 = vector.shape_cast %85 : vector<4x8x8x128xf32> to vector<256x128xf32>
    %87 = vector.extract_strided_slice %82 {offsets = [0, 0, 2, 0], sizes = [4, 8, 8, 128], strides = [1, 1, 1, 1]} : vector<4x10x10x128xf32> to vector<4x8x8x128xf32>
    %88 = vector.shape_cast %87 : vector<4x8x8x128xf32> to vector<256x128xf32>
    %89 = vector.extract_strided_slice %82 {offsets = [0, 1, 0, 0], sizes = [4, 8, 8, 128], strides = [1, 1, 1, 1]} : vector<4x10x10x128xf32> to vector<4x8x8x128xf32>
    %90 = vector.shape_cast %89 : vector<4x8x8x128xf32> to vector<256x128xf32>
    %91 = vector.extract_strided_slice %82 {offsets = [0, 1, 1, 0], sizes = [4, 8, 8, 128], strides = [1, 1, 1, 1]} : vector<4x10x10x128xf32> to vector<4x8x8x128xf32>
    %92 = vector.shape_cast %91 : vector<4x8x8x128xf32> to vector<256x128xf32>
    %93 = vector.extract_strided_slice %82 {offsets = [0, 1, 2, 0], sizes = [4, 8, 8, 128], strides = [1, 1, 1, 1]} : vector<4x10x10x128xf32> to vector<4x8x8x128xf32>
    %94 = vector.shape_cast %93 : vector<4x8x8x128xf32> to vector<256x128xf32>
    %95 = vector.extract_strided_slice %82 {offsets = [0, 2, 0, 0], sizes = [4, 8, 8, 128], strides = [1, 1, 1, 1]} : vector<4x10x10x128xf32> to vector<4x8x8x128xf32>
    %96 = vector.shape_cast %95 : vector<4x8x8x128xf32> to vector<256x128xf32>
    %97 = vector.extract_strided_slice %82 {offsets = [0, 2, 1, 0], sizes = [4, 8, 8, 128], strides = [1, 1, 1, 1]} : vector<4x10x10x128xf32> to vector<4x8x8x128xf32>
    %98 = vector.shape_cast %97 : vector<4x8x8x128xf32> to vector<256x128xf32>
    %99 = vector.extract_strided_slice %82 {offsets = [0, 2, 2, 0], sizes = [4, 8, 8, 128], strides = [1, 1, 1, 1]} : vector<4x10x10x128xf32> to vector<4x8x8x128xf32>
    %100 = vector.shape_cast %99 : vector<4x8x8x128xf32> to vector<256x128xf32>
    %101 = tpu.concatenate %84, %86, %88, %90, %92, %94, %96, %98, %100 in 1 : vector<256x128xf32>, vector<256x128xf32>, vector<256x128xf32>, vector<256x128xf32>, vector<256x128xf32>, vector<256x128xf32>, vector<256x128xf32>, vector<256x128xf32>, vector<256x128xf32> -> vector<256x1152xf32>
    %c1_59 = arith.constant 1 : index
    %c0_60 = arith.constant 0 : index
    %c0_61 = arith.constant 0 : index
    %102 = vector.load %arg1[%c1_59, %c0_60, %c0_61] : memref<2x1152x128xf32, #tpu.memory_space<vmem>>, vector<1x1152x128xf32>
    %103 = vector.shape_cast %102 : vector<1x1152x128xf32> to vector<1152x128xf32>
    %cst_62 = arith.constant dense<0.000000e+00> : vector<256x128xf32>
    %104 = tpu.matmul %101, %103, %cst_62 {dimension_numbers = #tpu.dot_dimension_numbers<[1], [0], [0], [1], [0, 0, 1, 1], [], []>} : vector<256x1152xf32>, vector<1152x128xf32>, vector<256x128xf32> -> vector<256x128xf32>
    %c1_63 = arith.constant 1 : index
    %c0_64 = arith.constant 0 : index
    %c0_65 = arith.constant 0 : index
    %105 = vector.load %arg2[%c1_63, %c0_64, %c0_65] : memref<2x1x128xf32, #tpu.memory_space<vmem>>, vector<1x1x128xf32>
    %106 = vector.shape_cast %105 : vector<1x1x128xf32> to vector<1x128xf32>
    %107 = vector.broadcast %106 : vector<1x128xf32> to vector<256x128xf32>
    %108 = arith.addf %104, %107 : vector<256x128xf32>
    %109 = vector.shape_cast %108 : vector<256x128xf32> to vector<4x8x8x128xf32>
    %110 = arith.addf %58, %109 : vector<4x8x8x128xf32>
    %c0_66 = arith.constant 0 : index
    %c0_67 = arith.constant 0 : index
    %c0_68 = arith.constant 0 : index
    %c0_69 = arith.constant 0 : index
    %111 = vector.load %arg3[%c0_66, %c0_67, %c0_68, %c0_69] : memref<4x8x8x128xf32, #tpu.memory_space<vmem>>, vector<4x8x8x128xf32>
    tpu.vector_store %arg3[%c0_66, %c0_67, %c0_68, %c0_69], %110 {strides = array<i32>} : memref<4x8x8x128xf32, #tpu.memory_space<vmem>>, vector<4x8x8x128xf32>,
    return
  }
}

</mosaic_0001>

<llo_original>
// kernel: dense_block_forward.1
$region0: #{dense_block_forward.1}
  #allocation0 [shape = 'u32[]', space=smem, size = 0x4, offset = 0x4, fixed_abs, tag = 'smem constant byte address 0x4 - core index']
  #allocation1 [shape = 'u32[144,128]{1,0:T(1,128)}', space=vmem, size = 0x12000, scoped, tag = 'internal scratch']
  #allocation2 [shape = 'f32[4,10,10,128]{3,2,1,0:T(8,128)}', space=vmem, size = 0x50000, scoped, tag = 'scratch operand']
  %s0 = inlined_call_operand.vmem [shape: f32[4,8,8,128], index: 0, kind: input, shape index: {}]
  %s1 = inlined_call_operand.vmem [shape: f32[2,1152,128], index: 1, kind: input, shape index: {}]
  %s2 = inlined_call_operand.vmem [shape: f32[2,1,128], index: 2, kind: input, shape index: {}]
  %s3 = inlined_call_operand.vmem [shape: f32[4,8,8,128], index: 3, kind: output, shape index: {}]
  %s4 = sld [smem:[#allocation0]]
  $region22: #{dense_block_forward.1} parent=0
    _
  %s6 = ssub.s32 1, %s4
  %s7 = scalar_select 0, %s6, %s4
  // Predicated region
  $region2: #{dense_block_forward.1} parent=0 // pred_check
    _
  $region3: #{dense_block_forward.1} parent=0 // pred_check_branch
    %9 = sbr.rel (0) target = $region5
  $region4: #{dense_block_forward.1} parent=0 // pred_region
    _
  $region5: #{dense_block_forward.1} parent=0 // pred_fallthru
    _
  // Predicated region
  $region6: #{dense_block_forward.1} parent=0 // pred_check
    _
  $region7: #{dense_block_forward.1} parent=0 // pred_check_branch
    %11 = sbr.rel (0) target = $region9
  $region8: #{dense_block_forward.1} parent=0 // pred_region
    _
  $region9: #{dense_block_forward.1} parent=0 // pred_fallthru
    _
  // Predicated region
  $region10: #{dense_block_forward.1} parent=0 // pred_check
    _
  $region11: #{dense_block_forward.1} parent=0 // pred_check_branch
    %13 = sbr.rel (0) target = $region13
  $region12: #{dense_block_forward.1} parent=0 // pred_region
    _
  $region13: #{dense_block_forward.1} parent=0 // pred_fallthru
    _
  %v14 = vld [vmem:[%s0] sm:$0xff]
  %v15 = vld [vmem:[%s0 + $0x8] sm:$0xff]
  %v16 = vld [vmem:[%s0 + $0x10] sm:$0xff]
  %v17 = vld [vmem:[%s0 + $0x18] sm:$0xff]
  %v18 = vld [vmem:[%s0 + $0x20] sm:$0xff]
  %v19 = vld [vmem:[%s0 + $0x28] sm:$0xff]
  %v20 = vld [vmem:[%s0 + $0x30] sm:$0xff]
  %v21 = vld [vmem:[%s0 + $0x38] sm:$0xff]
  %v22 = vld [vmem:[%s0 + $0x40] sm:$0xff]
  %v23 = vld [vmem:[%s0 + $0x48] sm:$0xff]
  %v24 = vld [vmem:[%s0 + $0x50] sm:$0xff]
  %v25 = vld [vmem:[%s0 + $0x58] sm:$0xff]
  %v26 = vld [vmem:[%s0 + $0x60] sm:$0xff]
  %v27 = vld [vmem:[%s0 + $0x68] sm:$0xff]
  %v28 = vld [vmem:[%s0 + $0x70] sm:$0xff]
  %v29 = vld [vmem:[%s0 + $0x78] sm:$0xff]
  %v30 = vld [vmem:[%s0 + $0x80] sm:$0xff]
  %v31 = vld [vmem:[%s0 + $0x88] sm:$0xff]
  %v32 = vld [vmem:[%s0 + $0x90] sm:$0xff]
  %v33 = vld [vmem:[%s0 + $0x98] sm:$0xff]
  %v34 = vld [vmem:[%s0 + $0xa0] sm:$0xff]
  %v35 = vld [vmem:[%s0 + $0xa8] sm:$0xff]
  %v36 = vld [vmem:[%s0 + $0xb0] sm:$0xff]
  %v37 = vld [vmem:[%s0 + $0xb8] sm:$0xff]
  %v38 = vld [vmem:[%s0 + $0xc0] sm:$0xff]
  %v39 = vld [vmem:[%s0 + $0xc8] sm:$0xff]
  %v40 = vld [vmem:[%s0 + $0xd0] sm:$0xff]
  %v41 = vld [vmem:[%s0 + $0xd8] sm:$0xff]
  %v42 = vld [vmem:[%s0 + $0xe0] sm:$0xff]
  %v43 = vld [vmem:[%s0 + $0xe8] sm:$0xff]
  %v44 = vld [vmem:[%s0 + $0xf0] sm:$0xff]
  %v45 = vld [vmem:[%s0 + $0xf8] sm:$0xff]
  %46 = vst [vmem:[%s3] sm:$0xff] %v14
  %47 = vst [vmem:[%s3 + $0x8] sm:$0xff] %v15
  %48 = vst [vmem:[%s3 + $0x10] sm:$0xff] %v16
  %49 = vst [vmem:[%s3 + $0x18] sm:$0xff] %v17
  %50 = vst [vmem:[%s3 + $0x20] sm:$0xff] %v18
  %51 = vst [vmem:[%s3 + $0x28] sm:$0xff] %v19
  %52 = vst [vmem:[%s3 + $0x30] sm:$0xff] %v20
  %53 = vst [vmem:[%s3 + $0x38] sm:$0xff] %v21
  %54 = vst [vmem:[%s3 + $0x40] sm:$0xff] %v22
  %55 = vst [vmem:[%s3 + $0x48] sm:$0xff] %v23
  %56 = vst [vmem:[%s3 + $0x50] sm:$0xff] %v24
  %57 = vst [vmem:[%s3 + $0x58] sm:$0xff] %v25
  %58 = vst [vmem:[%s3 + $0x60] sm:$0xff] %v26
  %59 = vst [vmem:[%s3 + $0x68] sm:$0xff] %v27
  %60 = vst [vmem:[%s3 + $0x70] sm:$0xff] %v28
  %61 = vst [vmem:[%s3 + $0x78] sm:$0xff] %v29
  %62 = vst [vmem:[%s3 + $0x80] sm:$0xff] %v30
  %63 = vst [vmem:[%s3 + $0x88] sm:$0xff] %v31
  %64 = vst [vmem:[%s3 + $0x90] sm:$0xff] %v32
  %65 = vst [vmem:[%s3 + $0x98] sm:$0xff] %v33
  %66 = vst [vmem:[%s3 + $0xa0] sm:$0xff] %v34
  %67 = vst [vmem:[%s3 + $0xa8] sm:$0xff] %v35
  %68 = vst [vmem:[%s3 + $0xb0] sm:$0xff] %v36
  %69 = vst [vmem:[%s3 + $0xb8] sm:$0xff] %v37
  %70 = vst [vmem:[%s3 + $0xc0] sm:$0xff] %v38
  %71 = vst [vmem:[%s3 + $0xc8] sm:$0xff] %v39
  %72 = vst [vmem:[%s3 + $0xd0] sm:$0xff] %v40
  %73 = vst [vmem:[%s3 + $0xd8] sm:$0xff] %v41
  %74 = vst [vmem:[%s3 + $0xe0] sm:$0xff] %v42
  %75 = vst [vmem:[%s3 + $0xe8] sm:$0xff] %v43
  %76 = vst [vmem:[%s3 + $0xf0] sm:$0xff] %v44
  %77 = vst [vmem:[%s3 + $0xf8] sm:$0xff] %v45
  %78 = vst [vmem:[#allocation2] sm:$0xff] 0.0
  %79 = vst [vmem:[#allocation2 + $0x8] sm:$0x3] 0.0
  %80 = vst [vmem:[#allocation2 + $0x10] sm:$0xff] 0.0
  %81 = vst [vmem:[#allocation2 + $0x18] sm:$0x3] 0.0
  %82 = vst [vmem:[#allocation2 + $0x20] sm:$0xff] 0.0
  %83 = vst [vmem:[#allocation2 + $0x28] sm:$0x3] 0.0
  %84 = vst [vmem:[#allocation2 + $0x30] sm:$0xff] 0.0
  %85 = vst [vmem:[#allocation2 + $0x38] sm:$0x3] 0.0
  %86 = vst [vmem:[#allocation2 + $0x40] sm:$0xff] 0.0
  %87 = vst [vmem:[#allocation2 + $0x48] sm:$0x3] 0.0
  %88 = vst [vmem:[#allocation2 + $0x50] sm:$0xff] 0.0
  %89 = vst [vmem:[#allocation2 + $0x58] sm:$0x3] 0.0
  %90 = vst [vmem:[#allocation2 + $0x60] sm:$0xff] 0.0
  %91 = vst [vmem:[#allocation2 + $0x68] sm:$0x3] 0.0
  %92 = vst [vmem:[#allocation2 + $0x70] sm:$0xff] 0.0
  %93 = vst [vmem:[#allocation2 + $0x78] sm:$0x3] 0.0
  %94 = vst [vmem:[#allocation2 + $0x80] sm:$0xff] 0.0
  %95 = vst [vmem:[#allocation2 + $0x88] sm:$0x3] 0.0
  %96 = vst [vmem:[#allocation2 + $0x90] sm:$0xff] 0.0
  %97 = vst [vmem:[#allocation2 + $0x98] sm:$0x3] 0.0
  %98 = vst [vmem:[#allocation2 + $0xa0] sm:$0xff] 0.0
  %99 = vst [vmem:[#allocation2 + $0xa8] sm:$0x3] 0.0
  %100 = vst [vmem:[#allocation2 + $0xb0] sm:$0xff] 0.0
  %101 = vst [vmem:[#allocation2 + $0xb8] sm:$0x3] 0.0
  %102 = vst [vmem:[#allocation2 + $0xc0] sm:$0xff] 0.0
  %103 = vst [vmem:[#allocation2 + $0xc8] sm:$0x3] 0.0
  %104 = vst [vmem:[#allocation2 + $0xd0] sm:$0xff] 0.0
  %105 = vst [vmem:[#allocation2 + $0xd8] sm:$0x3] 0.0
  %106 = vst [vmem:[#allocation2 + $0xe0] sm:$0xff] 0.0
  %107 = vst [vmem:[#allocation2 + $0xe8] sm:$0x3] 0.0
  %108 = vst [vmem:[#allocation2 + $0xf0] sm:$0xff] 0.0
  %109 = vst [vmem:[#allocation2 + $0xf8] sm:$0x3] 0.0
  %110 = vst [vmem:[#allocation2 + $0x100] sm:$0xff] 0.0
  %111 = vst [vmem:[#allocation2 + $0x108] sm:$0x3] 0.0
  %112 = vst [vmem:[#allocation2 + $0x110] sm:$0xff] 0.0
  %113 = vst [vmem:[#allocation2 + $0x118] sm:$0x3] 0.0
  %114 = vst [vmem:[#allocation2 + $0x120] sm:$0xff] 0.0
  %115 = vst [vmem:[#allocation2 + $0x128] sm:$0x3] 0.0
  %116 = vst [vmem:[#allocation2 + $0x130] sm:$0xff] 0.0
  %117 = vst [vmem:[#allocation2 + $0x138] sm:$0x3] 0.0
  %118 = vst [vmem:[#allocation2 + $0x140] sm:$0xff] 0.0
  %119 = vst [vmem:[#allocation2 + $0x148] sm:$0x3] 0.0
  %120 = vst [vmem:[#allocation2 + $0x150] sm:$0xff] 0.0
  %121 = vst [vmem:[#allocation2 + $0x158] sm:$0x3] 0.0
  %122 = vst [vmem:[#allocation2 + $0x160] sm:$0xff] 0.0
  %123 = vst [vmem:[#allocation2 + $0x168] sm:$0x3] 0.0
  %124 = vst [vmem:[#allocation2 + $0x170] sm:$0xff] 0.0
  %125 = vst [vmem:[#allocation2 + $0x178] sm:$0x3] 0.0
  %126 = vst [vmem:[#allocation2 + $0x180] sm:$0xff] 0.0
  %127 = vst [vmem:[#allocation2 + $0x188] sm:$0x3] 0.0
  %128 = vst [vmem:[#allocation2 + $0x190] sm:$0xff] 0.0
  %129 = vst [vmem:[#allocation2 + $0x198] sm:$0x3] 0.0
  %130 = vst [vmem:[#allocation2 + $0x1a0] sm:$0xff] 0.0
  %131 = vst [vmem:[#allocation2 + $0x1a8] sm:$0x3] 0.0
  %132 = vst [vmem:[#allocation2 + $0x1b0] sm:$0xff] 0.0
  %133 = vst [vmem:[#allocation2 + $0x1b8] sm:$0x3] 0.0
  %134 = vst [vmem:[#allocation2 + $0x1c0] sm:$0xff] 0.0
  %135 = vst [vmem:[#allocation2 + $0x1c8] sm:$0x3] 0.0
  %136 = vst [vmem:[#allocation2 + $0x1d0] sm:$0xff] 0.0
  %137 = vst [vmem:[#allocation2 + $0x1d8] sm:$0x3] 0.0
  %138 = vst [vmem:[#allocation2 + $0x1e0] sm:$0xff] 0.0
  %139 = vst [vmem:[#allocation2 + $0x1e8] sm:$0x3] 0.0
  %140 = vst [vmem:[#allocation2 + $0x1f0] sm:$0xff] 0.0
  %141 = vst [vmem:[#allocation2 + $0x1f8] sm:$0x3] 0.0
  %142 = vst [vmem:[#allocation2 + $0x200] sm:$0xff] 0.0
  %143 = vst [vmem:[#allocation2 + $0x208] sm:$0x3] 0.0
  %144 = vst [vmem:[#allocation2 + $0x210] sm:$0xff] 0.0
  %145 = vst [vmem:[#allocation2 + $0x218] sm:$0x3] 0.0
  %146 = vst [vmem:[#allocation2 + $0x220] sm:$0xff] 0.0
  %147 = vst [vmem:[#allocation2 + $0x228] sm:$0x3] 0.0
  %148 = vst [vmem:[#allocation2 + $0x230] sm:$0xff] 0.0
  %149 = vst [vmem:[#allocation2 + $0x238] sm:$0x3] 0.0
  %150 = vst [vmem:[#allocation2 + $0x240] sm:$0xff] 0.0
  %151 = vst [vmem:[#allocation2 + $0x248] sm:$0x3] 0.0
  %152 = vst [vmem:[#allocation2 + $0x250] sm:$0xff] 0.0
  %153 = vst [vmem:[#allocation2 + $0x258] sm:$0x3] 0.0
  %154 = vst [vmem:[#allocation2 + $0x260] sm:$0xff] 0.0
  %155 = vst [vmem:[#allocation2 + $0x268] sm:$0x3] 0.0
  %156 = vst [vmem:[#allocation2 + $0x270] sm:$0xff] 0.0
  %157 = vst [vmem:[#allocation2 + $0x278] sm:$0x3] 0.0
  %v158 = vld [vmem:[%s3] sm:$0xff]
  %v159 = vld [vmem:[%s3 + $0x8] sm:$0xff]
  %v160 = vld [vmem:[%s3 + $0x10] sm:$0xff]
  %v161 = vld [vmem:[%s3 + $0x18] sm:$0xff]
  %v162 = vld [vmem:[%s3 + $0x20] sm:$0xff]
  %v163 = vld [vmem:[%s3 + $0x28] sm:$0xff]
  %v164 = vld [vmem:[%s3 + $0x30] sm:$0xff]
  %v165 = vld [vmem:[%s3 + $0x38] sm:$0xff]
  %v166 = vld [vmem:[%s3 + $0x40] sm:$0xff]
  %v167 = vld [vmem:[%s3 + $0x48] sm:$0xff]
  %v168 = vld [vmem:[%s3 + $0x50] sm:$0xff]
  %v169 = vld [vmem:[%s3 + $0x58] sm:$0xff]
  %v170 = vld [vmem:[%s3 + $0x60] sm:$0xff]
  %v171 = vld [vmem:[%s3 + $0x68] sm:$0xff]
  %v172 = vld [vmem:[%s3 + $0x70] sm:$0xff]
  %v173 = vld [vmem:[%s3 + $0x78] sm:$0xff]
  %v174 = vld [vmem:[%s3 + $0x80] sm:$0xff]
  %v175 = vld [vmem:[%s3 + $0x88] sm:$0xff]
  %v176 = vld [vmem:[%s3 + $0x90] sm:$0xff]
  %v177 = vld [vmem:[%s3 + $0x98] sm:$0xff]
  %v178 = vld [vmem:[%s3 + $0xa0] sm:$0xff]
  %v179 = vld [vmem:[%s3 + $0xa8] sm:$0xff]
  %v180 = vld [vmem:[%s3 + $0xb0] sm:$0xff]
  %v181 = vld [vmem:[%s3 + $0xb8] sm:$0xff]
  %v182 = vld [vmem:[%s3 + $0xc0] sm:$0xff]
  %v183 = vld [vmem:[%s3 + $0xc8] sm:$0xff]
  %v184 = vld [vmem:[%s3 + $0xd0] sm:$0xff]
  %v185 = vld [vmem:[%s3 + $0xd8] sm:$0xff]
  %v186 = vld [vmem:[%s3 + $0xe0] sm:$0xff]
  %v187 = vld [vmem:[%s3 + $0xe8] sm:$0xff]
  %v188 = vld [vmem:[%s3 + $0xf0] sm:$0xff]
  %v189 = vld [vmem:[%s3 + $0xf8] sm:$0xff]
  %v190 = vadd.f32 %v158, %v159
  %v191 = vadd.f32 %v190, %v160
  %v192 = vadd.f32 %v191, %v161
  %v193 = vadd.f32 %v192, %v162
  %v194 = vadd.f32 %v193, %v163
  %v195 = vadd.f32 %v194, %v164
  %v196 = vadd.f32 %v195, %v165
  %v197 = vadd.f32 %v196, %v166
  %v198 = vadd.f32 %v197, %v167
  %v199 = vadd.f32 %v198, %v168
  %v200 = vadd.f32 %v199, %v169
  %v201 = vadd.f32 %v200, %v170
  %v202 = vadd.f32 %v201, %v171
  %v203 = vadd.f32 %v202, %v172
  %v204 = vadd.f32 %v203, %v173
  %v205 = vadd.f32 %v204, %v174
  %v206 = vadd.f32 %v205, %v175
  %v207 = vadd.f32 %v206, %v176
  %v208 = vadd.f32 %v207, %v177
  %v209 = vadd.f32 %v208, %v178
  %v210 = vadd.f32 %v209, %v179
  %v211 = vadd.f32 %v210, %v180
  %v212 = vadd.f32 %v211, %v181
  %v213 = vadd.f32 %v212, %v182
  %v214 = vadd.f32 %v213, %v183
  %v215 = vadd.f32 %v214, %v184
  %v216 = vadd.f32 %v215, %v185
  %v217 = vadd.f32 %v216, %v186
  %v218 = vadd.f32 %v217, %v187
  %v219 = vadd.f32 %v218, %v188
  %v220 = vadd.f32 %v219, %v189
  %v221 = vrot.slane %v220, 4
  %v222 = vadd.f32 %v220, %v221
  %v223 = vrot.slane %v222, 2
  %v224 = vadd.f32 %v222, %v223
  %v225 = vrot.slane %v224, 1
  %v226 = vadd.f32 %v224, %v225
  %v227 = vmul.f32 %v158, %v158
  %v228 = vmul.f32 %v159, %v159
  %v229 = vmul.f32 %v160, %v160
  %v230 = vmul.f32 %v161, %v161
  %v231 = vmul.f32 %v162, %v162
  %v232 = vmul.f32 %v163, %v163
  %v233 = vmul.f32 %v164, %v164
  %v234 = vmul.f32 %v165, %v165
  %v235 = vmul.f32 %v166, %v166
  %v236 = vmul.f32 %v167, %v167
  %v237 = vmul.f32 %v168, %v168
  %v238 = vmul.f32 %v169, %v169
  %v239 = vmul.f32 %v170, %v170
  %v240 = vmul.f32 %v171, %v171
  %v241 = vmul.f32 %v172, %v172
  %v242 = vmul.f32 %v173, %v173
  %v243 = vmul.f32 %v174, %v174
  %v244 = vmul.f32 %v175, %v175
  %v245 = vmul.f32 %v176, %v176
  %v246 = vmul.f32 %v177, %v177
  %v247 = vmul.f32 %v178, %v178
  %v248 = vmul.f32 %v179, %v179
  %v249 = vmul.f32 %v180, %v180
  %v250 = vmul.f32 %v181, %v181
  %v251 = vmul.f32 %v182, %v182
  %v252 = vmul.f32 %v183, %v183
  %v253 = vmul.f32 %v184, %v184
  %v254 = vmul.f32 %v185, %v185
  %v255 = vmul.f32 %v186, %v186
  %v256 = vmul.f32 %v187, %v187
  %v257 = vmul.f32 %v188, %v188
  %v258 = vmul.f32 %v189, %v189
  %v259 = vadd.f32 %v227, %v228
  %v260 = vadd.f32 %v259, %v229
  %v261 = vadd.f32 %v260, %v230
  %v262 = vadd.f32 %v261, %v231
  %v263 = vadd.f32 %v262, %v232
  %v264 = vadd.f32 %v263, %v233
  %v265 = vadd.f32 %v264, %v234
  %v266 = vadd.f32 %v265, %v235
  %v267 = vadd.f32 %v266, %v236
  %v268 = vadd.f32 %v267, %v237
  %v269 = vadd.f32 %v268, %v238
  %v270 = vadd.f32 %v269, %v239
  %v271 = vadd.f32 %v270, %v240
  %v272 = vadd.f32 %v271, %v241
  %v273 = vadd.f32 %v272, %v242
  %v274 = vadd.f32 %v273, %v243
  %v275 = vadd.f32 %v274, %v244
  %v276 = vadd.f32 %v275, %v245
  %v277 = vadd.f32 %v276, %v246
  %v278 = vadd.f32 %v277, %v247
  %v279 = vadd.f32 %v278, %v248
  %v280 = vadd.f32 %v279, %v249
  %v281 = vadd.f32 %v280, %v250
  %v282 = vadd.f32 %v281, %v251
  %v283 = vadd.f32 %v282, %v252
  %v284 = vadd.f32 %v283, %v253
  %v285 = vadd.f32 %v284, %v254
  %v286 = vadd.f32 %v285, %v255
  %v287 = vadd.f32 %v286, %v256
  %v288 = vadd.f32 %v287, %v257
  %v289 = vadd.f32 %v288, %v258
  %v290 = vrot.slane %v289, 4
  %v291 = vadd.f32 %v289, %v290
  %v292 = vrot.slane %v291, 2
  %v293 = vadd.f32 %v291, %v292
  %v294 = vrot.slane %v293, 1
  %v295 = vadd.f32 %v293, %v294
  %v296 = vmul.f32 %v226, 0.00390625
  %v297 = vmul.f32 %v295, 0.00390625
  %v298 = vmul.f32 %v296, %v296
  %v299 = vsub.f32 %v297, %v298
  %v300 = vmax.f32 %v299, 0.0
  %v301 = vsub.f32 %v158, %v296
  %v302 = vsub.f32 %v159, %v296
  %v303 = vsub.f32 %v160, %v296
  %v304 = vsub.f32 %v161, %v296
  %v305 = vsub.f32 %v162, %v296
  %v306 = vsub.f32 %v163, %v296
  %v307 = vsub.f32 %v164, %v296
  %v308 = vsub.f32 %v165, %v296
  %v309 = vsub.f32 %v166, %v296
  %v310 = vsub.f32 %v167, %v296
  %v311 = vsub.f32 %v168, %v296
  %v312 = vsub.f32 %v169, %v296
  %v313 = vsub.f32 %v170, %v296
  %v314 = vsub.f32 %v171, %v296
  %v315 = vsub.f32 %v172, %v296
  %v316 = vsub.f32 %v173, %v296
  %v317 = vsub.f32 %v174, %v296
  %v318 = vsub.f32 %v175, %v296
  %v319 = vsub.f32 %v176, %v296
  %v320 = vsub.f32 %v177, %v296
  %v321 = vsub.f32 %v178, %v296
  %v322 = vsub.f32 %v179, %v296
  %v323 = vsub.f32 %v180, %v296
  %v324 = vsub.f32 %v181, %v296
  %v325 = vsub.f32 %v182, %v296
  %v326 = vsub.f32 %v183, %v296
  %v327 = vsub.f32 %v184, %v296
  %v328 = vsub.f32 %v185, %v296
  %v329 = vsub.f32 %v186, %v296
  %v330 = vsub.f32 %v187, %v296
  %v331 = vsub.f32 %v188, %v296
  %v332 = vsub.f32 %v189, %v296
  %v333 = vadd.f32 %v300, 1e-05
  %v334 = vrsqrt.pop %v333
  %v335 = vmul.f32 %v301, %v334
  %v336 = vmul.f32 %v302, %v334
  %v337 = vmul.f32 %v303, %v334
  %v338 = vmul.f32 %v304, %v334
  %v339 = vmul.f32 %v305, %v334
  %v340 = vmul.f32 %v306, %v334
  %v341 = vmul.f32 %v307, %v334
  %v342 = vmul.f32 %v308, %v334
  %v343 = vmul.f32 %v309, %v334
  %v344 = vmul.f32 %v310, %v334
  %v345 = vmul.f32 %v311, %v334
  %v346 = vmul.f32 %v312, %v334
  %v347 = vmul.f32 %v313, %v334
  %v348 = vmul.f32 %v314, %v334
  %v349 = vmul.f32 %v315, %v334
  %v350 = vmul.f32 %v316, %v334
  %v351 = vmul.f32 %v317, %v334
  %v352 = vmul.f32 %v318, %v334
  %v353 = vmul.f32 %v319, %v334
  %v354 = vmul.f32 %v320, %v334
  %v355 = vmul.f32 %v321, %v334
  %v356 = vmul.f32 %v322, %v334
  %v357 = vmul.f32 %v323, %v334
  %v358 = vmul.f32 %v324, %v334
  %v359 = vmul.f32 %v325, %v334
  %v360 = vmul.f32 %v326, %v334
  %v361 = vmul.f32 %v327, %v334
  %v362 = vmul.f32 %v328, %v334
  %v363 = vmul.f32 %v329, %v334
  %v364 = vmul.f32 %v330, %v334
  %v365 = vmul.f32 %v331, %v334
  %v366 = vmul.f32 %v332, %v334
  %v367 = vmax.f32 %v335, 0.0
  %v368 = vmax.f32 %v336, 0.0
  %v369 = vmax.f32 %v337, 0.0
  %v370 = vmax.f32 %v338, 0.0
  %v371 = vmax.f32 %v339, 0.0
  %v372 = vmax.f32 %v340, 0.0
  %v373 = vmax.f32 %v341, 0.0
  %v374 = vmax.f32 %v342, 0.0
  %v375 = vmax.f32 %v343, 0.0
  %v376 = vmax.f32 %v344, 0.0
  %v377 = vmax.f32 %v345, 0.0
  %v378 = vmax.f32 %v346, 0.0
  %v379 = vmax.f32 %v347, 0.0
  %v380 = vmax.f32 %v348, 0.0
  %v381 = vmax.f32 %v349, 0.0
  %v382 = vmax.f32 %v350, 0.0
  %v383 = vmax.f32 %v351, 0.0
  %v384 = vmax.f32 %v352, 0.0
  %v385 = vmax.f32 %v353, 0.0
  %v386 = vmax.f32 %v354, 0.0
  %v387 = vmax.f32 %v355, 0.0
  %v388 = vmax.f32 %v356, 0.0
  %v389 = vmax.f32 %v357, 0.0
  %v390 = vmax.f32 %v358, 0.0
  %v391 = vmax.f32 %v359, 0.0
  %v392 = vmax.f32 %v360, 0.0
  %v393 = vmax.f32 %v361, 0.0
  %v394 = vmax.f32 %v362, 0.0
  %v395 = vmax.f32 %v363, 0.0
  %v396 = vmax.f32 %v364, 0.0
  %v397 = vmax.f32 %v365, 0.0
  %v398 = vmax.f32 %v366, 0.0
  %s399 = scalar_lea.vmem [#allocation2], 16
  %400 = vst [vmem:[%s399 + $0x1] sm:$0xff] %v367
  %401 = vst [vmem:[%s399 + $0x11] sm:$0xff] %v368
  %402 = vst [vmem:[%s399 + $0x21] sm:$0xff] %v369
  %403 = vst [vmem:[%s399 + $0x31] sm:$0xff] %v370
  %404 = vst [vmem:[%s399 + $0x41] sm:$0xff] %v371
  %405 = vst [vmem:[%s399 + $0x51] sm:$0xff] %v372
  %406 = vst [vmem:[%s399 + $0x61] sm:$0xff] %v373
  %407 = vst [vmem:[%s399 + $0x71] sm:$0xff] %v374
  %408 = vst [vmem:[%s399 + $0xa1] sm:$0xff] %v375
  %409 = vst [vmem:[%s399 + $0xb1] sm:$0xff] %v376
  %410 = vst [vmem:[%s399 + $0xc1] sm:$0xff] %v377
  %411 = vst [vmem:[%s399 + $0xd1] sm:$0xff] %v378
  %412 = vst [vmem:[%s399 + $0xe1] sm:$0xff] %v379
  %413 = vst [vmem:[%s399 + $0xf1] sm:$0xff] %v380
  %414 = vst [vmem:[%s399 + $0x101] sm:$0xff] %v381
  %415 = vst [vmem:[%s399 + $0x111] sm:$0xff] %v382
  %416 = vst [vmem:[%s399 + $0x141] sm:$0xff] %v383
  %417 = vst [vmem:[%s399 + $0x151] sm:$0xff] %v384
  %418 = vst [vmem:[%s399 + $0x161] sm:$0xff] %v385
  %419 = vst [vmem:[%s399 + $0x171] sm:$0xff] %v386
  %420 = vst [vmem:[%s399 + $0x181] sm:$0xff] %v387
  %421 = vst [vmem:[%s399 + $0x191] sm:$0xff] %v388
  %422 = vst [vmem:[%s399 + $0x1a1] sm:$0xff] %v389
  %423 = vst [vmem:[%s399 + $0x1b1] sm:$0xff] %v390
  %424 = vst [vmem:[%s399 + $0x1e1] sm:$0xff] %v391
  %425 = vst [vmem:[%s399 + $0x1f1] sm:$0xff] %v392
  %426 = vst [vmem:[%s399 + $0x201] sm:$0xff] %v393
  %427 = vst [vmem:[%s399 + $0x211] sm:$0xff] %v394
  %428 = vst [vmem:[%s399 + $0x221] sm:$0xff] %v395
  %429 = vst [vmem:[%s399 + $0x231] sm:$0xff] %v396
  %430 = vst [vmem:[%s399 + $0x241] sm:$0xff] %v397
  %431 = vst [vmem:[%s399 + $0x251] sm:$0xff] %v398
  %v432 = vld [vmem:[#allocation2] sm:$0xff]
  %v433 = vld [vmem:[#allocation2 + $0x8] sm:$0x3]
  %v434 = vld [vmem:[#allocation2 + $0x10] sm:$0xff]
  %v435 = vld [vmem:[#allocation2 + $0x18] sm:$0x3]
  %v436 = vld [vmem:[#allocation2 + $0x20] sm:$0xff]
  %v437 = vld [vmem:[#allocation2 + $0x28] sm:$0x3]
  %v438 = vld [vmem:[#allocation2 + $0x30] sm:$0xff]
  %v439 = vld [vmem:[#allocation2 + $0x38] sm:$0x3]
  %v440 = vld [vmem:[#allocation2 + $0x40] sm:$0xff]
  %v441 = vld [vmem:[#allocation2 + $0x48] sm:$0x3]
  %v442 = vld [vmem:[#allocation2 + $0x50] sm:$0xff]
  %v443 = vld [vmem:[#allocation2 + $0x58] sm:$0x3]
  %v444 = vld [vmem:[#allocation2 + $0x60] sm:$0xff]
  %v445 = vld [vmem:[#allocation2 + $0x68] sm:$0x3]
  %v446 = vld [vmem:[#allocation2 + $0x70] sm:$0xff]
  %v447 = vld [vmem:[#allocation2 + $0x78] sm:$0x3]
  %v448 = vld [vmem:[#allocation2 + $0x80] sm:$0xff]
  %v449 = vld [vmem:[#allocation2 + $0x88] sm:$0x3]
  %v450 = vld [vmem:[#allocation2 + $0x90] sm:$0xff]
  %v451 = vld [vmem:[#allocation2 + $0x98] sm:$0x3]
  %v452 = vld [vmem:[#allocation2 + $0xa0] sm:$0xff]
  %v453 = vld [vmem:[#allocation2 + $0xa8] sm:$0x3]
  %v454 = vld [vmem:[#allocation2 + $0xb0] sm:$0xff]
  %v455 = vld [vmem:[#allocation2 + $0xb8] sm:$0x3]
  %v456 = vld [vmem:[#allocation2 + $0xc0] sm:$0xff]
  %v457 = vld [vmem:[#allocation2 + $0xc8] sm:$0x3]
  %v458 = vld [vmem:[#allocation2 + $0xd0] sm:$0xff]
  %v459 = vld [vmem:[#allocation2 + $0xd8] sm:$0x3]
  %v460 = vld [vmem:[#allocation2 + $0xe0] sm:$0xff]
  %v461 = vld [vmem:[#allocation2 + $0xe8] sm:$0x3]
  %v462 = vld [vmem:[#allocation2 + $0xf0] sm:$0xff]
  %v463 = vld [vmem:[#allocation2 + $0xf8] sm:$0x3]
  %v464 = vld [vmem:[#allocation2 + $0x100] sm:$0xff]
  %v465 = vld [vmem:[#allocation2 + $0x108] sm:$0x3]
  %v466 = vld [vmem:[#allocation2 + $0x110] sm:$0xff]
  %v467 = vld [vmem:[#allocation2 + $0x118] sm:$0x3]
  %v468 = vld [vmem:[#allocation2 + $0x120] sm:$0xff]
  %v469 = vld [vmem:[#allocation2 + $0x128] sm:$0x3]
  %v470 = vld [vmem:[#allocation2 + $0x130] sm:$0xff]
  %v471 = vld [vmem:[#allocation2 + $0x138] sm:$0x3]
  %v472 = vld [vmem:[#allocation2 + $0x140] sm:$0xff]
  %v473 = vld [vmem:[#allocation2 + $0x148] sm:$0x3]
  %v474 = vld [vmem:[#allocation2 + $0x150] sm:$0xff]
  %v475 = vld [vmem:[#allocation2 + $0x158] sm:$0x3]
  %v476 = vld [vmem:[#allocation2 + $0x160] sm:$0xff]
  %v477 = vld [vmem:[#allocation2 + $0x168] sm:$0x3]
  %v478 = vld [vmem:[#allocation2 + $0x170] sm:$0xff]
  %v479 = vld [vmem:[#allocation2 + $0x178] sm:$0x3]
  %v480 = vld [vmem:[#allocation2 + $0x180] sm:$0xff]
  %v481 = vld [vmem:[#allocation2 + $0x188] sm:$0x3]
  %v482 = vld [vmem:[#allocation2 + $0x190] sm:$0xff]
  %v483 = vld [vmem:[#allocation2 + $0x198] sm:$0x3]
  %v484 = vld [vmem:[#allocation2 + $0x1a0] sm:$0xff]
  %v485 = vld [vmem:[#allocation2 + $0x1a8] sm:$0x3]
  %v486 = vld [vmem:[#allocation2 + $0x1b0] sm:$0xff]
  %v487 = vld [vmem:[#allocation2 + $0x1b8] sm:$0x3]
  %v488 = vld [vmem:[#allocation2 + $0x1c0] sm:$0xff]
  %v489 = vld [vmem:[#allocation2 + $0x1c8] sm:$0x3]
  %v490 = vld [vmem:[#allocation2 + $0x1d0] sm:$0xff]
  %v491 = vld [vmem:[#allocation2 + $0x1d8] sm:$0x3]
  %v492 = vld [vmem:[#allocation2 + $0x1e0] sm:$0xff]
  %v493 = vld [vmem:[#allocation2 + $0x1e8] sm:$0x3]
  %v494 = vld [vmem:[#allocation2 + $0x1f0] sm:$0xff]
  %v495 = vld [vmem:[#allocation2 + $0x1f8] sm:$0x3]
  %v496 = vld [vmem:[#allocation2 + $0x200] sm:$0xff]
  %v497 = vld [vmem:[#allocation2 + $0x208] sm:$0x3]
  %v498 = vld [vmem:[#allocation2 + $0x210] sm:$0xff]
  %v499 = vld [vmem:[#allocation2 + $0x218] sm:$0x3]
  %v500 = vld [vmem:[#allocation2 + $0x220] sm:$0xff]
  %v501 = vld [vmem:[#allocation2 + $0x228] sm:$0x3]
  %v502 = vld [vmem:[#allocation2 + $0x230] sm:$0xff]
  %v503 = vld [vmem:[#allocation2 + $0x238] sm:$0x3]
  %v504 = vld [vmem:[#allocation2 + $0x240] sm:$0xff]
  %v505 = vld [vmem:[#allocation2 + $0x248] sm:$0x3]
  %v506 = vld [vmem:[#allocation2 + $0x250] sm:$0xff]
  %v507 = vld [vmem:[#allocation2 + $0x258] sm:$0x3]
  %v508 = vld [vmem:[#allocation2 + $0x260] sm:$0xff]
  %v509 = vld [vmem:[#allocation2 + $0x268] sm:$0x3]
  %v510 = vld [vmem:[#allocation2 + $0x270] sm:$0xff]
  %v511 = vld [vmem:[#allocation2 + $0x278] sm:$0x3]
  %vm576 = vcmask 1046528
  %v577 = vrot.slane %v432, 1
  %v578 = vrot.slane %v433, 1
  %v579 = vsel %vm576, %v577, %v578
  %v580 = vrot.slane %v434, 1
  %v581 = vrot.slane %v435, 1
  %v582 = vsel %vm576, %v580, %v581
  %v583 = vrot.slane %v436, 1
  %v584 = vrot.slane %v437, 1
  %v585 = vsel %vm576, %v583, %v584
  %v586 = vrot.slane %v438, 1
  %v587 = vrot.slane %v439, 1
  %v588 = vsel %vm576, %v586, %v587
  %v589 = vrot.slane %v440, 1
  %v590 = vrot.slane %v441, 1
  %v591 = vsel %vm576, %v589, %v590
  %v592 = vrot.slane %v442, 1
  %v593 = vrot.slane %v443, 1
  %v594 = vsel %vm576, %v592, %v593
  %v595 = vrot.slane %v444, 1
  %v596 = vrot.slane %v445, 1
  %v597 = vsel %vm576, %v595, %v596
  %v598 = vrot.slane %v446, 1
  %v599 = vrot.slane %v447, 1
  %v600 = vsel %vm576, %v598, %v599
  %v601 = vrot.slane %v452, 1
  %v602 = vrot.slane %v453, 1
  %v603 = vsel %vm576, %v601, %v602
  %v604 = vrot.slane %v454, 1
  %v605 = vrot.slane %v455, 1
  %v606 = vsel %vm576, %v604, %v605
  %v607 = vrot.slane %v456, 1
  %v608 = vrot.slane %v457, 1
  %v609 = vsel %vm576, %v607, %v608
  %v610 = vrot.slane %v458, 1
  %v611 = vrot.slane %v459, 1
  %v612 = vsel %vm576, %v610, %v611
  %v613 = vrot.slane %v460, 1
  %v614 = vrot.slane %v461, 1
  %v615 = vsel %vm576, %v613, %v614
  %v616 = vrot.slane %v462, 1
  %v617 = vrot.slane %v463, 1
  %v618 = vsel %vm576, %v616, %v617
  %v619 = vrot.slane %v464, 1
  %v620 = vrot.slane %v465, 1
  %v621 = vsel %vm576, %v619, %v620
  %v622 = vrot.slane %v466, 1
  %v623 = vrot.slane %v467, 1
  %v624 = vsel %vm576, %v622, %v623
  %v625 = vrot.slane %v472, 1
  %v626 = vrot.slane %v473, 1
  %v627 = vsel %vm576, %v625, %v626
  %v628 = vrot.slane %v474, 1
  %v629 = vrot.slane %v475, 1
  %v630 = vsel %vm576, %v628, %v629
  %v631 = vrot.slane %v476, 1
  %v632 = vrot.slane %v477, 1
  %v633 = vsel %vm576, %v631, %v632
  %v634 = vrot.slane %v478, 1
  %v635 = vrot.slane %v479, 1
  %v636 = vsel %vm576, %v634, %v635
  %v637 = vrot.slane %v480, 1
  %v638 = vrot.slane %v481, 1
  %v639 = vsel %vm576, %v637, %v638
  %v640 = vrot.slane %v482, 1
  %v641 = vrot.slane %v483, 1
  %v642 = vsel %vm576, %v640, %v641
  %v643 = vrot.slane %v484, 1
  %v644 = vrot.slane %v485, 1
  %v645 = vsel %vm576, %v643, %v644
  %v646 = vrot.slane %v486, 1
  %v647 = vrot.slane %v487, 1
  %v648 = vsel %vm576, %v646, %v647
  %v649 = vrot.slane %v492, 1
  %v650 = vrot.slane %v493, 1
  %v651 = vsel %vm576, %v649, %v650
  %v652 = vrot.slane %v494, 1
  %v653 = vrot.slane %v495, 1
  %v654 = vsel %vm576, %v652, %v653
  %v655 = vrot.slane %v496, 1
  %v656 = vrot.slane %v497, 1
  %v657 = vsel %vm576, %v655, %v656
  %v658 = vrot.slane %v498, 1
  %v659 = vrot.slane %v499, 1
  %v660 = vsel %vm576, %v658, %v659
  %v661 = vrot.slane %v500, 1
  %v662 = vrot.slane %v501, 1
  %v663 = vsel %vm576, %v661, %v662
  %v664 = vrot.slane %v502, 1
  %v665 = vrot.slane %v503, 1
  %v666 = vsel %vm576, %v664, %v665
  %v667 = vrot.slane %v504, 1
  %v668 = vrot.slane %v505, 1
  %v669 = vsel %vm576, %v667, %v668
  %v670 = vrot.slane %v506, 1
  %v671 = vrot.slane %v507, 1
  %v672 = vsel %vm576, %v670, %v671
  %vm705 = vcmask 1045504
  %v706 = vrot.slane %v432, 2
  %v707 = vrot.slane %v433, 2
  %v708 = vsel %vm705, %v706, %v707
  %v709 = vrot.slane %v434, 2
  %v710 = vrot.slane %v435, 2
  %v711 = vsel %vm705, %v709, %v710
  %v712 = vrot.slane %v436, 2
  %v713 = vrot.slane %v437, 2
  %v714 = vsel %vm705, %v712, %v713
  %v715 = vrot.slane %v438, 2
  %v716 = vrot.slane %v439, 2
  %v717 = vsel %vm705, %v715, %v716
  %v718 = vrot.slane %v440, 2
  %v719 = vrot.slane %v441, 2
  %v720 = vsel %vm705, %v718, %v719
  %v721 = vrot.slane %v442, 2
  %v722 = vrot.slane %v443, 2
  %v723 = vsel %vm705, %v721, %v722
  %v724 = vrot.slane %v444, 2
  %v725 = vrot.slane %v445, 2
  %v726 = vsel %vm705, %v724, %v725
  %v727 = vrot.slane %v446, 2
  %v728 = vrot.slane %v447, 2
  %v729 = vsel %vm705, %v727, %v728
  %v730 = vrot.slane %v452, 2
  %v731 = vrot.slane %v453, 2
  %v732 = vsel %vm705, %v730, %v731
  %v733 = vrot.slane %v454, 2
  %v734 = vrot.slane %v455, 2
  %v735 = vsel %vm705, %v733, %v734
  %v736 = vrot.slane %v456, 2
  %v737 = vrot.slane %v457, 2
  %v738 = vsel %vm705, %v736, %v737
  %v739 = vrot.slane %v458, 2
  %v740 = vrot.slane %v459, 2
  %v741 = vsel %vm705, %v739, %v740
  %v742 = vrot.slane %v460, 2
  %v743 = vrot.slane %v461, 2
  %v744 = vsel %vm705, %v742, %v743
  %v745 = vrot.slane %v462, 2
  %v746 = vrot.slane %v463, 2
  %v747 = vsel %vm705, %v745, %v746
  %v748 = vrot.slane %v464, 2
  %v749 = vrot.slane %v465, 2
  %v750 = vsel %vm705, %v748, %v749
  %v751 = vrot.slane %v466, 2
  %v752 = vrot.slane %v467, 2
  %v753 = vsel %vm705, %v751, %v752
  %v754 = vrot.slane %v472, 2
  %v755 = vrot.slane %v473, 2
  %v756 = vsel %vm705, %v754, %v755
  %v757 = vrot.slane %v474, 2
  %v758 = vrot.slane %v475, 2
  %v759 = vsel %vm705, %v757, %v758
  %v760 = vrot.slane %v476, 2
  %v761 = vrot.slane %v477, 2
  %v762 = vsel %vm705, %v760, %v761
  %v763 = vrot.slane %v478, 2
  %v764 = vrot.slane %v479, 2
  %v765 = vsel %vm705, %v763, %v764
  %v766 = vrot.slane %v480, 2
  %v767 = vrot.slane %v481, 2
  %v768 = vsel %vm705, %v766, %v767
  %v769 = vrot.slane %v482, 2
  %v770 = vrot.slane %v483, 2
  %v771 = vsel %vm705, %v769, %v770
  %v772 = vrot.slane %v484, 2
  %v773 = vrot.slane %v485, 2
  %v774 = vsel %vm705, %v772, %v773
  %v775 = vrot.slane %v486, 2
  %v776 = vrot.slane %v487, 2
  %v777 = vsel %vm705, %v775, %v776
  %v778 = vrot.slane %v492, 2
  %v779 = vrot.slane %v493, 2
  %v780 = vsel %vm705, %v778, %v779
  %v781 = vrot.slane %v494, 2
  %v782 = vrot.slane %v495, 2
  %v783 = vsel %vm705, %v781, %v782
  %v784 = vrot.slane %v496, 2
  %v785 = vrot.slane %v497, 2
  %v786 = vsel %vm705, %v784, %v785
  %v787 = vrot.slane %v498, 2
  %v788 = vrot.slane %v499, 2
  %v789 = vsel %vm705, %v787, %v788
  %v790 = vrot.slane %v500, 2
  %v791 = vrot.slane %v501, 2
  %v792 = vsel %vm705, %v790, %v791
  %v793 = vrot.slane %v502, 2
  %v794 = vrot.slane %v503, 2
  %v795 = vsel %vm705, %v793, %v794
  %v796 = vrot.slane %v504, 2
  %v797 = vrot.slane %v505, 2
  %v798 = vsel %vm705, %v796, %v797
  %v799 = vrot.slane %v506, 2
  %v800 = vrot.slane %v507, 2
  %v801 = vsel %vm705, %v799, %v800
  %v842 = vrot.slane %v448, 1
  %v843 = vrot.slane %v449, 1
  %v844 = vsel %vm576, %v842, %v843
  %v845 = vrot.slane %v468, 1
  %v846 = vrot.slane %v469, 1
  %v847 = vsel %vm576, %v845, %v846
  %v848 = vrot.slane %v488, 1
  %v849 = vrot.slane %v489, 1
  %v850 = vsel %vm576, %v848, %v849
  %v851 = vrot.slane %v508, 1
  %v852 = vrot.slane %v509, 1
  %v853 = vsel %vm576, %v851, %v852
  %v858 = vrot.slane %v448, 2
  %v859 = vrot.slane %v449, 2
  %v860 = vsel %vm705, %v858, %v859
  %v861 = vrot.slane %v468, 2
  %v862 = vrot.slane %v469, 2
  %v863 = vsel %vm705, %v861, %v862
  %v864 = vrot.slane %v488, 2
  %v865 = vrot.slane %v489, 2
  %v866 = vsel %vm705, %v864, %v865
  %v867 = vrot.slane %v508, 2
  %v868 = vrot.slane %v509, 2
  %v869 = vsel %vm705, %v867, %v868
  %v882 = vrot.slane %v450, 1
  %v883 = vrot.slane %v451, 1
  %v884 = vsel %vm576, %v882, %v883
  %v885 = vrot.slane %v470, 1
  %v886 = vrot.slane %v471, 1
  %v887 = vsel %vm576, %v885, %v886
  %v888 = vrot.slane %v490, 1
  %v889 = vrot.slane %v491, 1
  %v890 = vsel %vm576, %v888, %v889
  %v891 = vrot.slane %v510, 1
  %v892 = vrot.slane %v511, 1
  %v893 = vsel %vm576, %v891, %v892
  %v898 = vrot.slane %v450, 2
  %v899 = vrot.slane %v451, 2
  %v900 = vsel %vm705, %v898, %v899
  %v901 = vrot.slane %v470, 2
  %v902 = vrot.slane %v471, 2
  %v903 = vsel %vm705, %v901, %v902
  %v904 = vrot.slane %v490, 2
  %v905 = vrot.slane %v491, 2
  %v906 = vsel %vm705, %v904, %v905
  %v907 = vrot.slane %v510, 2
  %v908 = vrot.slane %v511, 2
  %v909 = vsel %vm705, %v907, %v908
  %v914 = vld [vmem:[%s1] sm:$0xff]
  %v915 = vld [vmem:[%s1 + $0x8] sm:$0xff]
  %v916 = vld [vmem:[%s1 + $0x10] sm:$0xff]
  %v917 = vld [vmem:[%s1 + $0x18] sm:$0xff]
  %v918 = vld [vmem:[%s1 + $0x20] sm:$0xff]
  %v919 = vld [vmem:[%s1 + $0x28] sm:$0xff]
  %v920 = vld [vmem:[%s1 + $0x30] sm:$0xff]
  %v921 = vld [vmem:[%s1 + $0x38] sm:$0xff]
  %v922 = vld [vmem:[%s1 + $0x40] sm:$0xff]
  %v923 = vld [vmem:[%s1 + $0x48] sm:$0xff]
  %v924 = vld [vmem:[%s1 + $0x50] sm:$0xff]
  %v925 = vld [vmem:[%s1 + $0x58] sm:$0xff]
  %v926 = vld [vmem:[%s1 + $0x60] sm:$0xff]
  %v927 = vld [vmem:[%s1 + $0x68] sm:$0xff]
  %v928 = vld [vmem:[%s1 + $0x70] sm:$0xff]
  %v929 = vld [vmem:[%s1 + $0x78] sm:$0xff]
  %v930 = vld [vmem:[%s1 + $0x80] sm:$0xff]
  %v931 = vld [vmem:[%s1 + $0x88] sm:$0xff]
  %v932 = vld [vmem:[%s1 + $0x90] sm:$0xff]
  %v933 = vld [vmem:[%s1 + $0x98] sm:$0xff]
  %v934 = vld [vmem:[%s1 + $0xa0] sm:$0xff]
  %v935 = vld [vmem:[%s1 + $0xa8] sm:$0xff]
  %v936 = vld [vmem:[%s1 + $0xb0] sm:$0xff]
  %v937 = vld [vmem:[%s1 + $0xb8] sm:$0xff]
  %v938 = vld [vmem:[%s1 + $0xc0] sm:$0xff]
  %v939 = vld [vmem:[%s1 + $0xc8] sm:$0xff]
  %v940 = vld [vmem:[%s1 + $0xd0] sm:$0xff]
  %v941 = vld [vmem:[%s1 + $0xd8] sm:$0xff]
  %v942 = vld [vmem:[%s1 + $0xe0] sm:$0xff]
  %v943 = vld [vmem:[%s1 + $0xe8] sm:$0xff]
  %v944 = vld [vmem:[%s1 + $0xf0] sm:$0xff]
  %v945 = vld [vmem:[%s1 + $0xf8] sm:$0xff]
  %v946 = vld [vmem:[%s1 + $0x100] sm:$0xff]
  %v947 = vld [vmem:[%s1 + $0x108] sm:$0xff]
  %v948 = vld [vmem:[%s1 + $0x110] sm:$0xff]
  %v949 = vld [vmem:[%s1 + $0x118] sm:$0xff]
  %v950 = vld [vmem:[%s1 + $0x120] sm:$0xff]
  %v951 = vld [vmem:[%s1 + $0x128] sm:$0xff]
  %v952 = vld [vmem:[%s1 + $0x130] sm:$0xff]
  %v953 = vld [vmem:[%s1 + $0x138] sm:$0xff]
  %v954 = vld [vmem:[%s1 + $0x140] sm:$0xff]
  %v955 = vld [vmem:[%s1 + $0x148] sm:$0xff]
  %v956 = vld [vmem:[%s1 + $0x150] sm:$0xff]
  %v957 = vld [vmem:[%s1 + $0x158] sm:$0xff]
  %v958 = vld [vmem:[%s1 + $0x160] sm:$0xff]
  %v959 = vld [vmem:[%s1 + $0x168] sm:$0xff]
  %v960 = vld [vmem:[%s1 + $0x170] sm:$0xff]
  %v961 = vld [vmem:[%s1 + $0x178] sm:$0xff]
  %v962 = vld [vmem:[%s1 + $0x180] sm:$0xff]
  %v963 = vld [vmem:[%s1 + $0x188] sm:$0xff]
  %v964 = vld [vmem:[%s1 + $0x190] sm:$0xff]
  %v965 = vld [vmem:[%s1 + $0x198] sm:$0xff]
  %v966 = vld [vmem:[%s1 + $0x1a0] sm:$0xff]
  %v967 = vld [vmem:[%s1 + $0x1a8] sm:$0xff]
  %v968 = vld [vmem:[%s1 + $0x1b0] sm:$0xff]
  %v969 = vld [vmem:[%s1 + $0x1b8] sm:$0xff]
  %v970 = vld [vmem:[%s1 + $0x1c0] sm:$0xff]
  %v971 = vld [vmem:[%s1 + $0x1c8] sm:$0xff]
  %v972 = vld [vmem:[%s1 + $0x1d0] sm:$0xff]
  %v973 = vld [vmem:[%s1 + $0x1d8] sm:$0xff]
  %v974 = vld [vmem:[%s1 + $0x1e0] sm:$0xff]
  %v975 = vld [vmem:[%s1 + $0x1e8] sm:$0xff]
  %v976 = vld [vmem:[%s1 + $0x1f0] sm:$0xff]
  %v977 = vld [vmem:[%s1 + $0x1f8] sm:$0xff]
  %v978 = vld [vmem:[%s1 + $0x200] sm:$0xff]
  %v979 = vld [vmem:[%s1 + $0x208] sm:$0xff]
  %v980 = vld [vmem:[%s1 + $0x210] sm:$0xff]
  %v981 = vld [vmem:[%s1 + $0x218] sm:$0xff]
  %v982 = vld [vmem:[%s1 + $0x220] sm:$0xff]
  %v983 = vld [vmem:[%s1 + $0x228] sm:$0xff]
  %v984 = vld [vmem:[%s1 + $0x230] sm:$0xff]
  %v985 = vld [vmem:[%s1 + $0x238] sm:$0xff]
  %v986 = vld [vmem:[%s1 + $0x240] sm:$0xff]
  %v987 = vld [vmem:[%s1 + $0x248] sm:$0xff]
  %v988 = vld [vmem:[%s1 + $0x250] sm:$0xff]
  %v989 = vld [vmem:[%s1 + $0x258] sm:$0xff]
  %v990 = vld [vmem:[%s1 + $0x260] sm:$0xff]
  %v991 = vld [vmem:[%s1 + $0x268] sm:$0xff]
  %v992 = vld [vmem:[%s1 + $0x270] sm:$0xff]
  %v993 = vld [vmem:[%s1 + $0x278] sm:$0xff]
  %v994 = vld [vmem:[%s1 + $0x280] sm:$0xff]
  %v995 = vld [vmem:[%s1 + $0x288] sm:$0xff]
  %v996 = vld [vmem:[%s1 + $0x290] sm:$0xff]
  %v997 = vld [vmem:[%s1 + $0x298] sm:$0xff]
  %v998 = vld [vmem:[%s1 + $0x2a0] sm:$0xff]
  %v999 = vld [vmem:[%s1 + $0x2a8] sm:$0xff]
  %v1000 = vld [vmem:[%s1 + $0x2b0] sm:$0xff]
  %v1001 = vld [vmem:[%s1 + $0x2b8] sm:$0xff]
  %v1002 = vld [vmem:[%s1 + $0x2c0] sm:$0xff]
  %v1003 = vld [vmem:[%s1 + $0x2c8] sm:$0xff]
  %v1004 = vld [vmem:[%s1 + $0x2d0] sm:$0xff]
  %v1005 = vld [vmem:[%s1 + $0x2d8] sm:$0xff]
  %v1006 = vld [vmem:[%s1 + $0x2e0] sm:$0xff]
  %v1007 = vld [vmem:[%s1 + $0x2e8] sm:$0xff]
  %v1008 = vld [vmem:[%s1 + $0x2f0] sm:$0xff]
  %v1009 = vld [vmem:[%s1 + $0x2f8] sm:$0xff]
  %v1010 = vld [vmem:[%s1 + $0x300] sm:$0xff]
  %v1011 = vld [vmem:[%s1 + $0x308] sm:$0xff]
  %v1012 = vld [vmem:[%s1 + $0x310] sm:$0xff]
  %v1013 = vld [vmem:[%s1 + $0x318] sm:$0xff]
  %v1014 = vld [vmem:[%s1 + $0x320] sm:$0xff]
  %v1015 = vld [vmem:[%s1 + $0x328] sm:$0xff]
  %v1016 = vld [vmem:[%s1 + $0x330] sm:$0xff]
  %v1017 = vld [vmem:[%s1 + $0x338] sm:$0xff]
  %v1018 = vld [vmem:[%s1 + $0x340] sm:$0xff]
  %v1019 = vld [vmem:[%s1 + $0x348] sm:$0xff]
  %v1020 = vld [vmem:[%s1 + $0x350] sm:$0xff]
  %v1021 = vld [vmem:[%s1 + $0x358] sm:$0xff]
  %v1022 = vld [vmem:[%s1 + $0x360] sm:$0xff]
  %v1023 = vld [vmem:[%s1 + $0x368] sm:$0xff]
  %v1024 = vld [vmem:[%s1 + $0x370] sm:$0xff]
  %v1025 = vld [vmem:[%s1 + $0x378] sm:$0xff]
  %v1026 = vld [vmem:[%s1 + $0x380] sm:$0xff]
  %v1027 = vld [vmem:[%s1 + $0x388] sm:$0xff]
  %v1028 = vld [vmem:[%s1 + $0x390] sm:$0xff]
  %v1029 = vld [vmem:[%s1 + $0x398] sm:$0xff]
  %v1030 = vld [vmem:[%s1 + $0x3a0] sm:$0xff]
  %v1031 = vld [vmem:[%s1 + $0x3a8] sm:$0xff]
  %v1032 = vld [vmem:[%s1 + $0x3b0] sm:$0xff]
  %v1033 = vld [vmem:[%s1 + $0x3b8] sm:$0xff]
  %v1034 = vld [vmem:[%s1 + $0x3c0] sm:$0xff]
  %v1035 = vld [vmem:[%s1 + $0x3c8] sm:$0xff]
  %v1036 = vld [vmem:[%s1 + $0x3d0] sm:$0xff]
  %v1037 = vld [vmem:[%s1 + $0x3d8] sm:$0xff]
  %v1038 = vld [vmem:[%s1 + $0x3e0] sm:$0xff]
  %v1039 = vld [vmem:[%s1 + $0x3e8] sm:$0xff]
  %v1040 = vld [vmem:[%s1 + $0x3f0] sm:$0xff]
  %v1041 = vld [vmem:[%s1 + $0x3f8] sm:$0xff]
  %v1042 = vld [vmem:[%s1 + $0x400] sm:$0xff]
  %v1043 = vld [vmem:[%s1 + $0x408] sm:$0xff]
  %v1044 = vld [vmem:[%s1 + $0x410] sm:$0xff]
  %v1045 = vld [vmem:[%s1 + $0x418] sm:$0xff]
  %v1046 = vld [vmem:[%s1 + $0x420] sm:$0xff]
  %v1047 = vld [vmem:[%s1 + $0x428] sm:$0xff]
  %v1048 = vld [vmem:[%s1 + $0x430] sm:$0xff]
  %v1049 = vld [vmem:[%s1 + $0x438] sm:$0xff]
  %v1050 = vld [vmem:[%s1 + $0x440] sm:$0xff]
  %v1051 = vld [vmem:[%s1 + $0x448] sm:$0xff]
  %v1052 = vld [vmem:[%s1 + $0x450] sm:$0xff]
  %v1053 = vld [vmem:[%s1 + $0x458] sm:$0xff]
  %v1054 = vld [vmem:[%s1 + $0x460] sm:$0xff]
  %v1055 = vld [vmem:[%s1 + $0x468] sm:$0xff]
  %v1056 = vld [vmem:[%s1 + $0x470] sm:$0xff]
  %v1057 = vld [vmem:[%s1 + $0x478] sm:$0xff]
  %v1058 = vld [vmem:[%s2] sm:$0x1]
  %v1060 = vlaneseq
  %v1061 = vshrl.u32 %v1060, 7
  %v1062 = vsub.s32 0, %v1061
  %v1063 = vrot.slane %v1058, %v1062
  %1065 = vmatprep.subr.mxu0 0.0
  %1066 = vmatpush1.msra.mxu0 %v929
  %1067 = vmatprep.subr.mxu0 0.0
  %1068 = vmatpush1.msra.mxu0 %v928
  %1069 = vmatprep.subr.mxu0 0.0
  %1070 = vmatpush1.msra.mxu0 %v927
  %1071 = vmatprep.subr.mxu0 0.0
  %1072 = vmatpush1.msra.mxu0 %v926
  %1073 = vmatprep.subr.mxu0 0.0
  %1074 = vmatpush1.msra.mxu0 %v925
  %1075 = vmatprep.subr.mxu0 0.0
  %1076 = vmatpush1.msra.mxu0 %v924
  %1077 = vmatprep.subr.mxu0 0.0
  %1078 = vmatpush1.msra.mxu0 %v923
  %1079 = vmatprep.subr.mxu0 0.0
  %1080 = vmatpush1.msra.mxu0 %v922
  %1081 = vmatprep.subr.mxu0 0.0
  %1082 = vmatpush1.msra.mxu0 %v921
  %1083 = vmatprep.subr.mxu0 0.0
  %1084 = vmatpush1.msra.mxu0 %v920
  %1085 = vmatprep.subr.mxu0 0.0
  %1086 = vmatpush1.msra.mxu0 %v919
  %1087 = vmatprep.subr.mxu0 0.0
  %1088 = vmatpush1.msra.mxu0 %v918
  %1089 = vmatprep.subr.mxu0 0.0
  %1090 = vmatpush1.msra.mxu0 %v917
  %1091 = vmatprep.subr.mxu0 0.0
  %1092 = vmatpush1.msra.mxu0 %v916
  %1093 = vmatprep.subr.mxu0 0.0
  %1094 = vmatpush1.msra.mxu0 %v915
  %1095 = vmatprep.subr.mxu0 0.0
  %1096 = vmatpush1.msra.mxu0 %v914
  %1097 = vmatprep.subr.mxu0 0.0
  %1098 = vmatpush2.msra.mxu0 %v945
  %1099 = vmatprep.subr.mxu0 0.0
  %1100 = vmatpush2.msra.mxu0 %v944
  %1101 = vmatprep.subr.mxu0 0.0
  %1102 = vmatpush2.msra.mxu0 %v943
  %1103 = vmatprep.subr.mxu0 0.0
  %1104 = vmatpush2.msra.mxu0 %v942
  %1105 = vmatprep.subr.mxu0 0.0
  %1106 = vmatpush2.msra.mxu0 %v941
  %1107 = vmatprep.subr.mxu0 0.0
  %1108 = vmatpush2.msra.mxu0 %v940
  %1109 = vmatprep.subr.mxu0 0.0
  %1110 = vmatpush2.msra.mxu0 %v939
  %1111 = vmatprep.subr.mxu0 0.0
  %1112 = vmatpush2.msra.mxu0 %v938
  %1113 = vmatprep.subr.mxu0 0.0
  %1114 = vmatpush2.msra.mxu0 %v937
  %1115 = vmatprep.subr.mxu0 0.0
  %1116 = vmatpush2.msra.mxu0 %v936
  %1117 = vmatprep.subr.mxu0 0.0
  %1118 = vmatpush2.msra.mxu0 %v935
  %1119 = vmatprep.subr.mxu0 0.0
  %1120 = vmatpush2.msra.mxu0 %v934
  %1121 = vmatprep.subr.mxu0 0.0
  %1122 = vmatpush2.msra.mxu0 %v933
  %1123 = vmatprep.subr.mxu0 0.0
  %1124 = vmatpush2.msra.mxu0 %v932
  %1125 = vmatprep.subr.mxu0 0.0
  %1126 = vmatpush2.msra.mxu0 %v931
  %1127 = vmatprep.subr.mxu0 0.0
  %1128 = vmatpush2.msra.mxu0 %v930
  %1129 = vmatprep.mubr.f32.mxu0 %v579
  %1130 = vmatmul.mubr.f32.gmra.mxu0 %v432
  %v1131 = vpop.f32.mrf.mxu0
  %v1132 = vadd.f32 %v1063, %v1131
  %v1133 = vpop.f32.mrf.mxu0
  %1134 = vmatprep.mubr.f32.mxu0 %v582
  %1135 = vmatmul.mubr.f32.gmra.mxu0 %v434
  %v1136 = vpop.f32.mrf.mxu0
  %v1137 = vadd.f32 %v1063, %v1136
  %v1138 = vpop.f32.mrf.mxu0
  %1139 = vmatprep.mubr.f32.mxu0 %v585
  %1140 = vmatmul.mubr.f32.gmra.mxu0 %v436
  %v1141 = vpop.f32.mrf.mxu0
  %v1142 = vadd.f32 %v1063, %v1141
  %v1143 = vpop.f32.mrf.mxu0
  %1144 = vmatprep.mubr.f32.mxu0 %v588
  %1145 = vmatmul.mubr.f32.gmra.mxu0 %v438
  %v1146 = vpop.f32.mrf.mxu0
  %v1147 = vadd.f32 %v1063, %v1146
  %v1148 = vpop.f32.mrf.mxu0
  %1149 = vmatprep.mubr.f32.mxu0 %v591
  %1150 = vmatmul.mubr.f32.gmra.mxu0 %v440
  %v1151 = vpop.f32.mrf.mxu0
  %v1152 = vadd.f32 %v1063, %v1151
  %v1153 = vpop.f32.mrf.mxu0
  %1154 = vmatprep.mubr.f32.mxu0 %v594
  %1155 = vmatmul.mubr.f32.gmra.mxu0 %v442
  %v1156 = vpop.f32.mrf.mxu0
  %v1157 = vadd.f32 %v1063, %v1156
  %v1158 = vpop.f32.mrf.mxu0
  %1159 = vmatprep.mubr.f32.mxu0 %v597
  %1160 = vmatmul.mubr.f32.gmra.mxu0 %v444
  %v1161 = vpop.f32.mrf.mxu0
  %v1162 = vadd.f32 %v1063, %v1161
  %v1163 = vpop.f32.mrf.mxu0
  %1164 = vmatprep.mubr.f32.mxu0 %v600
  %1165 = vmatmul.mubr.f32.gmra.mxu0 %v446
  %v1166 = vpop.f32.mrf.mxu0
  %v1167 = vadd.f32 %v1063, %v1166
  %v1168 = vpop.f32.mrf.mxu0
  %1169 = vmatprep.mubr.f32.mxu0 %v603
  %1170 = vmatmul.mubr.f32.gmra.mxu0 %v452
  %v1171 = vpop.f32.mrf.mxu0
  %v1172 = vadd.f32 %v1063, %v1171
  %v1173 = vpop.f32.mrf.mxu0
  %1174 = vmatprep.mubr.f32.mxu0 %v606
  %1175 = vmatmul.mubr.f32.gmra.mxu0 %v454
  %v1176 = vpop.f32.mrf.mxu0
  %v1177 = vadd.f32 %v1063, %v1176
  %v1178 = vpop.f32.mrf.mxu0
  %1179 = vmatprep.mubr.f32.mxu0 %v609
  %1180 = vmatmul.mubr.f32.gmra.mxu0 %v456
  %v1181 = vpop.f32.mrf.mxu0
  %v1182 = vadd.f32 %v1063, %v1181
  %v1183 = vpop.f32.mrf.mxu0
  %1184 = vmatprep.mubr.f32.mxu0 %v612
  %1185 = vmatmul.mubr.f32.gmra.mxu0 %v458
  %v1186 = vpop.f32.mrf.mxu0
  %v1187 = vadd.f32 %v1063, %v1186
  %v1188 = vpop.f32.mrf.mxu0
  %1189 = vmatprep.mubr.f32.mxu0 %v615
  %1190 = vmatmul.mubr.f32.gmra.mxu0 %v460
  %v1191 = vpop.f32.mrf.mxu0
  %v1192 = vadd.f32 %v1063, %v1191
  %v1193 = vpop.f32.mrf.mxu0
  %1194 = vmatprep.mubr.f32.mxu0 %v618
  %1195 = vmatmul.mubr.f32.gmra.mxu0 %v462
  %v1196 = vpop.f32.mrf.mxu0
  %v1197 = vadd.f32 %v1063, %v1196
  %v1198 = vpop.f32.mrf.mxu0
  %1199 = vmatprep.mubr.f32.mxu0 %v621
  %1200 = vmatmul.mubr.f32.gmra.mxu0 %v464
  %v1201 = vpop.f32.mrf.mxu0
  %v1202 = vadd.f32 %v1063, %v1201
  %v1203 = vpop.f32.mrf.mxu0
  %1204 = vmatprep.mubr.f32.mxu0 %v624
  %1205 = vmatmul.mubr.f32.gmra.mxu0 %v466
  %v1206 = vpop.f32.mrf.mxu0
  %v1207 = vadd.f32 %v1063, %v1206
  %v1208 = vpop.f32.mrf.mxu0
  %1209 = vmatprep.mubr.f32.mxu0 %v627
  %1210 = vmatmul.mubr.f32.gmra.mxu0 %v472
  %v1211 = vpop.f32.mrf.mxu0
  %v1212 = vadd.f32 %v1063, %v1211
  %v1213 = vpop.f32.mrf.mxu0
  %1214 = vmatprep.mubr.f32.mxu0 %v630
  %1215 = vmatmul.mubr.f32.gmra.mxu0 %v474
  %v1216 = vpop.f32.mrf.mxu0
  %v1217 = vadd.f32 %v1063, %v1216
  %v1218 = vpop.f32.mrf.mxu0
  %1219 = vmatprep.mubr.f32.mxu0 %v633
  %1220 = vmatmul.mubr.f32.gmra.mxu0 %v476
  %v1221 = vpop.f32.mrf.mxu0
  %v1222 = vadd.f32 %v1063, %v1221
  %v1223 = vpop.f32.mrf.mxu0
  %1224 = vmatprep.mubr.f32.mxu0 %v636
  %1225 = vmatmul.mubr.f32.gmra.mxu0 %v478
  %v1226 = vpop.f32.mrf.mxu0
  %v1227 = vadd.f32 %v1063, %v1226
  %v1228 = vpop.f32.mrf.mxu0
  %1229 = vmatprep.mubr.f32.mxu0 %v639
  %1230 = vmatmul.mubr.f32.gmra.mxu0 %v480
  %v1231 = vpop.f32.mrf.mxu0
  %v1232 = vadd.f32 %v1063, %v1231
  %v1233 = vpop.f32.mrf.mxu0
  %1234 = vmatprep.mubr.f32.mxu0 %v642
  %1235 = vmatmul.mubr.f32.gmra.mxu0 %v482
  %v1236 = vpop.f32.mrf.mxu0
  %v1237 = vadd.f32 %v1063, %v1236
  %v1238 = vpop.f32.mrf.mxu0
  %1239 = vmatprep.mubr.f32.mxu0 %v645
  %1240 = vmatmul.mubr.f32.gmra.mxu0 %v484
  %v1241 = vpop.f32.mrf.mxu0
  %v1242 = vadd.f32 %v1063, %v1241
  %v1243 = vpop.f32.mrf.mxu0
  %1244 = vmatprep.mubr.f32.mxu0 %v648
  %1245 = vmatmul.mubr.f32.gmra.mxu0 %v486
  %v1246 = vpop.f32.mrf.mxu0
  %v1247 = vadd.f32 %v1063, %v1246
  %v1248 = vpop.f32.mrf.mxu0
  %1249 = vmatprep.mubr.f32.mxu0 %v651
  %1250 = vmatmul.mubr.f32.gmra.mxu0 %v492
  %v1251 = vpop.f32.mrf.mxu0
  %v1252 = vadd.f32 %v1063, %v1251
  %v1253 = vpop.f32.mrf.mxu0
  %1254 = vmatprep.mubr.f32.mxu0 %v654
  %1255 = vmatmul.mubr.f32.gmra.mxu0 %v494
  %v1256 = vpop.f32.mrf.mxu0
  %v1257 = vadd.f32 %v1063, %v1256
  %v1258 = vpop.f32.mrf.mxu0
  %1259 = vmatprep.mubr.f32.mxu0 %v657
  %1260 = vmatmul.mubr.f32.gmra.mxu0 %v496
  %v1261 = vpop.f32.mrf.mxu0
  %v1262 = vadd.f32 %v1063, %v1261
  %v1263 = vpop.f32.mrf.mxu0
  %1264 = vmatprep.mubr.f32.mxu0 %v660
  %1265 = vmatmul.mubr.f32.gmra.mxu0 %v498
  %v1266 = vpop.f32.mrf.mxu0
  %v1267 = vadd.f32 %v1063, %v1266
  %v1268 = vpop.f32.mrf.mxu0
  %1269 = vmatprep.mubr.f32.mxu0 %v663
  %1270 = vmatmul.mubr.f32.gmra.mxu0 %v500
  %v1271 = vpop.f32.mrf.mxu0
  %v1272 = vadd.f32 %v1063, %v1271
  %v1273 = vpop.f32.mrf.mxu0
  %1274 = vmatprep.mubr.f32.mxu0 %v666
  %1275 = vmatmul.mubr.f32.gmra.mxu0 %v502
  %v1276 = vpop.f32.mrf.mxu0
  %v1277 = vadd.f32 %v1063, %v1276
  %v1278 = vpop.f32.mrf.mxu0
  %1279 = vmatprep.mubr.f32.mxu0 %v669
  %1280 = vmatmul.mubr.f32.gmra.mxu0 %v504
  %v1281 = vpop.f32.mrf.mxu0
  %v1282 = vadd.f32 %v1063, %v1281
  %v1283 = vpop.f32.mrf.mxu0
  %1284 = vmatprep.mubr.f32.mxu0 %v672
  %1285 = vmatmul.mubr.f32.gmra.mxu0 %v506
  %v1286 = vpop.f32.mrf.mxu0
  %v1287 = vadd.f32 %v1063, %v1286
  %v1288 = vpop.f32.mrf.mxu0
  %1289 = vdwg.mxu0
  %1290 = vmatprep.subr.mxu0 0.0
  %1291 = vmatpush1.msra.mxu0 %v961
  %1292 = vmatprep.subr.mxu0 0.0
  %1293 = vmatpush1.msra.mxu0 %v960
  %1294 = vmatprep.subr.mxu0 0.0
  %1295 = vmatpush1.msra.mxu0 %v959
  %1296 = vmatprep.subr.mxu0 0.0
  %1297 = vmatpush1.msra.mxu0 %v958
  %1298 = vmatprep.subr.mxu0 0.0
  %1299 = vmatpush1.msra.mxu0 %v957
  %1300 = vmatprep.subr.mxu0 0.0
  %1301 = vmatpush1.msra.mxu0 %v956
  %1302 = vmatprep.subr.mxu0 0.0
  %1303 = vmatpush1.msra.mxu0 %v955
  %1304 = vmatprep.subr.mxu0 0.0
  %1305 = vmatpush1.msra.mxu0 %v954
  %1306 = vmatprep.subr.mxu0 0.0
  %1307 = vmatpush1.msra.mxu0 %v953
  %1308 = vmatprep.subr.mxu0 0.0
  %1309 = vmatpush1.msra.mxu0 %v952
  %1310 = vmatprep.subr.mxu0 0.0
  %1311 = vmatpush1.msra.mxu0 %v951
  %1312 = vmatprep.subr.mxu0 0.0
  %1313 = vmatpush1.msra.mxu0 %v950
  %1314 = vmatprep.subr.mxu0 0.0
  %1315 = vmatpush1.msra.mxu0 %v949
  %1316 = vmatprep.subr.mxu0 0.0
  %1317 = vmatpush1.msra.mxu0 %v948
  %1318 = vmatprep.subr.mxu0 0.0
  %1319 = vmatpush1.msra.mxu0 %v947
  %1320 = vmatprep.subr.mxu0 0.0
  %1321 = vmatpush1.msra.mxu0 %v946
  %1322 = vmatprep.subr.mxu0 0.0
  %1323 = vmatpush2.msra.mxu0 %v977
  %1324 = vmatprep.subr.mxu0 0.0
  %1325 = vmatpush2.msra.mxu0 %v976
  %1326 = vmatprep.subr.mxu0 0.0
  %1327 = vmatpush2.msra.mxu0 %v975
  %1328 = vmatprep.subr.mxu0 0.0
  %1329 = vmatpush2.msra.mxu0 %v974
  %1330 = vmatprep.subr.mxu0 0.0
  %1331 = vmatpush2.msra.mxu0 %v973
  %1332 = vmatprep.subr.mxu0 0.0
  %1333 = vmatpush2.msra.mxu0 %v972
  %1334 = vmatprep.subr.mxu0 0.0
  %1335 = vmatpush2.msra.mxu0 %v971
  %1336 = vmatprep.subr.mxu0 0.0
  %1337 = vmatpush2.msra.mxu0 %v970
  %1338 = vmatprep.subr.mxu0 0.0
  %1339 = vmatpush2.msra.mxu0 %v969
  %1340 = vmatprep.subr.mxu0 0.0
  %1341 = vmatpush2.msra.mxu0 %v968
  %1342 = vmatprep.subr.mxu0 0.0
  %1343 = vmatpush2.msra.mxu0 %v967
  %1344 = vmatprep.subr.mxu0 0.0
  %1345 = vmatpush2.msra.mxu0 %v966
  %1346 = vmatprep.subr.mxu0 0.0
  %1347 = vmatpush2.msra.mxu0 %v965
  %1348 = vmatprep.subr.mxu0 0.0
  %1349 = vmatpush2.msra.mxu0 %v964
  %1350 = vmatprep.subr.mxu0 0.0
  %1351 = vmatpush2.msra.mxu0 %v963
  %1352 = vmatprep.subr.mxu0 0.0
  %1353 = vmatpush2.msra.mxu0 %v962
  %1354 = vmatprep.mubr.f32.mxu0 %v434
  %1355 = vmatmul.mubr.f32.gmra.mxu0 %v708
  %v1356 = vpop.f32.mrf.mxu0
  %v1357 = vadd.f32 %v1132, %v1356
  %v1358 = vpop.f32.mrf.mxu0
  %1359 = vmatprep.mubr.f32.mxu0 %v436
  %1360 = vmatmul.mubr.f32.gmra.mxu0 %v711
  %v1361 = vpop.f32.mrf.mxu0
  %v1362 = vadd.f32 %v1137, %v1361
  %v1363 = vpop.f32.mrf.mxu0
  %1364 = vmatprep.mubr.f32.mxu0 %v438
  %1365 = vmatmul.mubr.f32.gmra.mxu0 %v714
  %v1366 = vpop.f32.mrf.mxu0
  %v1367 = vadd.f32 %v1142, %v1366
  %v1368 = vpop.f32.mrf.mxu0
  %1369 = vmatprep.mubr.f32.mxu0 %v440
  %1370 = vmatmul.mubr.f32.gmra.mxu0 %v717
  %v1371 = vpop.f32.mrf.mxu0
  %v1372 = vadd.f32 %v1147, %v1371
  %v1373 = vpop.f32.mrf.mxu0
  %1374 = vmatprep.mubr.f32.mxu0 %v442
  %1375 = vmatmul.mubr.f32.gmra.mxu0 %v720
  %v1376 = vpop.f32.mrf.mxu0
  %v1377 = vadd.f32 %v1152, %v1376
  %v1378 = vpop.f32.mrf.mxu0
  %1379 = vmatprep.mubr.f32.mxu0 %v444
  %1380 = vmatmul.mubr.f32.gmra.mxu0 %v723
  %v1381 = vpop.f32.mrf.mxu0
  %v1382 = vadd.f32 %v1157, %v1381
  %v1383 = vpop.f32.mrf.mxu0
  %1384 = vmatprep.mubr.f32.mxu0 %v446
  %1385 = vmatmul.mubr.f32.gmra.mxu0 %v726
  %v1386 = vpop.f32.mrf.mxu0
  %v1387 = vadd.f32 %v1162, %v1386
  %v1388 = vpop.f32.mrf.mxu0
  %1389 = vmatprep.mubr.f32.mxu0 %v448
  %1390 = vmatmul.mubr.f32.gmra.mxu0 %v729
  %v1391 = vpop.f32.mrf.mxu0
  %v1392 = vadd.f32 %v1167, %v1391
  %v1393 = vpop.f32.mrf.mxu0
  %1394 = vmatprep.mubr.f32.mxu0 %v454
  %1395 = vmatmul.mubr.f32.gmra.mxu0 %v732
  %v1396 = vpop.f32.mrf.mxu0
  %v1397 = vadd.f32 %v1172, %v1396
  %v1398 = vpop.f32.mrf.mxu0
  %1399 = vmatprep.mubr.f32.mxu0 %v456
  %1400 = vmatmul.mubr.f32.gmra.mxu0 %v735
  %v1401 = vpop.f32.mrf.mxu0
  %v1402 = vadd.f32 %v1177, %v1401
  %v1403 = vpop.f32.mrf.mxu0
  %1404 = vmatprep.mubr.f32.mxu0 %v458
  %1405 = vmatmul.mubr.f32.gmra.mxu0 %v738
  %v1406 = vpop.f32.mrf.mxu0
  %v1407 = vadd.f32 %v1182, %v1406
  %v1408 = vpop.f32.mrf.mxu0
  %1409 = vmatprep.mubr.f32.mxu0 %v460
  %1410 = vmatmul.mubr.f32.gmra.mxu0 %v741
  %v1411 = vpop.f32.mrf.mxu0
  %v1412 = vadd.f32 %v1187, %v1411
  %v1413 = vpop.f32.mrf.mxu0
  %1414 = vmatprep.mubr.f32.mxu0 %v462
  %1415 = vmatmul.mubr.f32.gmra.mxu0 %v744
  %v1416 = vpop.f32.mrf.mxu0
  %v1417 = vadd.f32 %v1192, %v1416
  %v1418 = vpop.f32.mrf.mxu0
  %1419 = vmatprep.mubr.f32.mxu0 %v464
  %1420 = vmatmul.mubr.f32.gmra.mxu0 %v747
  %v1421 = vpop.f32.mrf.mxu0
  %v1422 = vadd.f32 %v1197, %v1421
  %v1423 = vpop.f32.mrf.mxu0
  %1424 = vmatprep.mubr.f32.mxu0 %v466
  %1425 = vmatmul.mubr.f32.gmra.mxu0 %v750
  %v1426 = vpop.f32.mrf.mxu0
  %v1427 = vadd.f32 %v1202, %v1426
  %v1428 = vpop.f32.mrf.mxu0
  %1429 = vmatprep.mubr.f32.mxu0 %v468
  %1430 = vmatmul.mubr.f32.gmra.mxu0 %v753
  %v1431 = vpop.f32.mrf.mxu0
  %v1432 = vadd.f32 %v1207, %v1431
  %v1433 = vpop.f32.mrf.mxu0
  %1434 = vmatprep.mubr.f32.mxu0 %v474
  %1435 = vmatmul.mubr.f32.gmra.mxu0 %v756
  %v1436 = vpop.f32.mrf.mxu0
  %v1437 = vadd.f32 %v1212, %v1436
  %v1438 = vpop.f32.mrf.mxu0
  %1439 = vmatprep.mubr.f32.mxu0 %v476
  %1440 = vmatmul.mubr.f32.gmra.mxu0 %v759
  %v1441 = vpop.f32.mrf.mxu0
  %v1442 = vadd.f32 %v1217, %v1441
  %v1443 = vpop.f32.mrf.mxu0
  %1444 = vmatprep.mubr.f32.mxu0 %v478
  %1445 = vmatmul.mubr.f32.gmra.mxu0 %v762
  %v1446 = vpop.f32.mrf.mxu0
  %v1447 = vadd.f32 %v1222, %v1446
  %v1448 = vpop.f32.mrf.mxu0
  %1449 = vmatprep.mubr.f32.mxu0 %v480
  %1450 = vmatmul.mubr.f32.gmra.mxu0 %v765
  %v1451 = vpop.f32.mrf.mxu0
  %v1452 = vadd.f32 %v1227, %v1451
  %v1453 = vpop.f32.mrf.mxu0
  %1454 = vmatprep.mubr.f32.mxu0 %v482
  %1455 = vmatmul.mubr.f32.gmra.mxu0 %v768
  %v1456 = vpop.f32.mrf.mxu0
  %v1457 = vadd.f32 %v1232, %v1456
  %v1458 = vpop.f32.mrf.mxu0
  %1459 = vmatprep.mubr.f32.mxu0 %v484
  %1460 = vmatmul.mubr.f32.gmra.mxu0 %v771
  %v1461 = vpop.f32.mrf.mxu0
  %v1462 = vadd.f32 %v1237, %v1461
  %v1463 = vpop.f32.mrf.mxu0
  %1464 = vmatprep.mubr.f32.mxu0 %v486
  %1465 = vmatmul.mubr.f32.gmra.mxu0 %v774
  %v1466 = vpop.f32.mrf.mxu0
  %v1467 = vadd.f32 %v1242, %v1466
  %v1468 = vpop.f32.mrf.mxu0
  %1469 = vmatprep.mubr.f32.mxu0 %v488
  %1470 = vmatmul.mubr.f32.gmra.mxu0 %v777
  %v1471 = vpop.f32.mrf.mxu0
  %v1472 = vadd.f32 %v1247, %v1471
  %v1473 = vpop.f32.mrf.mxu0
  %1474 = vmatprep.mubr.f32.mxu0 %v494
  %1475 = vmatmul.mubr.f32.gmra.mxu0 %v780
  %v1476 = vpop.f32.mrf.mxu0
  %v1477 = vadd.f32 %v1252, %v1476
  %v1478 = vpop.f32.mrf.mxu0
  %1479 = vmatprep.mubr.f32.mxu0 %v496
  %1480 = vmatmul.mubr.f32.gmra.mxu0 %v783
  %v1481 = vpop.f32.mrf.mxu0
  %v1482 = vadd.f32 %v1257, %v1481
  %v1483 = vpop.f32.mrf.mxu0
  %1484 = vmatprep.mubr.f32.mxu0 %v498
  %1485 = vmatmul.mubr.f32.gmra.mxu0 %v786
  %v1486 = vpop.f32.mrf.mxu0
  %v1487 = vadd.f32 %v1262, %v1486
  %v1488 = vpop.f32.mrf.mxu0
  %1489 = vmatprep.mubr.f32.mxu0 %v500
  %1490 = vmatmul.mubr.f32.gmra.mxu0 %v789
  %v1491 = vpop.f32.mrf.mxu0
  %v1492 = vadd.f32 %v1267, %v1491
  %v1493 = vpop.f32.mrf.mxu0
  %1494 = vmatprep.mubr.f32.mxu0 %v502
  %1495 = vmatmul.mubr.f32.gmra.mxu0 %v792
  %v1496 = vpop.f32.mrf.mxu0
  %v1497 = vadd.f32 %v1272, %v1496
  %v1498 = vpop.f32.mrf.mxu0
  %1499 = vmatprep.mubr.f32.mxu0 %v504
  %1500 = vmatmul.mubr.f32.gmra.mxu0 %v795
  %v1501 = vpop.f32.mrf.mxu0
  %v1502 = vadd.f32 %v1277, %v1501
  %v1503 = vpop.f32.mrf.mxu0
  %1504 = vmatprep.mubr.f32.mxu0 %v506
  %1505 = vmatmul.mubr.f32.gmra.mxu0 %v798
  %v1506 = vpop.f32.mrf.mxu0
  %v1507 = vadd.f32 %v1282, %v1506
  %v1508 = vpop.f32.mrf.mxu0
  %1509 = vmatprep.mubr.f32.mxu0 %v508
  %1510 = vmatmul.mubr.f32.gmra.mxu0 %v801
  %v1511 = vpop.f32.mrf.mxu0
  %v1512 = vadd.f32 %v1287, %v1511
  %v1513 = vpop.f32.mrf.mxu0
  %1514 = vdwg.mxu0
  %1515 = vmatprep.subr.mxu0 0.0
  %1516 = vmatpush1.msra.mxu0 %v993
  %1517 = vmatprep.subr.mxu0 0.0
  %1518 = vmatpush1.msra.mxu0 %v992
  %1519 = vmatprep.subr.mxu0 0.0
  %1520 = vmatpush1.msra.mxu0 %v991
  %1521 = vmatprep.subr.mxu0 0.0
  %1522 = vmatpush1.msra.mxu0 %v990
  %1523 = vmatprep.subr.mxu0 0.0
  %1524 = vmatpush1.msra.mxu0 %v989
  %1525 = vmatprep.subr.mxu0 0.0
  %1526 = vmatpush1.msra.mxu0 %v988
  %1527 = vmatprep.subr.mxu0 0.0
  %1528 = vmatpush1.msra.mxu0 %v987
  %1529 = vmatprep.subr.mxu0 0.0
  %1530 = vmatpush1.msra.mxu0 %v986
  %1531 = vmatprep.subr.mxu0 0.0
  %1532 = vmatpush1.msra.mxu0 %v985
  %1533 = vmatprep.subr.mxu0 0.0
  %1534 = vmatpush1.msra.mxu0 %v984
  %1535 = vmatprep.subr.mxu0 0.0
  %1536 = vmatpush1.msra.mxu0 %v983
  %1537 = vmatprep.subr.mxu0 0.0
  %1538 = vmatpush1.msra.mxu0 %v982
  %1539 = vmatprep.subr.mxu0 0.0
  %1540 = vmatpush1.msra.mxu0 %v981
  %1541 = vmatprep.subr.mxu0 0.0
  %1542 = vmatpush1.msra.mxu0 %v980
  %1543 = vmatprep.subr.mxu0 0.0
  %1544 = vmatpush1.msra.mxu0 %v979
  %1545 = vmatprep.subr.mxu0 0.0
  %1546 = vmatpush1.msra.mxu0 %v978
  %1547 = vmatprep.subr.mxu0 0.0
  %1548 = vmatpush2.msra.mxu0 %v1009
  %1549 = vmatprep.subr.mxu0 0.0
  %1550 = vmatpush2.msra.mxu0 %v1008
  %1551 = vmatprep.subr.mxu0 0.0
  %1552 = vmatpush2.msra.mxu0 %v1007
  %1553 = vmatprep.subr.mxu0 0.0
  %1554 = vmatpush2.msra.mxu0 %v1006
  %1555 = vmatprep.subr.mxu0 0.0
  %1556 = vmatpush2.msra.mxu0 %v1005
  %1557 = vmatprep.subr.mxu0 0.0
  %1558 = vmatpush2.msra.mxu0 %v1004
  %1559 = vmatprep.subr.mxu0 0.0
  %1560 = vmatpush2.msra.mxu0 %v1003
  %1561 = vmatprep.subr.mxu0 0.0
  %1562 = vmatpush2.msra.mxu0 %v1002
  %1563 = vmatprep.subr.mxu0 0.0
  %1564 = vmatpush2.msra.mxu0 %v1001
  %1565 = vmatprep.subr.mxu0 0.0
  %1566 = vmatpush2.msra.mxu0 %v1000
  %1567 = vmatprep.subr.mxu0 0.0
  %1568 = vmatpush2.msra.mxu0 %v999
  %1569 = vmatprep.subr.mxu0 0.0
  %1570 = vmatpush2.msra.mxu0 %v998
  %1571 = vmatprep.subr.mxu0 0.0
  %1572 = vmatpush2.msra.mxu0 %v997
  %1573 = vmatprep.subr.mxu0 0.0
  %1574 = vmatpush2.msra.mxu0 %v996
  %1575 = vmatprep.subr.mxu0 0.0
  %1576 = vmatpush2.msra.mxu0 %v995
  %1577 = vmatprep.subr.mxu0 0.0
  %1578 = vmatpush2.msra.mxu0 %v994
  %1579 = vmatprep.mubr.f32.mxu0 %v711
  %1580 = vmatmul.mubr.f32.gmra.mxu0 %v582
  %v1581 = vpop.f32.mrf.mxu0
  %v1582 = vadd.f32 %v1357, %v1581
  %v1583 = vpop.f32.mrf.mxu0
  %1584 = vmatprep.mubr.f32.mxu0 %v714
  %1585 = vmatmul.mubr.f32.gmra.mxu0 %v585
  %v1586 = vpop.f32.mrf.mxu0
  %v1587 = vadd.f32 %v1362, %v1586
  %v1588 = vpop.f32.mrf.mxu0
  %1589 = vmatprep.mubr.f32.mxu0 %v717
  %1590 = vmatmul.mubr.f32.gmra.mxu0 %v588
  %v1591 = vpop.f32.mrf.mxu0
  %v1592 = vadd.f32 %v1367, %v1591
  %v1593 = vpop.f32.mrf.mxu0
  %1594 = vmatprep.mubr.f32.mxu0 %v720
  %1595 = vmatmul.mubr.f32.gmra.mxu0 %v591
  %v1596 = vpop.f32.mrf.mxu0
  %v1597 = vadd.f32 %v1372, %v1596
  %v1598 = vpop.f32.mrf.mxu0
  %1599 = vmatprep.mubr.f32.mxu0 %v723
  %1600 = vmatmul.mubr.f32.gmra.mxu0 %v594
  %v1601 = vpop.f32.mrf.mxu0
  %v1602 = vadd.f32 %v1377, %v1601
  %v1603 = vpop.f32.mrf.mxu0
  %1604 = vmatprep.mubr.f32.mxu0 %v726
  %1605 = vmatmul.mubr.f32.gmra.mxu0 %v597
  %v1606 = vpop.f32.mrf.mxu0
  %v1607 = vadd.f32 %v1382, %v1606
  %v1608 = vpop.f32.mrf.mxu0
  %1609 = vmatprep.mubr.f32.mxu0 %v729
  %1610 = vmatmul.mubr.f32.gmra.mxu0 %v600
  %v1611 = vpop.f32.mrf.mxu0
  %v1612 = vadd.f32 %v1387, %v1611
  %v1613 = vpop.f32.mrf.mxu0
  %1614 = vmatprep.mubr.f32.mxu0 %v860
  %1615 = vmatmul.mubr.f32.gmra.mxu0 %v844
  %v1616 = vpop.f32.mrf.mxu0
  %v1617 = vadd.f32 %v1392, %v1616
  %v1618 = vpop.f32.mrf.mxu0
  %1619 = vmatprep.mubr.f32.mxu0 %v735
  %1620 = vmatmul.mubr.f32.gmra.mxu0 %v606
  %v1621 = vpop.f32.mrf.mxu0
  %v1622 = vadd.f32 %v1397, %v1621
  %v1623 = vpop.f32.mrf.mxu0
  %1624 = vmatprep.mubr.f32.mxu0 %v738
  %1625 = vmatmul.mubr.f32.gmra.mxu0 %v609
  %v1626 = vpop.f32.mrf.mxu0
  %v1627 = vadd.f32 %v1402, %v1626
  %v1628 = vpop.f32.mrf.mxu0
  %1629 = vmatprep.mubr.f32.mxu0 %v741
  %1630 = vmatmul.mubr.f32.gmra.mxu0 %v612
  %v1631 = vpop.f32.mrf.mxu0
  %v1632 = vadd.f32 %v1407, %v1631
  %v1633 = vpop.f32.mrf.mxu0
  %1634 = vmatprep.mubr.f32.mxu0 %v744
  %1635 = vmatmul.mubr.f32.gmra.mxu0 %v615
  %v1636 = vpop.f32.mrf.mxu0
  %v1637 = vadd.f32 %v1412, %v1636
  %v1638 = vpop.f32.mrf.mxu0
  %1639 = vmatprep.mubr.f32.mxu0 %v747
  %1640 = vmatmul.mubr.f32.gmra.mxu0 %v618
  %v1641 = vpop.f32.mrf.mxu0
  %v1642 = vadd.f32 %v1417, %v1641
  %v1643 = vpop.f32.mrf.mxu0
  %1644 = vmatprep.mubr.f32.mxu0 %v750
  %1645 = vmatmul.mubr.f32.gmra.mxu0 %v621
  %v1646 = vpop.f32.mrf.mxu0
  %v1647 = vadd.f32 %v1422, %v1646
  %v1648 = vpop.f32.mrf.mxu0
  %1649 = vmatprep.mubr.f32.mxu0 %v753
  %1650 = vmatmul.mubr.f32.gmra.mxu0 %v624
  %v1651 = vpop.f32.mrf.mxu0
  %v1652 = vadd.f32 %v1427, %v1651
  %v1653 = vpop.f32.mrf.mxu0
  %1654 = vmatprep.mubr.f32.mxu0 %v863
  %1655 = vmatmul.mubr.f32.gmra.mxu0 %v847
  %v1656 = vpop.f32.mrf.mxu0
  %v1657 = vadd.f32 %v1432, %v1656
  %v1658 = vpop.f32.mrf.mxu0
  %1659 = vmatprep.mubr.f32.mxu0 %v759
  %1660 = vmatmul.mubr.f32.gmra.mxu0 %v630
  %v1661 = vpop.f32.mrf.mxu0
  %v1662 = vadd.f32 %v1437, %v1661
  %v1663 = vpop.f32.mrf.mxu0
  %1664 = vmatprep.mubr.f32.mxu0 %v762
  %1665 = vmatmul.mubr.f32.gmra.mxu0 %v633
  %v1666 = vpop.f32.mrf.mxu0
  %v1667 = vadd.f32 %v1442, %v1666
  %v1668 = vpop.f32.mrf.mxu0
  %1669 = vmatprep.mubr.f32.mxu0 %v765
  %1670 = vmatmul.mubr.f32.gmra.mxu0 %v636
  %v1671 = vpop.f32.mrf.mxu0
  %v1672 = vadd.f32 %v1447, %v1671
  %v1673 = vpop.f32.mrf.mxu0
  %1674 = vmatprep.mubr.f32.mxu0 %v768
  %1675 = vmatmul.mubr.f32.gmra.mxu0 %v639
  %v1676 = vpop.f32.mrf.mxu0
  %v1677 = vadd.f32 %v1452, %v1676
  %v1678 = vpop.f32.mrf.mxu0
  %1679 = vmatprep.mubr.f32.mxu0 %v771
  %1680 = vmatmul.mubr.f32.gmra.mxu0 %v642
  %v1681 = vpop.f32.mrf.mxu0
  %v1682 = vadd.f32 %v1457, %v1681
  %v1683 = vpop.f32.mrf.mxu0
  %1684 = vmatprep.mubr.f32.mxu0 %v774
  %1685 = vmatmul.mubr.f32.gmra.mxu0 %v645
  %v1686 = vpop.f32.mrf.mxu0
  %v1687 = vadd.f32 %v1462, %v1686
  %v1688 = vpop.f32.mrf.mxu0
  %1689 = vmatprep.mubr.f32.mxu0 %v777
  %1690 = vmatmul.mubr.f32.gmra.mxu0 %v648
  %v1691 = vpop.f32.mrf.mxu0
  %v1692 = vadd.f32 %v1467, %v1691
  %v1693 = vpop.f32.mrf.mxu0
  %1694 = vmatprep.mubr.f32.mxu0 %v866
  %1695 = vmatmul.mubr.f32.gmra.mxu0 %v850
  %v1696 = vpop.f32.mrf.mxu0
  %v1697 = vadd.f32 %v1472, %v1696
  %v1698 = vpop.f32.mrf.mxu0
  %1699 = vmatprep.mubr.f32.mxu0 %v783
  %1700 = vmatmul.mubr.f32.gmra.mxu0 %v654
  %v1701 = vpop.f32.mrf.mxu0
  %v1702 = vadd.f32 %v1477, %v1701
  %v1703 = vpop.f32.mrf.mxu0
  %1704 = vmatprep.mubr.f32.mxu0 %v786
  %1705 = vmatmul.mubr.f32.gmra.mxu0 %v657
  %v1706 = vpop.f32.mrf.mxu0
  %v1707 = vadd.f32 %v1482, %v1706
  %v1708 = vpop.f32.mrf.mxu0
  %1709 = vmatprep.mubr.f32.mxu0 %v789
  %1710 = vmatmul.mubr.f32.gmra.mxu0 %v660
  %v1711 = vpop.f32.mrf.mxu0
  %v1712 = vadd.f32 %v1487, %v1711
  %v1713 = vpop.f32.mrf.mxu0
  %1714 = vmatprep.mubr.f32.mxu0 %v792
  %1715 = vmatmul.mubr.f32.gmra.mxu0 %v663
  %v1716 = vpop.f32.mrf.mxu0
  %v1717 = vadd.f32 %v1492, %v1716
  %v1718 = vpop.f32.mrf.mxu0
  %1719 = vmatprep.mubr.f32.mxu0 %v795
  %1720 = vmatmul.mubr.f32.gmra.mxu0 %v666
  %v1721 = vpop.f32.mrf.mxu0
  %v1722 = vadd.f32 %v1497, %v1721
  %v1723 = vpop.f32.mrf.mxu0
  %1724 = vmatprep.mubr.f32.mxu0 %v798
  %1725 = vmatmul.mubr.f32.gmra.mxu0 %v669
  %v1726 = vpop.f32.mrf.mxu0
  %v1727 = vadd.f32 %v1502, %v1726
  %v1728 = vpop.f32.mrf.mxu0
  %1729 = vmatprep.mubr.f32.mxu0 %v801
  %1730 = vmatmul.mubr.f32.gmra.mxu0 %v672
  %v1731 = vpop.f32.mrf.mxu0
  %v1732 = vadd.f32 %v1507, %v1731
  %v1733 = vpop.f32.mrf.mxu0
  %1734 = vmatprep.mubr.f32.mxu0 %v869
  %1735 = vmatmul.mubr.f32.gmra.mxu0 %v853
  %v1736 = vpop.f32.mrf.mxu0
  %v1737 = vadd.f32 %v1512, %v1736
  %v1738 = vpop.f32.mrf.mxu0
  %1739 = vdwg.mxu0
  %1740 = vmatprep.subr.mxu0 0.0
  %1741 = vmatpush1.msra.mxu0 %v1025
  %1742 = vmatprep.subr.mxu0 0.0
  %1743 = vmatpush1.msra.mxu0 %v1024
  %1744 = vmatprep.subr.mxu0 0.0
  %1745 = vmatpush1.msra.mxu0 %v1023
  %1746 = vmatprep.subr.mxu0 0.0
  %1747 = vmatpush1.msra.mxu0 %v1022
  %1748 = vmatprep.subr.mxu0 0.0
  %1749 = vmatpush1.msra.mxu0 %v1021
  %1750 = vmatprep.subr.mxu0 0.0
  %1751 = vmatpush1.msra.mxu0 %v1020
  %1752 = vmatprep.subr.mxu0 0.0
  %1753 = vmatpush1.msra.mxu0 %v1019
  %1754 = vmatprep.subr.mxu0 0.0
  %1755 = vmatpush1.msra.mxu0 %v1018
  %1756 = vmatprep.subr.mxu0 0.0
  %1757 = vmatpush1.msra.mxu0 %v1017
  %1758 = vmatprep.subr.mxu0 0.0
  %1759 = vmatpush1.msra.mxu0 %v1016
  %1760 = vmatprep.subr.mxu0 0.0
  %1761 = vmatpush1.msra.mxu0 %v1015
  %1762 = vmatprep.subr.mxu0 0.0
  %1763 = vmatpush1.msra.mxu0 %v1014
  %1764 = vmatprep.subr.mxu0 0.0
  %1765 = vmatpush1.msra.mxu0 %v1013
  %1766 = vmatprep.subr.mxu0 0.0
  %1767 = vmatpush1.msra.mxu0 %v1012
  %1768 = vmatprep.subr.mxu0 0.0
  %1769 = vmatpush1.msra.mxu0 %v1011
  %1770 = vmatprep.subr.mxu0 0.0
  %1771 = vmatpush1.msra.mxu0 %v1010
  %1772 = vmatprep.subr.mxu0 0.0
  %1773 = vmatpush2.msra.mxu0 %v1041
  %1774 = vmatprep.subr.mxu0 0.0
  %1775 = vmatpush2.msra.mxu0 %v1040
  %1776 = vmatprep.subr.mxu0 0.0
  %1777 = vmatpush2.msra.mxu0 %v1039
  %1778 = vmatprep.subr.mxu0 0.0
  %1779 = vmatpush2.msra.mxu0 %v1038
  %1780 = vmatprep.subr.mxu0 0.0
  %1781 = vmatpush2.msra.mxu0 %v1037
  %1782 = vmatprep.subr.mxu0 0.0
  %1783 = vmatpush2.msra.mxu0 %v1036
  %1784 = vmatprep.subr.mxu0 0.0
  %1785 = vmatpush2.msra.mxu0 %v1035
  %1786 = vmatprep.subr.mxu0 0.0
  %1787 = vmatpush2.msra.mxu0 %v1034
  %1788 = vmatprep.subr.mxu0 0.0
  %1789 = vmatpush2.msra.mxu0 %v1033
  %1790 = vmatprep.subr.mxu0 0.0
  %1791 = vmatpush2.msra.mxu0 %v1032
  %1792 = vmatprep.subr.mxu0 0.0
  %1793 = vmatpush2.msra.mxu0 %v1031
  %1794 = vmatprep.subr.mxu0 0.0
  %1795 = vmatpush2.msra.mxu0 %v1030
  %1796 = vmatprep.subr.mxu0 0.0
  %1797 = vmatpush2.msra.mxu0 %v1029
  %1798 = vmatprep.subr.mxu0 0.0
  %1799 = vmatpush2.msra.mxu0 %v1028
  %1800 = vmatprep.subr.mxu0 0.0
  %1801 = vmatpush2.msra.mxu0 %v1027
  %1802 = vmatprep.subr.mxu0 0.0
  %1803 = vmatpush2.msra.mxu0 %v1026
  %1804 = vmatprep.mubr.f32.mxu0 %v585
  %1805 = vmatmul.mubr.f32.gmra.mxu0 %v436
  %v1806 = vpop.f32.mrf.mxu0
  %v1807 = vadd.f32 %v1582, %v1806
  %v1808 = vpop.f32.mrf.mxu0
  %1809 = vmatprep.mubr.f32.mxu0 %v588
  %1810 = vmatmul.mubr.f32.gmra.mxu0 %v438
  %v1811 = vpop.f32.mrf.mxu0
  %v1812 = vadd.f32 %v1587, %v1811
  %v1813 = vpop.f32.mrf.mxu0
  %1814 = vmatprep.mubr.f32.mxu0 %v591
  %1815 = vmatmul.mubr.f32.gmra.mxu0 %v440
  %v1816 = vpop.f32.mrf.mxu0
  %v1817 = vadd.f32 %v1592, %v1816
  %v1818 = vpop.f32.mrf.mxu0
  %1819 = vmatprep.mubr.f32.mxu0 %v594
  %1820 = vmatmul.mubr.f32.gmra.mxu0 %v442
  %v1821 = vpop.f32.mrf.mxu0
  %v1822 = vadd.f32 %v1597, %v1821
  %v1823 = vpop.f32.mrf.mxu0
  %1824 = vmatprep.mubr.f32.mxu0 %v597
  %1825 = vmatmul.mubr.f32.gmra.mxu0 %v444
  %v1826 = vpop.f32.mrf.mxu0
  %v1827 = vadd.f32 %v1602, %v1826
  %v1828 = vpop.f32.mrf.mxu0
  %1829 = vmatprep.mubr.f32.mxu0 %v600
  %1830 = vmatmul.mubr.f32.gmra.mxu0 %v446
  %v1831 = vpop.f32.mrf.mxu0
  %v1832 = vadd.f32 %v1607, %v1831
  %v1833 = vpop.f32.mrf.mxu0
  %1834 = vmatprep.mubr.f32.mxu0 %v844
  %1835 = vmatmul.mubr.f32.gmra.mxu0 %v448
  %v1836 = vpop.f32.mrf.mxu0
  %v1837 = vadd.f32 %v1612, %v1836
  %v1838 = vpop.f32.mrf.mxu0
  %1839 = vmatprep.mubr.f32.mxu0 %v884
  %1840 = vmatmul.mubr.f32.gmra.mxu0 %v450
  %v1841 = vpop.f32.mrf.mxu0
  %v1842 = vadd.f32 %v1617, %v1841
  %v1843 = vpop.f32.mrf.mxu0
  %1844 = vmatprep.mubr.f32.mxu0 %v609
  %1845 = vmatmul.mubr.f32.gmra.mxu0 %v456
  %v1846 = vpop.f32.mrf.mxu0
  %v1847 = vadd.f32 %v1622, %v1846
  %v1848 = vpop.f32.mrf.mxu0
  %1849 = vmatprep.mubr.f32.mxu0 %v612
  %1850 = vmatmul.mubr.f32.gmra.mxu0 %v458
  %v1851 = vpop.f32.mrf.mxu0
  %v1852 = vadd.f32 %v1627, %v1851
  %v1853 = vpop.f32.mrf.mxu0
  %1854 = vmatprep.mubr.f32.mxu0 %v615
  %1855 = vmatmul.mubr.f32.gmra.mxu0 %v460
  %v1856 = vpop.f32.mrf.mxu0
  %v1857 = vadd.f32 %v1632, %v1856
  %v1858 = vpop.f32.mrf.mxu0
  %1859 = vmatprep.mubr.f32.mxu0 %v618
  %1860 = vmatmul.mubr.f32.gmra.mxu0 %v462
  %v1861 = vpop.f32.mrf.mxu0
  %v1862 = vadd.f32 %v1637, %v1861
  %v1863 = vpop.f32.mrf.mxu0
  %1864 = vmatprep.mubr.f32.mxu0 %v621
  %1865 = vmatmul.mubr.f32.gmra.mxu0 %v464
  %v1866 = vpop.f32.mrf.mxu0
  %v1867 = vadd.f32 %v1642, %v1866
  %v1868 = vpop.f32.mrf.mxu0
  %1869 = vmatprep.mubr.f32.mxu0 %v624
  %1870 = vmatmul.mubr.f32.gmra.mxu0 %v466
  %v1871 = vpop.f32.mrf.mxu0
  %v1872 = vadd.f32 %v1647, %v1871
  %v1873 = vpop.f32.mrf.mxu0
  %1874 = vmatprep.mubr.f32.mxu0 %v847
  %1875 = vmatmul.mubr.f32.gmra.mxu0 %v468
  %v1876 = vpop.f32.mrf.mxu0
  %v1877 = vadd.f32 %v1652, %v1876
  %v1878 = vpop.f32.mrf.mxu0
  %1879 = vmatprep.mubr.f32.mxu0 %v887
  %1880 = vmatmul.mubr.f32.gmra.mxu0 %v470
  %v1881 = vpop.f32.mrf.mxu0
  %v1882 = vadd.f32 %v1657, %v1881
  %v1883 = vpop.f32.mrf.mxu0
  %1884 = vmatprep.mubr.f32.mxu0 %v633
  %1885 = vmatmul.mubr.f32.gmra.mxu0 %v476
  %v1886 = vpop.f32.mrf.mxu0
  %v1887 = vadd.f32 %v1662, %v1886
  %v1888 = vpop.f32.mrf.mxu0
  %1889 = vmatprep.mubr.f32.mxu0 %v636
  %1890 = vmatmul.mubr.f32.gmra.mxu0 %v478
  %v1891 = vpop.f32.mrf.mxu0
  %v1892 = vadd.f32 %v1667, %v1891
  %v1893 = vpop.f32.mrf.mxu0
  %1894 = vmatprep.mubr.f32.mxu0 %v639
  %1895 = vmatmul.mubr.f32.gmra.mxu0 %v480
  %v1896 = vpop.f32.mrf.mxu0
  %v1897 = vadd.f32 %v1672, %v1896
  %v1898 = vpop.f32.mrf.mxu0
  %1899 = vmatprep.mubr.f32.mxu0 %v642
  %1900 = vmatmul.mubr.f32.gmra.mxu0 %v482
  %v1901 = vpop.f32.mrf.mxu0
  %v1902 = vadd.f32 %v1677, %v1901
  %v1903 = vpop.f32.mrf.mxu0
  %1904 = vmatprep.mubr.f32.mxu0 %v645
  %1905 = vmatmul.mubr.f32.gmra.mxu0 %v484
  %v1906 = vpop.f32.mrf.mxu0
  %v1907 = vadd.f32 %v1682, %v1906
  %v1908 = vpop.f32.mrf.mxu0
  %1909 = vmatprep.mubr.f32.mxu0 %v648
  %1910 = vmatmul.mubr.f32.gmra.mxu0 %v486
  %v1911 = vpop.f32.mrf.mxu0
  %v1912 = vadd.f32 %v1687, %v1911
  %v1913 = vpop.f32.mrf.mxu0
  %1914 = vmatprep.mubr.f32.mxu0 %v850
  %1915 = vmatmul.mubr.f32.gmra.mxu0 %v488
  %v1916 = vpop.f32.mrf.mxu0
  %v1917 = vadd.f32 %v1692, %v1916
  %v1918 = vpop.f32.mrf.mxu0
  %1919 = vmatprep.mubr.f32.mxu0 %v890
  %1920 = vmatmul.mubr.f32.gmra.mxu0 %v490
  %v1921 = vpop.f32.mrf.mxu0
  %v1922 = vadd.f32 %v1697, %v1921
  %v1923 = vpop.f32.mrf.mxu0
  %1924 = vmatprep.mubr.f32.mxu0 %v657
  %1925 = vmatmul.mubr.f32.gmra.mxu0 %v496
  %v1926 = vpop.f32.mrf.mxu0
  %v1927 = vadd.f32 %v1702, %v1926
  %v1928 = vpop.f32.mrf.mxu0
  %1929 = vmatprep.mubr.f32.mxu0 %v660
  %1930 = vmatmul.mubr.f32.gmra.mxu0 %v498
  %v1931 = vpop.f32.mrf.mxu0
  %v1932 = vadd.f32 %v1707, %v1931
  %v1933 = vpop.f32.mrf.mxu0
  %1934 = vmatprep.mubr.f32.mxu0 %v663
  %1935 = vmatmul.mubr.f32.gmra.mxu0 %v500
  %v1936 = vpop.f32.mrf.mxu0
  %v1937 = vadd.f32 %v1712, %v1936
  %v1938 = vpop.f32.mrf.mxu0
  %1939 = vmatprep.mubr.f32.mxu0 %v666
  %1940 = vmatmul.mubr.f32.gmra.mxu0 %v502
  %v1941 = vpop.f32.mrf.mxu0
  %v1942 = vadd.f32 %v1717, %v1941
  %v1943 = vpop.f32.mrf.mxu0
  %1944 = vmatprep.mubr.f32.mxu0 %v669
  %1945 = vmatmul.mubr.f32.gmra.mxu0 %v504
  %v1946 = vpop.f32.mrf.mxu0
  %v1947 = vadd.f32 %v1722, %v1946
  %v1948 = vpop.f32.mrf.mxu0
  %1949 = vmatprep.mubr.f32.mxu0 %v672
  %1950 = vmatmul.mubr.f32.gmra.mxu0 %v506
  %v1951 = vpop.f32.mrf.mxu0
  %v1952 = vadd.f32 %v1727, %v1951
  %v1953 = vpop.f32.mrf.mxu0
  %1954 = vmatprep.mubr.f32.mxu0 %v853
  %1955 = vmatmul.mubr.f32.gmra.mxu0 %v508
  %v1956 = vpop.f32.mrf.mxu0
  %v1957 = vadd.f32 %v1732, %v1956
  %v1958 = vpop.f32.mrf.mxu0
  %1959 = vmatprep.mubr.f32.mxu0 %v893
  %1960 = vmatmul.mubr.f32.gmra.mxu0 %v510
  %v1961 = vpop.f32.mrf.mxu0
  %v1962 = vadd.f32 %v1737, %v1961
  %v1963 = vpop.f32.mrf.mxu0
  %1964 = vdwg.mxu0
  %1965 = vmatprep.subr.mxu0 0.0
  %1966 = vmatpush1.msra.mxu0 %v1057
  %1967 = vmatprep.subr.mxu0 0.0
  %1968 = vmatpush1.msra.mxu0 %v1056
  %1969 = vmatprep.subr.mxu0 0.0
  %1970 = vmatpush1.msra.mxu0 %v1055
  %1971 = vmatprep.subr.mxu0 0.0
  %1972 = vmatpush1.msra.mxu0 %v1054
  %1973 = vmatprep.subr.mxu0 0.0
  %1974 = vmatpush1.msra.mxu0 %v1053
  %1975 = vmatprep.subr.mxu0 0.0
  %1976 = vmatpush1.msra.mxu0 %v1052
  %1977 = vmatprep.subr.mxu0 0.0
  %1978 = vmatpush1.msra.mxu0 %v1051
  %1979 = vmatprep.subr.mxu0 0.0
  %1980 = vmatpush1.msra.mxu0 %v1050
  %1981 = vmatprep.subr.mxu0 0.0
  %1982 = vmatpush1.msra.mxu0 %v1049
  %1983 = vmatprep.subr.mxu0 0.0
  %1984 = vmatpush1.msra.mxu0 %v1048
  %1985 = vmatprep.subr.mxu0 0.0
  %1986 = vmatpush1.msra.mxu0 %v1047
  %1987 = vmatprep.subr.mxu0 0.0
  %1988 = vmatpush1.msra.mxu0 %v1046
  %1989 = vmatprep.subr.mxu0 0.0
  %1990 = vmatpush1.msra.mxu0 %v1045
  %1991 = vmatprep.subr.mxu0 0.0
  %1992 = vmatpush1.msra.mxu0 %v1044
  %1993 = vmatprep.subr.mxu0 0.0
  %1994 = vmatpush1.msra.mxu0 %v1043
  %1995 = vmatprep.subr.mxu0 0.0
  %1996 = vmatpush1.msra.mxu0 %v1042
  %1997 = vmatprep.subr.mxu0 0.0
  %1998 = vmatpush2.msra.mxu0 0.0
  %1999 = vmatprep.subr.mxu0 0.0
  %2000 = vmatpush2.msra.mxu0 0.0
  %2001 = vmatprep.subr.mxu0 0.0
  %2002 = vmatpush2.msra.mxu0 0.0
  %2003 = vmatprep.subr.mxu0 0.0
  %2004 = vmatpush2.msra.mxu0 0.0
  %2005 = vmatprep.subr.mxu0 0.0
  %2006 = vmatpush2.msra.mxu0 0.0
  %2007 = vmatprep.subr.mxu0 0.0
  %2008 = vmatpush2.msra.mxu0 0.0
  %2009 = vmatprep.subr.mxu0 0.0
  %2010 = vmatpush2.msra.mxu0 0.0
  %2011 = vmatprep.subr.mxu0 0.0
  %2012 = vmatpush2.msra.mxu0 0.0
  %2013 = vmatprep.subr.mxu0 0.0
  %2014 = vmatpush2.msra.mxu0 0.0
  %2015 = vmatprep.subr.mxu0 0.0
  %2016 = vmatpush2.msra.mxu0 0.0
  %2017 = vmatprep.subr.mxu0 0.0
  %2018 = vmatpush2.msra.mxu0 0.0
  %2019 = vmatprep.subr.mxu0 0.0
  %2020 = vmatpush2.msra.mxu0 0.0
  %2021 = vmatprep.subr.mxu0 0.0
  %2022 = vmatpush2.msra.mxu0 0.0
  %2023 = vmatprep.subr.mxu0 0.0
  %2024 = vmatpush2.msra.mxu0 0.0
  %2025 = vmatprep.subr.mxu0 0.0
  %2026 = vmatpush2.msra.mxu0 0.0
  %2027 = vmatprep.subr.mxu0 0.0
  %2028 = vmatpush2.msra.mxu0 0.0
  %2029 = vmatprep.mubr.f32.mxu0 0.0
  %2030 = vmatmul.mubr.f32.gmra.mxu0 %v714
  %v2031 = vpop.f32.mrf.mxu0
  %v2032 = vadd.f32 %v1807, %v2031
  %v2033 = vpop.f32.mrf.mxu0
  %2034 = vmatprep.mubr.f32.mxu0 0.0
  %2035 = vmatmul.mubr.f32.gmra.mxu0 %v717
  %v2036 = vpop.f32.mrf.mxu0
  %v2037 = vadd.f32 %v1812, %v2036
  %v2038 = vpop.f32.mrf.mxu0
  %2039 = vmatprep.mubr.f32.mxu0 0.0
  %2040 = vmatmul.mubr.f32.gmra.mxu0 %v720
  %v2041 = vpop.f32.mrf.mxu0
  %v2042 = vadd.f32 %v1817, %v2041
  %v2043 = vpop.f32.mrf.mxu0
  %2044 = vmatprep.mubr.f32.mxu0 0.0
  %2045 = vmatmul.mubr.f32.gmra.mxu0 %v723
  %v2046 = vpop.f32.mrf.mxu0
  %v2047 = vadd.f32 %v1822, %v2046
  %v2048 = vpop.f32.mrf.mxu0
  %2049 = vmatprep.mubr.f32.mxu0 0.0
  %2050 = vmatmul.mubr.f32.gmra.mxu0 %v726
  %v2051 = vpop.f32.mrf.mxu0
  %v2052 = vadd.f32 %v1827, %v2051
  %v2053 = vpop.f32.mrf.mxu0
  %2054 = vmatprep.mubr.f32.mxu0 0.0
  %2055 = vmatmul.mubr.f32.gmra.mxu0 %v729
  %v2056 = vpop.f32.mrf.mxu0
  %v2057 = vadd.f32 %v1832, %v2056
  %v2058 = vpop.f32.mrf.mxu0
  %2059 = vmatprep.mubr.f32.mxu0 0.0
  %2060 = vmatmul.mubr.f32.gmra.mxu0 %v860
  %v2061 = vpop.f32.mrf.mxu0
  %v2062 = vadd.f32 %v1837, %v2061
  %v2063 = vpop.f32.mrf.mxu0
  %2064 = vmatprep.mubr.f32.mxu0 0.0
  %2065 = vmatmul.mubr.f32.gmra.mxu0 %v900
  %v2066 = vpop.f32.mrf.mxu0
  %v2067 = vadd.f32 %v1842, %v2066
  %v2068 = vpop.f32.mrf.mxu0
  %2069 = vmatprep.mubr.f32.mxu0 0.0
  %2070 = vmatmul.mubr.f32.gmra.mxu0 %v738
  %v2071 = vpop.f32.mrf.mxu0
  %v2072 = vadd.f32 %v1847, %v2071
  %v2073 = vpop.f32.mrf.mxu0
  %2074 = vmatprep.mubr.f32.mxu0 0.0
  %2075 = vmatmul.mubr.f32.gmra.mxu0 %v741
  %v2076 = vpop.f32.mrf.mxu0
  %v2077 = vadd.f32 %v1852, %v2076
  %v2078 = vpop.f32.mrf.mxu0
  %2079 = vmatprep.mubr.f32.mxu0 0.0
  %2080 = vmatmul.mubr.f32.gmra.mxu0 %v744
  %v2081 = vpop.f32.mrf.mxu0
  %v2082 = vadd.f32 %v1857, %v2081
  %v2083 = vpop.f32.mrf.mxu0
  %2084 = vmatprep.mubr.f32.mxu0 0.0
  %2085 = vmatmul.mubr.f32.gmra.mxu0 %v747
  %v2086 = vpop.f32.mrf.mxu0
  %v2087 = vadd.f32 %v1862, %v2086
  %v2088 = vpop.f32.mrf.mxu0
  %2089 = vmatprep.mubr.f32.mxu0 0.0
  %2090 = vmatmul.mubr.f32.gmra.mxu0 %v750
  %v2091 = vpop.f32.mrf.mxu0
  %v2092 = vadd.f32 %v1867, %v2091
  %v2093 = vpop.f32.mrf.mxu0
  %2094 = vmatprep.mubr.f32.mxu0 0.0
  %2095 = vmatmul.mubr.f32.gmra.mxu0 %v753
  %v2096 = vpop.f32.mrf.mxu0
  %v2097 = vadd.f32 %v1872, %v2096
  %v2098 = vpop.f32.mrf.mxu0
  %2099 = vmatprep.mubr.f32.mxu0 0.0
  %2100 = vmatmul.mubr.f32.gmra.mxu0 %v863
  %v2101 = vpop.f32.mrf.mxu0
  %v2102 = vadd.f32 %v1877, %v2101
  %v2103 = vpop.f32.mrf.mxu0
  %2104 = vmatprep.mubr.f32.mxu0 0.0
  %2105 = vmatmul.mubr.f32.gmra.mxu0 %v903
  %v2106 = vpop.f32.mrf.mxu0
  %v2107 = vadd.f32 %v1882, %v2106
  %v2108 = vpop.f32.mrf.mxu0
  %2109 = vmatprep.mubr.f32.mxu0 0.0
  %2110 = vmatmul.mubr.f32.gmra.mxu0 %v762
  %v2111 = vpop.f32.mrf.mxu0
  %v2112 = vadd.f32 %v1887, %v2111
  %v2113 = vpop.f32.mrf.mxu0
  %2114 = vmatprep.mubr.f32.mxu0 0.0
  %2115 = vmatmul.mubr.f32.gmra.mxu0 %v765
  %v2116 = vpop.f32.mrf.mxu0
  %v2117 = vadd.f32 %v1892, %v2116
  %v2118 = vpop.f32.mrf.mxu0
  %2119 = vmatprep.mubr.f32.mxu0 0.0
  %2120 = vmatmul.mubr.f32.gmra.mxu0 %v768
  %v2121 = vpop.f32.mrf.mxu0
  %v2122 = vadd.f32 %v1897, %v2121
  %v2123 = vpop.f32.mrf.mxu0
  %2124 = vmatprep.mubr.f32.mxu0 0.0
  %2125 = vmatmul.mubr.f32.gmra.mxu0 %v771
  %v2126 = vpop.f32.mrf.mxu0
  %v2127 = vadd.f32 %v1902, %v2126
  %v2128 = vpop.f32.mrf.mxu0
  %2129 = vmatprep.mubr.f32.mxu0 0.0
  %2130 = vmatmul.mubr.f32.gmra.mxu0 %v774
  %v2131 = vpop.f32.mrf.mxu0
  %v2132 = vadd.f32 %v1907, %v2131
  %v2133 = vpop.f32.mrf.mxu0
  %2134 = vmatprep.mubr.f32.mxu0 0.0
  %2135 = vmatmul.mubr.f32.gmra.mxu0 %v777
  %v2136 = vpop.f32.mrf.mxu0
  %v2137 = vadd.f32 %v1912, %v2136
  %v2138 = vpop.f32.mrf.mxu0
  %2139 = vmatprep.mubr.f32.mxu0 0.0
  %2140 = vmatmul.mubr.f32.gmra.mxu0 %v866
  %v2141 = vpop.f32.mrf.mxu0
  %v2142 = vadd.f32 %v1917, %v2141
  %v2143 = vpop.f32.mrf.mxu0
  %2144 = vmatprep.mubr.f32.mxu0 0.0
  %2145 = vmatmul.mubr.f32.gmra.mxu0 %v906
  %v2146 = vpop.f32.mrf.mxu0
  %v2147 = vadd.f32 %v1922, %v2146
  %v2148 = vpop.f32.mrf.mxu0
  %2149 = vmatprep.mubr.f32.mxu0 0.0
  %2150 = vmatmul.mubr.f32.gmra.mxu0 %v786
  %v2151 = vpop.f32.mrf.mxu0
  %v2152 = vadd.f32 %v1927, %v2151
  %v2153 = vpop.f32.mrf.mxu0
  %2154 = vmatprep.mubr.f32.mxu0 0.0
  %2155 = vmatmul.mubr.f32.gmra.mxu0 %v789
  %v2156 = vpop.f32.mrf.mxu0
  %v2157 = vadd.f32 %v1932, %v2156
  %v2158 = vpop.f32.mrf.mxu0
  %2159 = vmatprep.mubr.f32.mxu0 0.0
  %2160 = vmatmul.mubr.f32.gmra.mxu0 %v792
  %v2161 = vpop.f32.mrf.mxu0
  %v2162 = vadd.f32 %v1937, %v2161
  %v2163 = vpop.f32.mrf.mxu0
  %2164 = vmatprep.mubr.f32.mxu0 0.0
  %2165 = vmatmul.mubr.f32.gmra.mxu0 %v795
  %v2166 = vpop.f32.mrf.mxu0
  %v2167 = vadd.f32 %v1942, %v2166
  %v2168 = vpop.f32.mrf.mxu0
  %2169 = vmatprep.mubr.f32.mxu0 0.0
  %2170 = vmatmul.mubr.f32.gmra.mxu0 %v798
  %v2171 = vpop.f32.mrf.mxu0
  %v2172 = vadd.f32 %v1947, %v2171
  %v2173 = vpop.f32.mrf.mxu0
  %2174 = vmatprep.mubr.f32.mxu0 0.0
  %2175 = vmatmul.mubr.f32.gmra.mxu0 %v801
  %v2176 = vpop.f32.mrf.mxu0
  %v2177 = vadd.f32 %v1952, %v2176
  %v2178 = vpop.f32.mrf.mxu0
  %2179 = vmatprep.mubr.f32.mxu0 0.0
  %2180 = vmatmul.mubr.f32.gmra.mxu0 %v869
  %v2181 = vpop.f32.mrf.mxu0
  %v2182 = vadd.f32 %v1957, %v2181
  %v2183 = vpop.f32.mrf.mxu0
  %2184 = vmatprep.mubr.f32.mxu0 0.0
  %2185 = vmatmul.mubr.f32.gmra.mxu0 %v909
  %v2186 = vpop.f32.mrf.mxu0
  %v2187 = vadd.f32 %v1962, %v2186
  %v2188 = vpop.f32.mrf.mxu0
  %2189 = vdwg.mxu0
  %v2190 = vadd.f32 %v158, %v2032
  %v2191 = vadd.f32 %v159, %v2037
  %v2192 = vadd.f32 %v160, %v2042
  %v2193 = vadd.f32 %v161, %v2047
  %v2194 = vadd.f32 %v162, %v2052
  %v2195 = vadd.f32 %v163, %v2057
  %v2196 = vadd.f32 %v164, %v2062
  %v2197 = vadd.f32 %v165, %v2067
  %v2198 = vadd.f32 %v166, %v2072
  %v2199 = vadd.f32 %v167, %v2077
  %v2200 = vadd.f32 %v168, %v2082
  %v2201 = vadd.f32 %v169, %v2087
  %v2202 = vadd.f32 %v170, %v2092
  %v2203 = vadd.f32 %v171, %v2097
  %v2204 = vadd.f32 %v172, %v2102
  %v2205 = vadd.f32 %v173, %v2107
  %v2206 = vadd.f32 %v174, %v2112
  %v2207 = vadd.f32 %v175, %v2117
  %v2208 = vadd.f32 %v176, %v2122
  %v2209 = vadd.f32 %v177, %v2127
  %v2210 = vadd.f32 %v178, %v2132
  %v2211 = vadd.f32 %v179, %v2137
  %v2212 = vadd.f32 %v180, %v2142
  %v2213 = vadd.f32 %v181, %v2147
  %v2214 = vadd.f32 %v182, %v2152
  %v2215 = vadd.f32 %v183, %v2157
  %v2216 = vadd.f32 %v184, %v2162
  %v2217 = vadd.f32 %v185, %v2167
  %v2218 = vadd.f32 %v186, %v2172
  %v2219 = vadd.f32 %v187, %v2177
  %v2220 = vadd.f32 %v188, %v2182
  %v2221 = vadd.f32 %v189, %v2187
  %2222 = vst [vmem:[%s3] sm:$0xff] %v2190
  %2223 = vst [vmem:[%s3 + $0x8] sm:$0xff] %v2191
  %2224 = vst [vmem:[%s3 + $0x10] sm:$0xff] %v2192
  %2225 = vst [vmem:[%s3 + $0x18] sm:$0xff] %v2193
  %2226 = vst [vmem:[%s3 + $0x20] sm:$0xff] %v2194
  %2227 = vst [vmem:[%s3 + $0x28] sm:$0xff] %v2195
  %2228 = vst [vmem:[%s3 + $0x30] sm:$0xff] %v2196
  %2229 = vst [vmem:[%s3 + $0x38] sm:$0xff] %v2197
  %2230 = vst [vmem:[%s3 + $0x40] sm:$0xff] %v2198
  %2231 = vst [vmem:[%s3 + $0x48] sm:$0xff] %v2199
  %2232 = vst [vmem:[%s3 + $0x50] sm:$0xff] %v2200
  %2233 = vst [vmem:[%s3 + $0x58] sm:$0xff] %v2201
  %2234 = vst [vmem:[%s3 + $0x60] sm:$0xff] %v2202
  %2235 = vst [vmem:[%s3 + $0x68] sm:$0xff] %v2203
  %2236 = vst [vmem:[%s3 + $0x70] sm:$0xff] %v2204
  %2237 = vst [vmem:[%s3 + $0x78] sm:$0xff] %v2205
  %2238 = vst [vmem:[%s3 + $0x80] sm:$0xff] %v2206
  %2239 = vst [vmem:[%s3 + $0x88] sm:$0xff] %v2207
  %2240 = vst [vmem:[%s3 + $0x90] sm:$0xff] %v2208
  %2241 = vst [vmem:[%s3 + $0x98] sm:$0xff] %v2209
  %2242 = vst [vmem:[%s3 + $0xa0] sm:$0xff] %v2210
  %2243 = vst [vmem:[%s3 + $0xa8] sm:$0xff] %v2211
  %2244 = vst [vmem:[%s3 + $0xb0] sm:$0xff] %v2212
  %2245 = vst [vmem:[%s3 + $0xb8] sm:$0xff] %v2213
  %2246 = vst [vmem:[%s3 + $0xc0] sm:$0xff] %v2214
  %2247 = vst [vmem:[%s3 + $0xc8] sm:$0xff] %v2215
  %2248 = vst [vmem:[%s3 + $0xd0] sm:$0xff] %v2216
  %2249 = vst [vmem:[%s3 + $0xd8] sm:$0xff] %v2217
  %2250 = vst [vmem:[%s3 + $0xe0] sm:$0xff] %v2218
  %2251 = vst [vmem:[%s3 + $0xe8] sm:$0xff] %v2219
  %2252 = vst [vmem:[%s3 + $0xf0] sm:$0xff] %v2220
  %2253 = vst [vmem:[%s3 + $0xf8] sm:$0xff] %v2221
  %v2254 = vld [vmem:[%s3] sm:$0xff]
  %v2255 = vld [vmem:[%s3 + $0x8] sm:$0xff]
  %v2256 = vld [vmem:[%s3 + $0x10] sm:$0xff]
  %v2257 = vld [vmem:[%s3 + $0x18] sm:$0xff]
  %v2258 = vld [vmem:[%s3 + $0x20] sm:$0xff]
  %v2259 = vld [vmem:[%s3 + $0x28] sm:$0xff]
  %v2260 = vld [vmem:[%s3 + $0x30] sm:$0xff]
  %v2261 = vld [vmem:[%s3 + $0x38] sm:$0xff]
  %v2262 = vld [vmem:[%s3 + $0x40] sm:$0xff]
  %v2263 = vld [vmem:[%s3 + $0x48] sm:$0xff]
  %v2264 = vld [vmem:[%s3 + $0x50] sm:$0xff]
  %v2265 = vld [vmem:[%s3 + $0x58] sm:$0xff]
  %v2266 = vld [vmem:[%s3 + $0x60] sm:$0xff]
  %v2267 = vld [vmem:[%s3 + $0x68] sm:$0xff]
  %v2268 = vld [vmem:[%s3 + $0x70] sm:$0xff]
  %v2269 = vld [vmem:[%s3 + $0x78] sm:$0xff]
  %v2270 = vld [vmem:[%s3 + $0x80] sm:$0xff]
  %v2271 = vld [vmem:[%s3 + $0x88] sm:$0xff]
  %v2272 = vld [vmem:[%s3 + $0x90] sm:$0xff]
  %v2273 = vld [vmem:[%s3 + $0x98] sm:$0xff]
  %v2274 = vld [vmem:[%s3 + $0xa0] sm:$0xff]
  %v2275 = vld [vmem:[%s3 + $0xa8] sm:$0xff]
  %v2276 = vld [vmem:[%s3 + $0xb0] sm:$0xff]
  %v2277 = vld [vmem:[%s3 + $0xb8] sm:$0xff]
  %v2278 = vld [vmem:[%s3 + $0xc0] sm:$0xff]
  %v2279 = vld [vmem:[%s3 + $0xc8] sm:$0xff]
  %v2280 = vld [vmem:[%s3 + $0xd0] sm:$0xff]
  %v2281 = vld [vmem:[%s3 + $0xd8] sm:$0xff]
  %v2282 = vld [vmem:[%s3 + $0xe0] sm:$0xff]
  %v2283 = vld [vmem:[%s3 + $0xe8] sm:$0xff]
  %v2284 = vld [vmem:[%s3 + $0xf0] sm:$0xff]
  %v2285 = vld [vmem:[%s3 + $0xf8] sm:$0xff]
  %v2286 = vadd.f32 %v2254, %v2255
  %v2287 = vadd.f32 %v2286, %v2256
  %v2288 = vadd.f32 %v2287, %v2257
  %v2289 = vadd.f32 %v2288, %v2258
  %v2290 = vadd.f32 %v2289, %v2259
  %v2291 = vadd.f32 %v2290, %v2260
  %v2292 = vadd.f32 %v2291, %v2261
  %v2293 = vadd.f32 %v2292, %v2262
  %v2294 = vadd.f32 %v2293, %v2263
  %v2295 = vadd.f32 %v2294, %v2264
  %v2296 = vadd.f32 %v2295, %v2265
  %v2297 = vadd.f32 %v2296, %v2266
  %v2298 = vadd.f32 %v2297, %v2267
  %v2299 = vadd.f32 %v2298, %v2268
  %v2300 = vadd.f32 %v2299, %v2269
  %v2301 = vadd.f32 %v2300, %v2270
  %v2302 = vadd.f32 %v2301, %v2271
  %v2303 = vadd.f32 %v2302, %v2272
  %v2304 = vadd.f32 %v2303, %v2273
  %v2305 = vadd.f32 %v2304, %v2274
  %v2306 = vadd.f32 %v2305, %v2275
  %v2307 = vadd.f32 %v2306, %v2276
  %v2308 = vadd.f32 %v2307, %v2277
  %v2309 = vadd.f32 %v2308, %v2278
  %v2310 = vadd.f32 %v2309, %v2279
  %v2311 = vadd.f32 %v2310, %v2280
  %v2312 = vadd.f32 %v2311, %v2281
  %v2313 = vadd.f32 %v2312, %v2282
  %v2314 = vadd.f32 %v2313, %v2283
  %v2315 = vadd.f32 %v2314, %v2284
  %v2316 = vadd.f32 %v2315, %v2285
  %v2317 = vrot.slane %v2316, 4
  %v2318 = vadd.f32 %v2316, %v2317
  %v2319 = vrot.slane %v2318, 2
  %v2320 = vadd.f32 %v2318, %v2319
  %v2321 = vrot.slane %v2320, 1
  %v2322 = vadd.f32 %v2320, %v2321
  %v2323 = vmul.f32 %v2254, %v2254
  %v2324 = vmul.f32 %v2255, %v2255
  %v2325 = vmul.f32 %v2256, %v2256
  %v2326 = vmul.f32 %v2257, %v2257
  %v2327 = vmul.f32 %v2258, %v2258
  %v2328 = vmul.f32 %v2259, %v2259
  %v2329 = vmul.f32 %v2260, %v2260
  %v2330 = vmul.f32 %v2261, %v2261
  %v2331 = vmul.f32 %v2262, %v2262
  %v2332 = vmul.f32 %v2263, %v2263
  %v2333 = vmul.f32 %v2264, %v2264
  %v2334 = vmul.f32 %v2265, %v2265
  %v2335 = vmul.f32 %v2266, %v2266
  %v2336 = vmul.f32 %v2267, %v2267
  %v2337 = vmul.f32 %v2268, %v2268
  %v2338 = vmul.f32 %v2269, %v2269
  %v2339 = vmul.f32 %v2270, %v2270
  %v2340 = vmul.f32 %v2271, %v2271
  %v2341 = vmul.f32 %v2272, %v2272
  %v2342 = vmul.f32 %v2273, %v2273
  %v2343 = vmul.f32 %v2274, %v2274
  %v2344 = vmul.f32 %v2275, %v2275
  %v2345 = vmul.f32 %v2276, %v2276
  %v2346 = vmul.f32 %v2277, %v2277
  %v2347 = vmul.f32 %v2278, %v2278
  %v2348 = vmul.f32 %v2279, %v2279
  %v2349 = vmul.f32 %v2280, %v2280
  %v2350 = vmul.f32 %v2281, %v2281
  %v2351 = vmul.f32 %v2282, %v2282
  %v2352 = vmul.f32 %v2283, %v2283
  %v2353 = vmul.f32 %v2284, %v2284
  %v2354 = vmul.f32 %v2285, %v2285
  %v2355 = vadd.f32 %v2323, %v2324
  %v2356 = vadd.f32 %v2355, %v2325
  %v2357 = vadd.f32 %v2356, %v2326
  %v2358 = vadd.f32 %v2357, %v2327
  %v2359 = vadd.f32 %v2358, %v2328
  %v2360 = vadd.f32 %v2359, %v2329
  %v2361 = vadd.f32 %v2360, %v2330
  %v2362 = vadd.f32 %v2361, %v2331
  %v2363 = vadd.f32 %v2362, %v2332
  %v2364 = vadd.f32 %v2363, %v2333
  %v2365 = vadd.f32 %v2364, %v2334
  %v2366 = vadd.f32 %v2365, %v2335
  %v2367 = vadd.f32 %v2366, %v2336
  %v2368 = vadd.f32 %v2367, %v2337
  %v2369 = vadd.f32 %v2368, %v2338
  %v2370 = vadd.f32 %v2369, %v2339
  %v2371 = vadd.f32 %v2370, %v2340
  %v2372 = vadd.f32 %v2371, %v2341
  %v2373 = vadd.f32 %v2372, %v2342
  %v2374 = vadd.f32 %v2373, %v2343
  %v2375 = vadd.f32 %v2374, %v2344
  %v2376 = vadd.f32 %v2375, %v2345
  %v2377 = vadd.f32 %v2376, %v2346
  %v2378 = vadd.f32 %v2377, %v2347
  %v2379 = vadd.f32 %v2378, %v2348
  %v2380 = vadd.f32 %v2379, %v2349
  %v2381 = vadd.f32 %v2380, %v2350
  %v2382 = vadd.f32 %v2381, %v2351
  %v2383 = vadd.f32 %v2382, %v2352
  %v2384 = vadd.f32 %v2383, %v2353
  %v2385 = vadd.f32 %v2384, %v2354
  %v2386 = vrot.slane %v2385, 4
  %v2387 = vadd.f32 %v2385, %v2386
  %v2388 = vrot.slane %v2387, 2
  %v2389 = vadd.f32 %v2387, %v2388
  %v2390 = vrot.slane %v2389, 1
  %v2391 = vadd.f32 %v2389, %v2390
  %v2392 = vmul.f32 %v2322, 0.00390625
  %v2393 = vmul.f32 %v2391, 0.00390625
  %v2394 = vmul.f32 %v2392, %v2392
  %v2395 = vsub.f32 %v2393, %v2394
  %v2396 = vmax.f32 %v2395, 0.0
  %v2397 = vsub.f32 %v2254, %v2392
  %v2398 = vsub.f32 %v2255, %v2392
  %v2399 = vsub.f32 %v2256, %v2392
  %v2400 = vsub.f32 %v2257, %v2392
  %v2401 = vsub.f32 %v2258, %v2392
  %v2402 = vsub.f32 %v2259, %v2392
  %v2403 = vsub.f32 %v2260, %v2392
  %v2404 = vsub.f32 %v2261, %v2392
  %v2405 = vsub.f32 %v2262, %v2392
  %v2406 = vsub.f32 %v2263, %v2392
  %v2407 = vsub.f32 %v2264, %v2392
  %v2408 = vsub.f32 %v2265, %v2392
  %v2409 = vsub.f32 %v2266, %v2392
  %v2410 = vsub.f32 %v2267, %v2392
  %v2411 = vsub.f32 %v2268, %v2392
  %v2412 = vsub.f32 %v2269, %v2392
  %v2413 = vsub.f32 %v2270, %v2392
  %v2414 = vsub.f32 %v2271, %v2392
  %v2415 = vsub.f32 %v2272, %v2392
  %v2416 = vsub.f32 %v2273, %v2392
  %v2417 = vsub.f32 %v2274, %v2392
  %v2418 = vsub.f32 %v2275, %v2392
  %v2419 = vsub.f32 %v2276, %v2392
  %v2420 = vsub.f32 %v2277, %v2392
  %v2421 = vsub.f32 %v2278, %v2392
  %v2422 = vsub.f32 %v2279, %v2392
  %v2423 = vsub.f32 %v2280, %v2392
  %v2424 = vsub.f32 %v2281, %v2392
  %v2425 = vsub.f32 %v2282, %v2392
  %v2426 = vsub.f32 %v2283, %v2392
  %v2427 = vsub.f32 %v2284, %v2392
  %v2428 = vsub.f32 %v2285, %v2392
  %v2429 = vadd.f32 %v2396, 1e-05
  %v2430 = vrsqrt.pop %v2429
  %v2431 = vmul.f32 %v2397, %v2430
  %v2432 = vmul.f32 %v2398, %v2430
  %v2433 = vmul.f32 %v2399, %v2430
  %v2434 = vmul.f32 %v2400, %v2430
  %v2435 = vmul.f32 %v2401, %v2430
  %v2436 = vmul.f32 %v2402, %v2430
  %v2437 = vmul.f32 %v2403, %v2430
  %v2438 = vmul.f32 %v2404, %v2430
  %v2439 = vmul.f32 %v2405, %v2430
  %v2440 = vmul.f32 %v2406, %v2430
  %v2441 = vmul.f32 %v2407, %v2430
  %v2442 = vmul.f32 %v2408, %v2430
  %v2443 = vmul.f32 %v2409, %v2430
  %v2444 = vmul.f32 %v2410, %v2430
  %v2445 = vmul.f32 %v2411, %v2430
  %v2446 = vmul.f32 %v2412, %v2430
  %v2447 = vmul.f32 %v2413, %v2430
  %v2448 = vmul.f32 %v2414, %v2430
  %v2449 = vmul.f32 %v2415, %v2430
  %v2450 = vmul.f32 %v2416, %v2430
  %v2451 = vmul.f32 %v2417, %v2430
  %v2452 = vmul.f32 %v2418, %v2430
  %v2453 = vmul.f32 %v2419, %v2430
  %v2454 = vmul.f32 %v2420, %v2430
  %v2455 = vmul.f32 %v2421, %v2430
  %v2456 = vmul.f32 %v2422, %v2430
  %v2457 = vmul.f32 %v2423, %v2430
  %v2458 = vmul.f32 %v2424, %v2430
  %v2459 = vmul.f32 %v2425, %v2430
  %v2460 = vmul.f32 %v2426, %v2430
  %v2461 = vmul.f32 %v2427, %v2430
  %v2462 = vmul.f32 %v2428, %v2430
  %v2463 = vmax.f32 %v2431, 0.0
  %v2464 = vmax.f32 %v2432, 0.0
  %v2465 = vmax.f32 %v2433, 0.0
  %v2466 = vmax.f32 %v2434, 0.0
  %v2467 = vmax.f32 %v2435, 0.0
  %v2468 = vmax.f32 %v2436, 0.0
  %v2469 = vmax.f32 %v2437, 0.0
  %v2470 = vmax.f32 %v2438, 0.0
  %v2471 = vmax.f32 %v2439, 0.0
  %v2472 = vmax.f32 %v2440, 0.0
  %v2473 = vmax.f32 %v2441, 0.0
  %v2474 = vmax.f32 %v2442, 0.0
  %v2475 = vmax.f32 %v2443, 0.0
  %v2476 = vmax.f32 %v2444, 0.0
  %v2477 = vmax.f32 %v2445, 0.0
  %v2478 = vmax.f32 %v2446, 0.0
  %v2479 = vmax.f32 %v2447, 0.0
  %v2480 = vmax.f32 %v2448, 0.0
  %v2481 = vmax.f32 %v2449, 0.0
  %v2482 = vmax.f32 %v2450, 0.0
  %v2483 = vmax.f32 %v2451, 0.0
  %v2484 = vmax.f32 %v2452, 0.0
  %v2485 = vmax.f32 %v2453, 0.0
  %v2486 = vmax.f32 %v2454, 0.0
  %v2487 = vmax.f32 %v2455, 0.0
  %v2488 = vmax.f32 %v2456, 0.0
  %v2489 = vmax.f32 %v2457, 0.0
  %v2490 = vmax.f32 %v2458, 0.0
  %v2491 = vmax.f32 %v2459, 0.0
  %v2492 = vmax.f32 %v2460, 0.0
  %v2493 = vmax.f32 %v2461, 0.0
  %v2494 = vmax.f32 %v2462, 0.0
  %2495 = vst [vmem:[%s399 + $0x1] sm:$0xff] %v2463
  %2496 = vst [vmem:[%s399 + $0x11] sm:$0xff] %v2464
  %2497 = vst [vmem:[%s399 + $0x21] sm:$0xff] %v2465
  %2498 = vst [vmem:[%s399 + $0x31] sm:$0xff] %v2466
  %2499 = vst [vmem:[%s399 + $0x41] sm:$0xff] %v2467
  %2500 = vst [vmem:[%s399 + $0x51] sm:$0xff] %v2468
  %2501 = vst [vmem:[%s399 + $0x61] sm:$0xff] %v2469
  %2502 = vst [vmem:[%s399 + $0x71] sm:$0xff] %v2470
  %2503 = vst [vmem:[%s399 + $0xa1] sm:$0xff] %v2471
  %2504 = vst [vmem:[%s399 + $0xb1] sm:$0xff] %v2472
  %2505 = vst [vmem:[%s399 + $0xc1] sm:$0xff] %v2473
  %2506 = vst [vmem:[%s399 + $0xd1] sm:$0xff] %v2474
  %2507 = vst [vmem:[%s399 + $0xe1] sm:$0xff] %v2475
  %2508 = vst [vmem:[%s399 + $0xf1] sm:$0xff] %v2476
  %2509 = vst [vmem:[%s399 + $0x101] sm:$0xff] %v2477
  %2510 = vst [vmem:[%s399 + $0x111] sm:$0xff] %v2478
  %2511 = vst [vmem:[%s399 + $0x141] sm:$0xff] %v2479
  %2512 = vst [vmem:[%s399 + $0x151] sm:$0xff] %v2480
  %2513 = vst [vmem:[%s399 + $0x161] sm:$0xff] %v2481
  %2514 = vst [vmem:[%s399 + $0x171] sm:$0xff] %v2482
  %2515 = vst [vmem:[%s399 + $0x181] sm:$0xff] %v2483
  %2516 = vst [vmem:[%s399 + $0x191] sm:$0xff] %v2484
  %2517 = vst [vmem:[%s399 + $0x1a1] sm:$0xff] %v2485
  %2518 = vst [vmem:[%s399 + $0x1b1] sm:$0xff] %v2486
  %2519 = vst [vmem:[%s399 + $0x1e1] sm:$0xff] %v2487
  %2520 = vst [vmem:[%s399 + $0x1f1] sm:$0xff] %v2488
  %2521 = vst [vmem:[%s399 + $0x201] sm:$0xff] %v2489
  %2522 = vst [vmem:[%s399 + $0x211] sm:$0xff] %v2490
  %2523 = vst [vmem:[%s399 + $0x221] sm:$0xff] %v2491
  %2524 = vst [vmem:[%s399 + $0x231] sm:$0xff] %v2492
  %2525 = vst [vmem:[%s399 + $0x241] sm:$0xff] %v2493
  %2526 = vst [vmem:[%s399 + $0x251] sm:$0xff] %v2494
  %v2527 = vld [vmem:[#allocation2] sm:$0xff]
  %v2528 = vld [vmem:[#allocation2 + $0x8] sm:$0x3]
  %v2529 = vld [vmem:[#allocation2 + $0x10] sm:$0xff]
  %v2530 = vld [vmem:[#allocation2 + $0x18] sm:$0x3]
  %v2531 = vld [vmem:[#allocation2 + $0x20] sm:$0xff]
  %v2532 = vld [vmem:[#allocation2 + $0x28] sm:$0x3]
  %v2533 = vld [vmem:[#allocation2 + $0x30] sm:$0xff]
  %v2534 = vld [vmem:[#allocation2 + $0x38] sm:$0x3]
  %v2535 = vld [vmem:[#allocation2 + $0x40] sm:$0xff]
  %v2536 = vld [vmem:[#allocation2 + $0x48] sm:$0x3]
  %v2537 = vld [vmem:[#allocation2 + $0x50] sm:$0xff]
  %v2538 = vld [vmem:[#allocation2 + $0x58] sm:$0x3]
  %v2539 = vld [vmem:[#allocation2 + $0x60] sm:$0xff]
  %v2540 = vld [vmem:[#allocation2 + $0x68] sm:$0x3]
  %v2541 = vld [vmem:[#allocation2 + $0x70] sm:$0xff]
  %v2542 = vld [vmem:[#allocation2 + $0x78] sm:$0x3]
  %v2543 = vld [vmem:[#allocation2 + $0x80] sm:$0xff]
  %v2544 = vld [vmem:[#allocation2 + $0x88] sm:$0x3]
  %v2545 = vld [vmem:[#allocation2 + $0x90] sm:$0xff]
  %v2546 = vld [vmem:[#allocation2 + $0x98] sm:$0x3]
  %v2547 = vld [vmem:[#allocation2 + $0xa0] sm:$0xff]
  %v2548 = vld [vmem:[#allocation2 + $0xa8] sm:$0x3]
  %v2549 = vld [vmem:[#allocation2 + $0xb0] sm:$0xff]
  %v2550 = vld [vmem:[#allocation2 + $0xb8] sm:$0x3]
  %v2551 = vld [vmem:[#allocation2 + $0xc0] sm:$0xff]
  %v2552 = vld [vmem:[#allocation2 + $0xc8] sm:$0x3]
  %v2553 = vld [vmem:[#allocation2 + $0xd0] sm:$0xff]
  %v2554 = vld [vmem:[#allocation2 + $0xd8] sm:$0x3]
  %v2555 = vld [vmem:[#allocation2 + $0xe0] sm:$0xff]
  %v2556 = vld [vmem:[#allocation2 + $0xe8] sm:$0x3]
  %v2557 = vld [vmem:[#allocation2 + $0xf0] sm:$0xff]
  %v2558 = vld [vmem:[#allocation2 + $0xf8] sm:$0x3]
  %v2559 = vld [vmem:[#allocation2 + $0x100] sm:$0xff]
  %v2560 = vld [vmem:[#allocation2 + $0x108] sm:$0x3]
  %v2561 = vld [vmem:[#allocation2 + $0x110] sm:$0xff]
  %v2562 = vld [vmem:[#allocation2 + $0x118] sm:$0x3]
  %v2563 = vld [vmem:[#allocation2 + $0x120] sm:$0xff]
  %v2564 = vld [vmem:[#allocation2 + $0x128] sm:$0x3]
  %v2565 = vld [vmem:[#allocation2 + $0x130] sm:$0xff]
  %v2566 = vld [vmem:[#allocation2 + $0x138] sm:$0x3]
  %v2567 = vld [vmem:[#allocation2 + $0x140] sm:$0xff]
  %v2568 = vld [vmem:[#allocation2 + $0x148] sm:$0x3]
  %v2569 = vld [vmem:[#allocation2 + $0x150] sm:$0xff]
  %v2570 = vld [vmem:[#allocation2 + $0x158] sm:$0x3]
  %v2571 = vld [vmem:[#allocation2 + $0x160] sm:$0xff]
  %v2572 = vld [vmem:[#allocation2 + $0x168] sm:$0x3]
  %v2573 = vld [vmem:[#allocation2 + $0x170] sm:$0xff]
  %v2574 = vld [vmem:[#allocation2 + $0x178] sm:$0x3]
  %v2575 = vld [vmem:[#allocation2 + $0x180] sm:$0xff]
  %v2576 = vld [vmem:[#allocation2 + $0x188] sm:$0x3]
  %v2577 = vld [vmem:[#allocation2 + $0x190] sm:$0xff]
  %v2578 = vld [vmem:[#allocation2 + $0x198] sm:$0x3]
  %v2579 = vld [vmem:[#allocation2 + $0x1a0] sm:$0xff]
  %v2580 = vld [vmem:[#allocation2 + $0x1a8] sm:$0x3]
  %v2581 = vld [vmem:[#allocation2 + $0x1b0] sm:$0xff]
  %v2582 = vld [vmem:[#allocation2 + $0x1b8] sm:$0x3]
  %v2583 = vld [vmem:[#allocation2 + $0x1c0] sm:$0xff]
  %v2584 = vld [vmem:[#allocation2 + $0x1c8] sm:$0x3]
  %v2585 = vld [vmem:[#allocation2 + $0x1d0] sm:$0xff]
  %v2586 = vld [vmem:[#allocation2 + $0x1d8] sm:$0x3]
  %v2587 = vld [vmem:[#allocation2 + $0x1e0] sm:$0xff]
  %v2588 = vld [vmem:[#allocation2 + $0x1e8] sm:$0x3]
  %v2589 = vld [vmem:[#allocation2 + $0x1f0] sm:$0xff]
  %v2590 = vld [vmem:[#allocation2 + $0x1f8] sm:$0x3]
  %v2591 = vld [vmem:[#allocation2 + $0x200] sm:$0xff]
  %v2592 = vld [vmem:[#allocation2 + $0x208] sm:$0x3]
  %v2593 = vld [vmem:[#allocation2 + $0x210] sm:$0xff]
  %v2594 = vld [vmem:[#allocation2 + $0x218] sm:$0x3]
  %v2595 = vld [vmem:[#allocation2 + $0x220] sm:$0xff]
  %v2596 = vld [vmem:[#allocation2 + $0x228] sm:$0x3]
  %v2597 = vld [vmem:[#allocation2 + $0x230] sm:$0xff]
  %v2598 = vld [vmem:[#allocation2 + $0x238] sm:$0x3]
  %v2599 = vld [vmem:[#allocation2 + $0x240] sm:$0xff]
  %v2600 = vld [vmem:[#allocation2 + $0x248] sm:$0x3]
  %v2601 = vld [vmem:[#allocation2 + $0x250] sm:$0xff]
  %v2602 = vld [vmem:[#allocation2 + $0x258] sm:$0x3]
  %v2603 = vld [vmem:[#allocation2 + $0x260] sm:$0xff]
  %v2604 = vld [vmem:[#allocation2 + $0x268] sm:$0x3]
  %v2605 = vld [vmem:[#allocation2 + $0x270] sm:$0xff]
  %v2606 = vld [vmem:[#allocation2 + $0x278] sm:$0x3]
  %v2671 = vrot.slane %v2527, 1
  %v2672 = vrot.slane %v2528, 1
  %v2673 = vsel %vm576, %v2671, %v2672
  %v2674 = vrot.slane %v2529, 1
  %v2675 = vrot.slane %v2530, 1
  %v2676 = vsel %vm576, %v2674, %v2675
  %v2677 = vrot.slane %v2531, 1
  %v2678 = vrot.slane %v2532, 1
  %v2679 = vsel %vm576, %v2677, %v2678
  %v2680 = vrot.slane %v2533, 1
  %v2681 = vrot.slane %v2534, 1
  %v2682 = vsel %vm576, %v2680, %v2681
  %v2683 = vrot.slane %v2535, 1
  %v2684 = vrot.slane %v2536, 1
  %v2685 = vsel %vm576, %v2683, %v2684
  %v2686 = vrot.slane %v2537, 1
  %v2687 = vrot.slane %v2538, 1
  %v2688 = vsel %vm576, %v2686, %v2687
  %v2689 = vrot.slane %v2539, 1
  %v2690 = vrot.slane %v2540, 1
  %v2691 = vsel %vm576, %v2689, %v2690
  %v2692 = vrot.slane %v2541, 1
  %v2693 = vrot.slane %v2542, 1
  %v2694 = vsel %vm576, %v2692, %v2693
  %v2695 = vrot.slane %v2547, 1
  %v2696 = vrot.slane %v2548, 1
  %v2697 = vsel %vm576, %v2695, %v2696
  %v2698 = vrot.slane %v2549, 1
  %v2699 = vrot.slane %v2550, 1
  %v2700 = vsel %vm576, %v2698, %v2699
  %v2701 = vrot.slane %v2551, 1
  %v2702 = vrot.slane %v2552, 1
  %v2703 = vsel %vm576, %v2701, %v2702
  %v2704 = vrot.slane %v2553, 1
  %v2705 = vrot.slane %v2554, 1
  %v2706 = vsel %vm576, %v2704, %v2705
  %v2707 = vrot.slane %v2555, 1
  %v2708 = vrot.slane %v2556, 1
  %v2709 = vsel %vm576, %v2707, %v2708
  %v2710 = vrot.slane %v2557, 1
  %v2711 = vrot.slane %v2558, 1
  %v2712 = vsel %vm576, %v2710, %v2711
  %v2713 = vrot.slane %v2559, 1
  %v2714 = vrot.slane %v2560, 1
  %v2715 = vsel %vm576, %v2713, %v2714
  %v2716 = vrot.slane %v2561, 1
  %v2717 = vrot.slane %v2562, 1
  %v2718 = vsel %vm576, %v2716, %v2717
  %v2719 = vrot.slane %v2567, 1
  %v2720 = vrot.slane %v2568, 1
  %v2721 = vsel %vm576, %v2719, %v2720
  %v2722 = vrot.slane %v2569, 1
  %v2723 = vrot.slane %v2570, 1
  %v2724 = vsel %vm576, %v2722, %v2723
  %v2725 = vrot.slane %v2571, 1
  %v2726 = vrot.slane %v2572, 1
  %v2727 = vsel %vm576, %v2725, %v2726
  %v2728 = vrot.slane %v2573, 1
  %v2729 = vrot.slane %v2574, 1
  %v2730 = vsel %vm576, %v2728, %v2729
  %v2731 = vrot.slane %v2575, 1
  %v2732 = vrot.slane %v2576, 1
  %v2733 = vsel %vm576, %v2731, %v2732
  %v2734 = vrot.slane %v2577, 1
  %v2735 = vrot.slane %v2578, 1
  %v2736 = vsel %vm576, %v2734, %v2735
  %v2737 = vrot.slane %v2579, 1
  %v2738 = vrot.slane %v2580, 1
  %v2739 = vsel %vm576, %v2737, %v2738
  %v2740 = vrot.slane %v2581, 1
  %v2741 = vrot.slane %v2582, 1
  %v2742 = vsel %vm576, %v2740, %v2741
  %v2743 = vrot.slane %v2587, 1
  %v2744 = vrot.slane %v2588, 1
  %v2745 = vsel %vm576, %v2743, %v2744
  %v2746 = vrot.slane %v2589, 1
  %v2747 = vrot.slane %v2590, 1
  %v2748 = vsel %vm576, %v2746, %v2747
  %v2749 = vrot.slane %v2591, 1
  %v2750 = vrot.slane %v2592, 1
  %v2751 = vsel %vm576, %v2749, %v2750
  %v2752 = vrot.slane %v2593, 1
  %v2753 = vrot.slane %v2594, 1
  %v2754 = vsel %vm576, %v2752, %v2753
  %v2755 = vrot.slane %v2595, 1
  %v2756 = vrot.slane %v2596, 1
  %v2757 = vsel %vm576, %v2755, %v2756
  %v2758 = vrot.slane %v2597, 1
  %v2759 = vrot.slane %v2598, 1
  %v2760 = vsel %vm576, %v2758, %v2759
  %v2761 = vrot.slane %v2599, 1
  %v2762 = vrot.slane %v2600, 1
  %v2763 = vsel %vm576, %v2761, %v2762
  %v2764 = vrot.slane %v2601, 1
  %v2765 = vrot.slane %v2602, 1
  %v2766 = vsel %vm576, %v2764, %v2765
  %v2799 = vrot.slane %v2527, 2
  %v2800 = vrot.slane %v2528, 2
  %v2801 = vsel %vm705, %v2799, %v2800
  %v2802 = vrot.slane %v2529, 2
  %v2803 = vrot.slane %v2530, 2
  %v2804 = vsel %vm705, %v2802, %v2803
  %v2805 = vrot.slane %v2531, 2
  %v2806 = vrot.slane %v2532, 2
  %v2807 = vsel %vm705, %v2805, %v2806
  %v2808 = vrot.slane %v2533, 2
  %v2809 = vrot.slane %v2534, 2
  %v2810 = vsel %vm705, %v2808, %v2809
  %v2811 = vrot.slane %v2535, 2
  %v2812 = vrot.slane %v2536, 2
  %v2813 = vsel %vm705, %v2811, %v2812
  %v2814 = vrot.slane %v2537, 2
  %v2815 = vrot.slane %v2538, 2
  %v2816 = vsel %vm705, %v2814, %v2815
  %v2817 = vrot.slane %v2539, 2
  %v2818 = vrot.slane %v2540, 2
  %v2819 = vsel %vm705, %v2817, %v2818
  %v2820 = vrot.slane %v2541, 2
  %v2821 = vrot.slane %v2542, 2
  %v2822 = vsel %vm705, %v2820, %v2821
  %v2823 = vrot.slane %v2547, 2
  %v2824 = vrot.slane %v2548, 2
  %v2825 = vsel %vm705, %v2823, %v2824
  %v2826 = vrot.slane %v2549, 2
  %v2827 = vrot.slane %v2550, 2
  %v2828 = vsel %vm705, %v2826, %v2827
  %v2829 = vrot.slane %v2551, 2
  %v2830 = vrot.slane %v2552, 2
  %v2831 = vsel %vm705, %v2829, %v2830
  %v2832 = vrot.slane %v2553, 2
  %v2833 = vrot.slane %v2554, 2
  %v2834 = vsel %vm705, %v2832, %v2833
  %v2835 = vrot.slane %v2555, 2
  %v2836 = vrot.slane %v2556, 2
  %v2837 = vsel %vm705, %v2835, %v2836
  %v2838 = vrot.slane %v2557, 2
  %v2839 = vrot.slane %v2558, 2
  %v2840 = vsel %vm705, %v2838, %v2839
  %v2841 = vrot.slane %v2559, 2
  %v2842 = vrot.slane %v2560, 2
  %v2843 = vsel %vm705, %v2841, %v2842
  %v2844 = vrot.slane %v2561, 2
  %v2845 = vrot.slane %v2562, 2
  %v2846 = vsel %vm705, %v2844, %v2845
  %v2847 = vrot.slane %v2567, 2
  %v2848 = vrot.slane %v2568, 2
  %v2849 = vsel %vm705, %v2847, %v2848
  %v2850 = vrot.slane %v2569, 2
  %v2851 = vrot.slane %v2570, 2
  %v2852 = vsel %vm705, %v2850, %v2851
  %v2853 = vrot.slane %v2571, 2
  %v2854 = vrot.slane %v2572, 2
  %v2855 = vsel %vm705, %v2853, %v2854
  %v2856 = vrot.slane %v2573, 2
  %v2857 = vrot.slane %v2574, 2
  %v2858 = vsel %vm705, %v2856, %v2857
  %v2859 = vrot.slane %v2575, 2
  %v2860 = vrot.slane %v2576, 2
  %v2861 = vsel %vm705, %v2859, %v2860
  %v2862 = vrot.slane %v2577, 2
  %v2863 = vrot.slane %v2578, 2
  %v2864 = vsel %vm705, %v2862, %v2863
  %v2865 = vrot.slane %v2579, 2
  %v2866 = vrot.slane %v2580, 2
  %v2867 = vsel %vm705, %v2865, %v2866
  %v2868 = vrot.slane %v2581, 2
  %v2869 = vrot.slane %v2582, 2
  %v2870 = vsel %vm705, %v2868, %v2869
  %v2871 = vrot.slane %v2587, 2
  %v2872 = vrot.slane %v2588, 2
  %v2873 = vsel %vm705, %v2871, %v2872
  %v2874 = vrot.slane %v2589, 2
  %v2875 = vrot.slane %v2590, 2
  %v2876 = vsel %vm705, %v2874, %v2875
  %v2877 = vrot.slane %v2591, 2
  %v2878 = vrot.slane %v2592, 2
  %v2879 = vsel %vm705, %v2877, %v2878
  %v2880 = vrot.slane %v2593, 2
  %v2881 = vrot.slane %v2594, 2
  %v2882 = vsel %vm705, %v2880, %v2881
  %v2883 = vrot.slane %v2595, 2
  %v2884 = vrot.slane %v2596, 2
  %v2885 = vsel %vm705, %v2883, %v2884
  %v2886 = vrot.slane %v2597, 2
  %v2887 = vrot.slane %v2598, 2
  %v2888 = vsel %vm705, %v2886, %v2887
  %v2889 = vrot.slane %v2599, 2
  %v2890 = vrot.slane %v2600, 2
  %v2891 = vsel %vm705, %v2889, %v2890
  %v2892 = vrot.slane %v2601, 2
  %v2893 = vrot.slane %v2602, 2
  %v2894 = vsel %vm705, %v2892, %v2893
  %v2935 = vrot.slane %v2543, 1
  %v2936 = vrot.slane %v2544, 1
  %v2937 = vsel %vm576, %v2935, %v2936
  %v2938 = vrot.slane %v2563, 1
  %v2939 = vrot.slane %v2564, 1
  %v2940 = vsel %vm576, %v2938, %v2939
  %v2941 = vrot.slane %v2583, 1
  %v2942 = vrot.slane %v2584, 1
  %v2943 = vsel %vm576, %v2941, %v2942
  %v2944 = vrot.slane %v2603, 1
  %v2945 = vrot.slane %v2604, 1
  %v2946 = vsel %vm576, %v2944, %v2945
  %v2951 = vrot.slane %v2543, 2
  %v2952 = vrot.slane %v2544, 2
  %v2953 = vsel %vm705, %v2951, %v2952
  %v2954 = vrot.slane %v2563, 2
  %v2955 = vrot.slane %v2564, 2
  %v2956 = vsel %vm705, %v2954, %v2955
  %v2957 = vrot.slane %v2583, 2
  %v2958 = vrot.slane %v2584, 2
  %v2959 = vsel %vm705, %v2957, %v2958
  %v2960 = vrot.slane %v2603, 2
  %v2961 = vrot.slane %v2604, 2
  %v2962 = vsel %vm705, %v2960, %v2961
  %v2975 = vrot.slane %v2545, 1
  %v2976 = vrot.slane %v2546, 1
  %v2977 = vsel %vm576, %v2975, %v2976
  %v2978 = vrot.slane %v2565, 1
  %v2979 = vrot.slane %v2566, 1
  %v2980 = vsel %vm576, %v2978, %v2979
  %v2981 = vrot.slane %v2585, 1
  %v2982 = vrot.slane %v2586, 1
  %v2983 = vsel %vm576, %v2981, %v2982
  %v2984 = vrot.slane %v2605, 1
  %v2985 = vrot.slane %v2606, 1
  %v2986 = vsel %vm576, %v2984, %v2985
  %v2991 = vrot.slane %v2545, 2
  %v2992 = vrot.slane %v2546, 2
  %v2993 = vsel %vm705, %v2991, %v2992
  %v2994 = vrot.slane %v2565, 2
  %v2995 = vrot.slane %v2566, 2
  %v2996 = vsel %vm705, %v2994, %v2995
  %v2997 = vrot.slane %v2585, 2
  %v2998 = vrot.slane %v2586, 2
  %v2999 = vsel %vm705, %v2997, %v2998
  %v3000 = vrot.slane %v2605, 2
  %v3001 = vrot.slane %v2606, 2
  %v3002 = vsel %vm705, %v3000, %v3001
  %s3007 = scalar_lea.vmem %s1, 1152
  %v3008 = vld [vmem:[%s3007] sm:$0xff]
  %v3009 = vld [vmem:[%s3007 + $0x8] sm:$0xff]
  %v3010 = vld [vmem:[%s3007 + $0x10] sm:$0xff]
  %v3011 = vld [vmem:[%s3007 + $0x18] sm:$0xff]
  %v3012 = vld [vmem:[%s3007 + $0x20] sm:$0xff]
  %v3013 = vld [vmem:[%s3007 + $0x28] sm:$0xff]
  %v3014 = vld [vmem:[%s3007 + $0x30] sm:$0xff]
  %v3015 = vld [vmem:[%s3007 + $0x38] sm:$0xff]
  %v3016 = vld [vmem:[%s3007 + $0x40] sm:$0xff]
  %v3017 = vld [vmem:[%s3007 + $0x48] sm:$0xff]
  %v3018 = vld [vmem:[%s3007 + $0x50] sm:$0xff]
  %v3019 = vld [vmem:[%s3007 + $0x58] sm:$0xff]
  %v3020 = vld [vmem:[%s3007 + $0x60] sm:$0xff]
  %v3021 = vld [vmem:[%s3007 + $0x68] sm:$0xff]
  %v3022 = vld [vmem:[%s3007 + $0x70] sm:$0xff]
  %v3023 = vld [vmem:[%s3007 + $0x78] sm:$0xff]
  %v3024 = vld [vmem:[%s3007 + $0x80] sm:$0xff]
  %v3025 = vld [vmem:[%s3007 + $0x88] sm:$0xff]
  %v3026 = vld [vmem:[%s3007 + $0x90] sm:$0xff]
  %v3027 = vld [vmem:[%s3007 + $0x98] sm:$0xff]
  %v3028 = vld [vmem:[%s3007 + $0xa0] sm:$0xff]
  %v3029 = vld [vmem:[%s3007 + $0xa8] sm:$0xff]
  %v3030 = vld [vmem:[%s3007 + $0xb0] sm:$0xff]
  %v3031 = vld [vmem:[%s3007 + $0xb8] sm:$0xff]
  %v3032 = vld [vmem:[%s3007 + $0xc0] sm:$0xff]
  %v3033 = vld [vmem:[%s3007 + $0xc8] sm:$0xff]
  %v3034 = vld [vmem:[%s3007 + $0xd0] sm:$0xff]
  %v3035 = vld [vmem:[%s3007 + $0xd8] sm:$0xff]
  %v3036 = vld [vmem:[%s3007 + $0xe0] sm:$0xff]
  %v3037 = vld [vmem:[%s3007 + $0xe8] sm:$0xff]
  %v3038 = vld [vmem:[%s3007 + $0xf0] sm:$0xff]
  %v3039 = vld [vmem:[%s3007 + $0xf8] sm:$0xff]
  %v3040 = vld [vmem:[%s3007 + $0x100] sm:$0xff]
  %v3041 = vld [vmem:[%s3007 + $0x108] sm:$0xff]
  %v3042 = vld [vmem:[%s3007 + $0x110] sm:$0xff]
  %v3043 = vld [vmem:[%s3007 + $0x118] sm:$0xff]
  %v3044 = vld [vmem:[%s3007 + $0x120] sm:$0xff]
  %v3045 = vld [vmem:[%s3007 + $0x128] sm:$0xff]
  %v3046 = vld [vmem:[%s3007 + $0x130] sm:$0xff]
  %v3047 = vld [vmem:[%s3007 + $0x138] sm:$0xff]
  %v3048 = vld [vmem:[%s3007 + $0x140] sm:$0xff]
  %v3049 = vld [vmem:[%s3007 + $0x148] sm:$0xff]
  %v3050 = vld [vmem:[%s3007 + $0x150] sm:$0xff]
  %v3051 = vld [vmem:[%s3007 + $0x158] sm:$0xff]
  %v3052 = vld [vmem:[%s3007 + $0x160] sm:$0xff]
  %v3053 = vld [vmem:[%s3007 + $0x168] sm:$0xff]
  %v3054 = vld [vmem:[%s3007 + $0x170] sm:$0xff]
  %v3055 = vld [vmem:[%s3007 + $0x178] sm:$0xff]
  %v3056 = vld [vmem:[%s3007 + $0x180] sm:$0xff]
  %v3057 = vld [vmem:[%s3007 + $0x188] sm:$0xff]
  %v3058 = vld [vmem:[%s3007 + $0x190] sm:$0xff]
  %v3059 = vld [vmem:[%s3007 + $0x198] sm:$0xff]
  %v3060 = vld [vmem:[%s3007 + $0x1a0] sm:$0xff]
  %v3061 = vld [vmem:[%s3007 + $0x1a8] sm:$0xff]
  %v3062 = vld [vmem:[%s3007 + $0x1b0] sm:$0xff]
  %v3063 = vld [vmem:[%s3007 + $0x1b8] sm:$0xff]
  %v3064 = vld [vmem:[%s3007 + $0x1c0] sm:$0xff]
  %v3065 = vld [vmem:[%s3007 + $0x1c8] sm:$0xff]
  %v3066 = vld [vmem:[%s3007 + $0x1d0] sm:$0xff]
  %v3067 = vld [vmem:[%s3007 + $0x1d8] sm:$0xff]
  %v3068 = vld [vmem:[%s3007 + $0x1e0] sm:$0xff]
  %v3069 = vld [vmem:[%s3007 + $0x1e8] sm:$0xff]
  %v3070 = vld [vmem:[%s3007 + $0x1f0] sm:$0xff]
  %v3071 = vld [vmem:[%s3007 + $0x1f8] sm:$0xff]
  %v3072 = vld [vmem:[%s3007 + $0x200] sm:$0xff]
  %v3073 = vld [vmem:[%s3007 + $0x208] sm:$0xff]
  %v3074 = vld [vmem:[%s3007 + $0x210] sm:$0xff]
  %v3075 = vld [vmem:[%s3007 + $0x218] sm:$0xff]
  %v3076 = vld [vmem:[%s3007 + $0x220] sm:$0xff]
  %v3077 = vld [vmem:[%s3007 + $0x228] sm:$0xff]
  %v3078 = vld [vmem:[%s3007 + $0x230] sm:$0xff]
  %v3079 = vld [vmem:[%s3007 + $0x238] sm:$0xff]
  %v3080 = vld [vmem:[%s3007 + $0x240] sm:$0xff]
  %v3081 = vld [vmem:[%s3007 + $0x248] sm:$0xff]
  %v3082 = vld [vmem:[%s3007 + $0x250] sm:$0xff]
  %v3083 = vld [vmem:[%s3007 + $0x258] sm:$0xff]
  %v3084 = vld [vmem:[%s3007 + $0x260] sm:$0xff]
  %v3085 = vld [vmem:[%s3007 + $0x268] sm:$0xff]
  %v3086 = vld [vmem:[%s3007 + $0x270] sm:$0xff]
  %v3087 = vld [vmem:[%s3007 + $0x278] sm:$0xff]
  %v3088 = vld [vmem:[%s3007 + $0x280] sm:$0xff]
  %v3089 = vld [vmem:[%s3007 + $0x288] sm:$0xff]
  %v3090 = vld [vmem:[%s3007 + $0x290] sm:$0xff]
  %v3091 = vld [vmem:[%s3007 + $0x298] sm:$0xff]
  %v3092 = vld [vmem:[%s3007 + $0x2a0] sm:$0xff]
  %v3093 = vld [vmem:[%s3007 + $0x2a8] sm:$0xff]
  %v3094 = vld [vmem:[%s3007 + $0x2b0] sm:$0xff]
  %v3095 = vld [vmem:[%s3007 + $0x2b8] sm:$0xff]
  %v3096 = vld [vmem:[%s3007 + $0x2c0] sm:$0xff]
  %v3097 = vld [vmem:[%s3007 + $0x2c8] sm:$0xff]
  %v3098 = vld [vmem:[%s3007 + $0x2d0] sm:$0xff]
  %v3099 = vld [vmem:[%s3007 + $0x2d8] sm:$0xff]
  %v3100 = vld [vmem:[%s3007 + $0x2e0] sm:$0xff]
  %v3101 = vld [vmem:[%s3007 + $0x2e8] sm:$0xff]
  %v3102 = vld [vmem:[%s3007 + $0x2f0] sm:$0xff]
  %v3103 = vld [vmem:[%s3007 + $0x2f8] sm:$0xff]
  %v3104 = vld [vmem:[%s3007 + $0x300] sm:$0xff]
  %v3105 = vld [vmem:[%s3007 + $0x308] sm:$0xff]
  %v3106 = vld [vmem:[%s3007 + $0x310] sm:$0xff]
  %v3107 = vld [vmem:[%s3007 + $0x318] sm:$0xff]
  %v3108 = vld [vmem:[%s3007 + $0x320] sm:$0xff]
  %v3109 = vld [vmem:[%s3007 + $0x328] sm:$0xff]
  %v3110 = vld [vmem:[%s3007 + $0x330] sm:$0xff]
  %v3111 = vld [vmem:[%s3007 + $0x338] sm:$0xff]
  %v3112 = vld [vmem:[%s3007 + $0x340] sm:$0xff]
  %v3113 = vld [vmem:[%s3007 + $0x348] sm:$0xff]
  %v3114 = vld [vmem:[%s3007 + $0x350] sm:$0xff]
  %v3115 = vld [vmem:[%s3007 + $0x358] sm:$0xff]
  %v3116 = vld [vmem:[%s3007 + $0x360] sm:$0xff]
  %v3117 = vld [vmem:[%s3007 + $0x368] sm:$0xff]
  %v3118 = vld [vmem:[%s3007 + $0x370] sm:$0xff]
  %v3119 = vld [vmem:[%s3007 + $0x378] sm:$0xff]
  %v3120 = vld [vmem:[%s3007 + $0x380] sm:$0xff]
  %v3121 = vld [vmem:[%s3007 + $0x388] sm:$0xff]
  %v3122 = vld [vmem:[%s3007 + $0x390] sm:$0xff]
  %v3123 = vld [vmem:[%s3007 + $0x398] sm:$0xff]
  %v3124 = vld [vmem:[%s3007 + $0x3a0] sm:$0xff]
  %v3125 = vld [vmem:[%s3007 + $0x3a8] sm:$0xff]
  %v3126 = vld [vmem:[%s3007 + $0x3b0] sm:$0xff]
  %v3127 = vld [vmem:[%s3007 + $0x3b8] sm:$0xff]
  %v3128 = vld [vmem:[%s3007 + $0x3c0] sm:$0xff]
  %v3129 = vld [vmem:[%s3007 + $0x3c8] sm:$0xff]
  %v3130 = vld [vmem:[%s3007 + $0x3d0] sm:$0xff]
  %v3131 = vld [vmem:[%s3007 + $0x3d8] sm:$0xff]
  %v3132 = vld [vmem:[%s3007 + $0x3e0] sm:$0xff]
  %v3133 = vld [vmem:[%s3007 + $0x3e8] sm:$0xff]
  %v3134 = vld [vmem:[%s3007 + $0x3f0] sm:$0xff]
  %v3135 = vld [vmem:[%s3007 + $0x3f8] sm:$0xff]
  %v3136 = vld [vmem:[%s3007 + $0x400] sm:$0xff]
  %v3137 = vld [vmem:[%s3007 + $0x408] sm:$0xff]
  %v3138 = vld [vmem:[%s3007 + $0x410] sm:$0xff]
  %v3139 = vld [vmem:[%s3007 + $0x418] sm:$0xff]
  %v3140 = vld [vmem:[%s3007 + $0x420] sm:$0xff]
  %v3141 = vld [vmem:[%s3007 + $0x428] sm:$0xff]
  %v3142 = vld [vmem:[%s3007 + $0x430] sm:$0xff]
  %v3143 = vld [vmem:[%s3007 + $0x438] sm:$0xff]
  %v3144 = vld [vmem:[%s3007 + $0x440] sm:$0xff]
  %v3145 = vld [vmem:[%s3007 + $0x448] sm:$0xff]
  %v3146 = vld [vmem:[%s3007 + $0x450] sm:$0xff]
  %v3147 = vld [vmem:[%s3007 + $0x458] sm:$0xff]
  %v3148 = vld [vmem:[%s3007 + $0x460] sm:$0xff]
  %v3149 = vld [vmem:[%s3007 + $0x468] sm:$0xff]
  %v3150 = vld [vmem:[%s3007 + $0x470] sm:$0xff]
  %v3151 = vld [vmem:[%s3007 + $0x478] sm:$0xff]
  %s3152 = scalar_lea.vmem %s2, 1
  %v3153 = vld [vmem:[%s3152] sm:$0x1]
  %v3155 = vlaneseq
  %v3156 = vshrl.u32 %v3155, 7
  %v3157 = vsub.s32 0, %v3156
  %v3158 = vrot.slane %v3153, %v3157
  %3160 = vmatprep.subr.mxu0 0.0
  %3161 = vmatpush1.msra.mxu0 %v3023
  %3162 = vmatprep.subr.mxu0 0.0
  %3163 = vmatpush1.msra.mxu0 %v3022
  %3164 = vmatprep.subr.mxu0 0.0
  %3165 = vmatpush1.msra.mxu0 %v3021
  %3166 = vmatprep.subr.mxu0 0.0
  %3167 = vmatpush1.msra.mxu0 %v3020
  %3168 = vmatprep.subr.mxu0 0.0
  %3169 = vmatpush1.msra.mxu0 %v3019
  %3170 = vmatprep.subr.mxu0 0.0
  %3171 = vmatpush1.msra.mxu0 %v3018
  %3172 = vmatprep.subr.mxu0 0.0
  %3173 = vmatpush1.msra.mxu0 %v3017
  %3174 = vmatprep.subr.mxu0 0.0
  %3175 = vmatpush1.msra.mxu0 %v3016
  %3176 = vmatprep.subr.mxu0 0.0
  %3177 = vmatpush1.msra.mxu0 %v3015
  %3178 = vmatprep.subr.mxu0 0.0
  %3179 = vmatpush1.msra.mxu0 %v3014
  %3180 = vmatprep.subr.mxu0 0.0
  %3181 = vmatpush1.msra.mxu0 %v3013
  %3182 = vmatprep.subr.mxu0 0.0
  %3183 = vmatpush1.msra.mxu0 %v3012
  %3184 = vmatprep.subr.mxu0 0.0
  %3185 = vmatpush1.msra.mxu0 %v3011
  %3186 = vmatprep.subr.mxu0 0.0
  %3187 = vmatpush1.msra.mxu0 %v3010
  %3188 = vmatprep.subr.mxu0 0.0
  %3189 = vmatpush1.msra.mxu0 %v3009
  %3190 = vmatprep.subr.mxu0 0.0
  %3191 = vmatpush1.msra.mxu0 %v3008
  %3192 = vmatprep.subr.mxu0 0.0
  %3193 = vmatpush2.msra.mxu0 %v3039
  %3194 = vmatprep.subr.mxu0 0.0
  %3195 = vmatpush2.msra.mxu0 %v3038
  %3196 = vmatprep.subr.mxu0 0.0
  %3197 = vmatpush2.msra.mxu0 %v3037
  %3198 = vmatprep.subr.mxu0 0.0
  %3199 = vmatpush2.msra.mxu0 %v3036
  %3200 = vmatprep.subr.mxu0 0.0
  %3201 = vmatpush2.msra.mxu0 %v3035
  %3202 = vmatprep.subr.mxu0 0.0
  %3203 = vmatpush2.msra.mxu0 %v3034
  %3204 = vmatprep.subr.mxu0 0.0
  %3205 = vmatpush2.msra.mxu0 %v3033
  %3206 = vmatprep.subr.mxu0 0.0
  %3207 = vmatpush2.msra.mxu0 %v3032
  %3208 = vmatprep.subr.mxu0 0.0
  %3209 = vmatpush2.msra.mxu0 %v3031
  %3210 = vmatprep.subr.mxu0 0.0
  %3211 = vmatpush2.msra.mxu0 %v3030
  %3212 = vmatprep.subr.mxu0 0.0
  %3213 = vmatpush2.msra.mxu0 %v3029
  %3214 = vmatprep.subr.mxu0 0.0
  %3215 = vmatpush2.msra.mxu0 %v3028
  %3216 = vmatprep.subr.mxu0 0.0
  %3217 = vmatpush2.msra.mxu0 %v3027
  %3218 = vmatprep.subr.mxu0 0.0
  %3219 = vmatpush2.msra.mxu0 %v3026
  %3220 = vmatprep.subr.mxu0 0.0
  %3221 = vmatpush2.msra.mxu0 %v3025
  %3222 = vmatprep.subr.mxu0 0.0
  %3223 = vmatpush2.msra.mxu0 %v3024
  %3224 = vmatprep.mubr.f32.mxu0 %v2673
  %3225 = vmatmul.mubr.f32.gmra.mxu0 %v2527
  %v3226 = vpop.f32.mrf.mxu0
  %v3227 = vadd.f32 %v3158, %v3226
  %v3228 = vpop.f32.mrf.mxu0
  %3229 = vmatprep.mubr.f32.mxu0 %v2676
  %3230 = vmatmul.mubr.f32.gmra.mxu0 %v2529
  %v3231 = vpop.f32.mrf.mxu0
  %v3232 = vadd.f32 %v3158, %v3231
  %v3233 = vpop.f32.mrf.mxu0
  %3234 = vmatprep.mubr.f32.mxu0 %v2679
  %3235 = vmatmul.mubr.f32.gmra.mxu0 %v2531
  %v3236 = vpop.f32.mrf.mxu0
  %v3237 = vadd.f32 %v3158, %v3236
  %v3238 = vpop.f32.mrf.mxu0
  %3239 = vmatprep.mubr.f32.mxu0 %v2682
  %3240 = vmatmul.mubr.f32.gmra.mxu0 %v2533
  %v3241 = vpop.f32.mrf.mxu0
  %v3242 = vadd.f32 %v3158, %v3241
  %v3243 = vpop.f32.mrf.mxu0
  %3244 = vmatprep.mubr.f32.mxu0 %v2685
  %3245 = vmatmul.mubr.f32.gmra.mxu0 %v2535
  %v3246 = vpop.f32.mrf.mxu0
  %v3247 = vadd.f32 %v3158, %v3246
  %v3248 = vpop.f32.mrf.mxu0
  %3249 = vmatprep.mubr.f32.mxu0 %v2688
  %3250 = vmatmul.mubr.f32.gmra.mxu0 %v2537
  %v3251 = vpop.f32.mrf.mxu0
  %v3252 = vadd.f32 %v3158, %v3251
  %v3253 = vpop.f32.mrf.mxu0
  %3254 = vmatprep.mubr.f32.mxu0 %v2691
  %3255 = vmatmul.mubr.f32.gmra.mxu0 %v2539
  %v3256 = vpop.f32.mrf.mxu0
  %v3257 = vadd.f32 %v3158, %v3256
  %v3258 = vpop.f32.mrf.mxu0
  %3259 = vmatprep.mubr.f32.mxu0 %v2694
  %3260 = vmatmul.mubr.f32.gmra.mxu0 %v2541
  %v3261 = vpop.f32.mrf.mxu0
  %v3262 = vadd.f32 %v3158, %v3261
  %v3263 = vpop.f32.mrf.mxu0
  %3264 = vmatprep.mubr.f32.mxu0 %v2697
  %3265 = vmatmul.mubr.f32.gmra.mxu0 %v2547
  %v3266 = vpop.f32.mrf.mxu0
  %v3267 = vadd.f32 %v3158, %v3266
  %v3268 = vpop.f32.mrf.mxu0
  %3269 = vmatprep.mubr.f32.mxu0 %v2700
  %3270 = vmatmul.mubr.f32.gmra.mxu0 %v2549
  %v3271 = vpop.f32.mrf.mxu0
  %v3272 = vadd.f32 %v3158, %v3271
  %v3273 = vpop.f32.mrf.mxu0
  %3274 = vmatprep.mubr.f32.mxu0 %v2703
  %3275 = vmatmul.mubr.f32.gmra.mxu0 %v2551
  %v3276 = vpop.f32.mrf.mxu0
  %v3277 = vadd.f32 %v3158, %v3276
  %v3278 = vpop.f32.mrf.mxu0
  %3279 = vmatprep.mubr.f32.mxu0 %v2706
  %3280 = vmatmul.mubr.f32.gmra.mxu0 %v2553
  %v3281 = vpop.f32.mrf.mxu0
  %v3282 = vadd.f32 %v3158, %v3281
  %v3283 = vpop.f32.mrf.mxu0
  %3284 = vmatprep.mubr.f32.mxu0 %v2709
  %3285 = vmatmul.mubr.f32.gmra.mxu0 %v2555
  %v3286 = vpop.f32.mrf.mxu0
  %v3287 = vadd.f32 %v3158, %v3286
  %v3288 = vpop.f32.mrf.mxu0
  %3289 = vmatprep.mubr.f32.mxu0 %v2712
  %3290 = vmatmul.mubr.f32.gmra.mxu0 %v2557
  %v3291 = vpop.f32.mrf.mxu0
  %v3292 = vadd.f32 %v3158, %v3291
  %v3293 = vpop.f32.mrf.mxu0
  %3294 = vmatprep.mubr.f32.mxu0 %v2715
  %3295 = vmatmul.mubr.f32.gmra.mxu0 %v2559
  %v3296 = vpop.f32.mrf.mxu0
  %v3297 = vadd.f32 %v3158, %v3296
  %v3298 = vpop.f32.mrf.mxu0
  %3299 = vmatprep.mubr.f32.mxu0 %v2718
  %3300 = vmatmul.mubr.f32.gmra.mxu0 %v2561
  %v3301 = vpop.f32.mrf.mxu0
  %v3302 = vadd.f32 %v3158, %v3301
  %v3303 = vpop.f32.mrf.mxu0
  %3304 = vmatprep.mubr.f32.mxu0 %v2721
  %3305 = vmatmul.mubr.f32.gmra.mxu0 %v2567
  %v3306 = vpop.f32.mrf.mxu0
  %v3307 = vadd.f32 %v3158, %v3306
  %v3308 = vpop.f32.mrf.mxu0
  %3309 = vmatprep.mubr.f32.mxu0 %v2724
  %3310 = vmatmul.mubr.f32.gmra.mxu0 %v2569
  %v3311 = vpop.f32.mrf.mxu0
  %v3312 = vadd.f32 %v3158, %v3311
  %v3313 = vpop.f32.mrf.mxu0
  %3314 = vmatprep.mubr.f32.mxu0 %v2727
  %3315 = vmatmul.mubr.f32.gmra.mxu0 %v2571
  %v3316 = vpop.f32.mrf.mxu0
  %v3317 = vadd.f32 %v3158, %v3316
  %v3318 = vpop.f32.mrf.mxu0
  %3319 = vmatprep.mubr.f32.mxu0 %v2730
  %3320 = vmatmul.mubr.f32.gmra.mxu0 %v2573
  %v3321 = vpop.f32.mrf.mxu0
  %v3322 = vadd.f32 %v3158, %v3321
  %v3323 = vpop.f32.mrf.mxu0
  %3324 = vmatprep.mubr.f32.mxu0 %v2733
  %3325 = vmatmul.mubr.f32.gmra.mxu0 %v2575
  %v3326 = vpop.f32.mrf.mxu0
  %v3327 = vadd.f32 %v3158, %v3326
  %v3328 = vpop.f32.mrf.mxu0
  %3329 = vmatprep.mubr.f32.mxu0 %v2736
  %3330 = vmatmul.mubr.f32.gmra.mxu0 %v2577
  %v3331 = vpop.f32.mrf.mxu0
  %v3332 = vadd.f32 %v3158, %v3331
  %v3333 = vpop.f32.mrf.mxu0
  %3334 = vmatprep.mubr.f32.mxu0 %v2739
  %3335 = vmatmul.mubr.f32.gmra.mxu0 %v2579
  %v3336 = vpop.f32.mrf.mxu0
  %v3337 = vadd.f32 %v3158, %v3336
  %v3338 = vpop.f32.mrf.mxu0
  %3339 = vmatprep.mubr.f32.mxu0 %v2742
  %3340 = vmatmul.mubr.f32.gmra.mxu0 %v2581
  %v3341 = vpop.f32.mrf.mxu0
  %v3342 = vadd.f32 %v3158, %v3341
  %v3343 = vpop.f32.mrf.mxu0
  %3344 = vmatprep.mubr.f32.mxu0 %v2745
  %3345 = vmatmul.mubr.f32.gmra.mxu0 %v2587
  %v3346 = vpop.f32.mrf.mxu0
  %v3347 = vadd.f32 %v3158, %v3346
  %v3348 = vpop.f32.mrf.mxu0
  %3349 = vmatprep.mubr.f32.mxu0 %v2748
  %3350 = vmatmul.mubr.f32.gmra.mxu0 %v2589
  %v3351 = vpop.f32.mrf.mxu0
  %v3352 = vadd.f32 %v3158, %v3351
  %v3353 = vpop.f32.mrf.mxu0
  %3354 = vmatprep.mubr.f32.mxu0 %v2751
  %3355 = vmatmul.mubr.f32.gmra.mxu0 %v2591
  %v3356 = vpop.f32.mrf.mxu0
  %v3357 = vadd.f32 %v3158, %v3356
  %v3358 = vpop.f32.mrf.mxu0
  %3359 = vmatprep.mubr.f32.mxu0 %v2754
  %3360 = vmatmul.mubr.f32.gmra.mxu0 %v2593
  %v3361 = vpop.f32.mrf.mxu0
  %v3362 = vadd.f32 %v3158, %v3361
  %v3363 = vpop.f32.mrf.mxu0
  %3364 = vmatprep.mubr.f32.mxu0 %v2757
  %3365 = vmatmul.mubr.f32.gmra.mxu0 %v2595
  %v3366 = vpop.f32.mrf.mxu0
  %v3367 = vadd.f32 %v3158, %v3366
  %v3368 = vpop.f32.mrf.mxu0
  %3369 = vmatprep.mubr.f32.mxu0 %v2760
  %3370 = vmatmul.mubr.f32.gmra.mxu0 %v2597
  %v3371 = vpop.f32.mrf.mxu0
  %v3372 = vadd.f32 %v3158, %v3371
  %v3373 = vpop.f32.mrf.mxu0
  %3374 = vmatprep.mubr.f32.mxu0 %v2763
  %3375 = vmatmul.mubr.f32.gmra.mxu0 %v2599
  %v3376 = vpop.f32.mrf.mxu0
  %v3377 = vadd.f32 %v3158, %v3376
  %v3378 = vpop.f32.mrf.mxu0
  %3379 = vmatprep.mubr.f32.mxu0 %v2766
  %3380 = vmatmul.mubr.f32.gmra.mxu0 %v2601
  %v3381 = vpop.f32.mrf.mxu0
  %v3382 = vadd.f32 %v3158, %v3381
  %v3383 = vpop.f32.mrf.mxu0
  %3384 = vdwg.mxu0
  %3385 = vmatprep.subr.mxu0 0.0
  %3386 = vmatpush1.msra.mxu0 %v3055
  %3387 = vmatprep.subr.mxu0 0.0
  %3388 = vmatpush1.msra.mxu0 %v3054
  %3389 = vmatprep.subr.mxu0 0.0
  %3390 = vmatpush1.msra.mxu0 %v3053
  %3391 = vmatprep.subr.mxu0 0.0
  %3392 = vmatpush1.msra.mxu0 %v3052
  %3393 = vmatprep.subr.mxu0 0.0
  %3394 = vmatpush1.msra.mxu0 %v3051
  %3395 = vmatprep.subr.mxu0 0.0
  %3396 = vmatpush1.msra.mxu0 %v3050
  %3397 = vmatprep.subr.mxu0 0.0
  %3398 = vmatpush1.msra.mxu0 %v3049
  %3399 = vmatprep.subr.mxu0 0.0
  %3400 = vmatpush1.msra.mxu0 %v3048
  %3401 = vmatprep.subr.mxu0 0.0
  %3402 = vmatpush1.msra.mxu0 %v3047
  %3403 = vmatprep.subr.mxu0 0.0
  %3404 = vmatpush1.msra.mxu0 %v3046
  %3405 = vmatprep.subr.mxu0 0.0
  %3406 = vmatpush1.msra.mxu0 %v3045
  %3407 = vmatprep.subr.mxu0 0.0
  %3408 = vmatpush1.msra.mxu0 %v3044
  %3409 = vmatprep.subr.mxu0 0.0
  %3410 = vmatpush1.msra.mxu0 %v3043
  %3411 = vmatprep.subr.mxu0 0.0
  %3412 = vmatpush1.msra.mxu0 %v3042
  %3413 = vmatprep.subr.mxu0 0.0
  %3414 = vmatpush1.msra.mxu0 %v3041
  %3415 = vmatprep.subr.mxu0 0.0
  %3416 = vmatpush1.msra.mxu0 %v3040
  %3417 = vmatprep.subr.mxu0 0.0
  %3418 = vmatpush2.msra.mxu0 %v3071
  %3419 = vmatprep.subr.mxu0 0.0
  %3420 = vmatpush2.msra.mxu0 %v3070
  %3421 = vmatprep.subr.mxu0 0.0
  %3422 = vmatpush2.msra.mxu0 %v3069
  %3423 = vmatprep.subr.mxu0 0.0
  %3424 = vmatpush2.msra.mxu0 %v3068
  %3425 = vmatprep.subr.mxu0 0.0
  %3426 = vmatpush2.msra.mxu0 %v3067
  %3427 = vmatprep.subr.mxu0 0.0
  %3428 = vmatpush2.msra.mxu0 %v3066
  %3429 = vmatprep.subr.mxu0 0.0
  %3430 = vmatpush2.msra.mxu0 %v3065
  %3431 = vmatprep.subr.mxu0 0.0
  %3432 = vmatpush2.msra.mxu0 %v3064
  %3433 = vmatprep.subr.mxu0 0.0
  %3434 = vmatpush2.msra.mxu0 %v3063
  %3435 = vmatprep.subr.mxu0 0.0
  %3436 = vmatpush2.msra.mxu0 %v3062
  %3437 = vmatprep.subr.mxu0 0.0
  %3438 = vmatpush2.msra.mxu0 %v3061
  %3439 = vmatprep.subr.mxu0 0.0
  %3440 = vmatpush2.msra.mxu0 %v3060
  %3441 = vmatprep.subr.mxu0 0.0
  %3442 = vmatpush2.msra.mxu0 %v3059
  %3443 = vmatprep.subr.mxu0 0.0
  %3444 = vmatpush2.msra.mxu0 %v3058
  %3445 = vmatprep.subr.mxu0 0.0
  %3446 = vmatpush2.msra.mxu0 %v3057
  %3447 = vmatprep.subr.mxu0 0.0
  %3448 = vmatpush2.msra.mxu0 %v3056
  %3449 = vmatprep.mubr.f32.mxu0 %v2529
  %3450 = vmatmul.mubr.f32.gmra.mxu0 %v2801
  %v3451 = vpop.f32.mrf.mxu0
  %v3452 = vadd.f32 %v3227, %v3451
  %v3453 = vpop.f32.mrf.mxu0
  %3454 = vmatprep.mubr.f32.mxu0 %v2531
  %3455 = vmatmul.mubr.f32.gmra.mxu0 %v2804
  %v3456 = vpop.f32.mrf.mxu0
  %v3457 = vadd.f32 %v3232, %v3456
  %v3458 = vpop.f32.mrf.mxu0
  %3459 = vmatprep.mubr.f32.mxu0 %v2533
  %3460 = vmatmul.mubr.f32.gmra.mxu0 %v2807
  %v3461 = vpop.f32.mrf.mxu0
  %v3462 = vadd.f32 %v3237, %v3461
  %v3463 = vpop.f32.mrf.mxu0
  %3464 = vmatprep.mubr.f32.mxu0 %v2535
  %3465 = vmatmul.mubr.f32.gmra.mxu0 %v2810
  %v3466 = vpop.f32.mrf.mxu0
  %v3467 = vadd.f32 %v3242, %v3466
  %v3468 = vpop.f32.mrf.mxu0
  %3469 = vmatprep.mubr.f32.mxu0 %v2537
  %3470 = vmatmul.mubr.f32.gmra.mxu0 %v2813
  %v3471 = vpop.f32.mrf.mxu0
  %v3472 = vadd.f32 %v3247, %v3471
  %v3473 = vpop.f32.mrf.mxu0
  %3474 = vmatprep.mubr.f32.mxu0 %v2539
  %3475 = vmatmul.mubr.f32.gmra.mxu0 %v2816
  %v3476 = vpop.f32.mrf.mxu0
  %v3477 = vadd.f32 %v3252, %v3476
  %v3478 = vpop.f32.mrf.mxu0
  %3479 = vmatprep.mubr.f32.mxu0 %v2541
  %3480 = vmatmul.mubr.f32.gmra.mxu0 %v2819
  %v3481 = vpop.f32.mrf.mxu0
  %v3482 = vadd.f32 %v3257, %v3481
  %v3483 = vpop.f32.mrf.mxu0
  %3484 = vmatprep.mubr.f32.mxu0 %v2543
  %3485 = vmatmul.mubr.f32.gmra.mxu0 %v2822
  %v3486 = vpop.f32.mrf.mxu0
  %v3487 = vadd.f32 %v3262, %v3486
  %v3488 = vpop.f32.mrf.mxu0
  %3489 = vmatprep.mubr.f32.mxu0 %v2549
  %3490 = vmatmul.mubr.f32.gmra.mxu0 %v2825
  %v3491 = vpop.f32.mrf.mxu0
  %v3492 = vadd.f32 %v3267, %v3491
  %v3493 = vpop.f32.mrf.mxu0
  %3494 = vmatprep.mubr.f32.mxu0 %v2551
  %3495 = vmatmul.mubr.f32.gmra.mxu0 %v2828
  %v3496 = vpop.f32.mrf.mxu0
  %v3497 = vadd.f32 %v3272, %v3496
  %v3498 = vpop.f32.mrf.mxu0
  %3499 = vmatprep.mubr.f32.mxu0 %v2553
  %3500 = vmatmul.mubr.f32.gmra.mxu0 %v2831
  %v3501 = vpop.f32.mrf.mxu0
  %v3502 = vadd.f32 %v3277, %v3501
  %v3503 = vpop.f32.mrf.mxu0
  %3504 = vmatprep.mubr.f32.mxu0 %v2555
  %3505 = vmatmul.mubr.f32.gmra.mxu0 %v2834
  %v3506 = vpop.f32.mrf.mxu0
  %v3507 = vadd.f32 %v3282, %v3506
  %v3508 = vpop.f32.mrf.mxu0
  %3509 = vmatprep.mubr.f32.mxu0 %v2557
  %3510 = vmatmul.mubr.f32.gmra.mxu0 %v2837
  %v3511 = vpop.f32.mrf.mxu0
  %v3512 = vadd.f32 %v3287, %v3511
  %v3513 = vpop.f32.mrf.mxu0
  %3514 = vmatprep.mubr.f32.mxu0 %v2559
  %3515 = vmatmul.mubr.f32.gmra.mxu0 %v2840
  %v3516 = vpop.f32.mrf.mxu0
  %v3517 = vadd.f32 %v3292, %v3516
  %v3518 = vpop.f32.mrf.mxu0
  %3519 = vmatprep.mubr.f32.mxu0 %v2561
  %3520 = vmatmul.mubr.f32.gmra.mxu0 %v2843
  %v3521 = vpop.f32.mrf.mxu0
  %v3522 = vadd.f32 %v3297, %v3521
  %v3523 = vpop.f32.mrf.mxu0
  %3524 = vmatprep.mubr.f32.mxu0 %v2563
  %3525 = vmatmul.mubr.f32.gmra.mxu0 %v2846
  %v3526 = vpop.f32.mrf.mxu0
  %v3527 = vadd.f32 %v3302, %v3526
  %v3528 = vpop.f32.mrf.mxu0
  %3529 = vmatprep.mubr.f32.mxu0 %v2569
  %3530 = vmatmul.mubr.f32.gmra.mxu0 %v2849
  %v3531 = vpop.f32.mrf.mxu0
  %v3532 = vadd.f32 %v3307, %v3531
  %v3533 = vpop.f32.mrf.mxu0
  %3534 = vmatprep.mubr.f32.mxu0 %v2571
  %3535 = vmatmul.mubr.f32.gmra.mxu0 %v2852
  %v3536 = vpop.f32.mrf.mxu0
  %v3537 = vadd.f32 %v3312, %v3536
  %v3538 = vpop.f32.mrf.mxu0
  %3539 = vmatprep.mubr.f32.mxu0 %v2573
  %3540 = vmatmul.mubr.f32.gmra.mxu0 %v2855
  %v3541 = vpop.f32.mrf.mxu0
  %v3542 = vadd.f32 %v3317, %v3541
  %v3543 = vpop.f32.mrf.mxu0
  %3544 = vmatprep.mubr.f32.mxu0 %v2575
  %3545 = vmatmul.mubr.f32.gmra.mxu0 %v2858
  %v3546 = vpop.f32.mrf.mxu0
  %v3547 = vadd.f32 %v3322, %v3546
  %v3548 = vpop.f32.mrf.mxu0
  %3549 = vmatprep.mubr.f32.mxu0 %v2577
  %3550 = vmatmul.mubr.f32.gmra.mxu0 %v2861
  %v3551 = vpop.f32.mrf.mxu0
  %v3552 = vadd.f32 %v3327, %v3551
  %v3553 = vpop.f32.mrf.mxu0
  %3554 = vmatprep.mubr.f32.mxu0 %v2579
  %3555 = vmatmul.mubr.f32.gmra.mxu0 %v2864
  %v3556 = vpop.f32.mrf.mxu0
  %v3557 = vadd.f32 %v3332, %v3556
  %v3558 = vpop.f32.mrf.mxu0
  %3559 = vmatprep.mubr.f32.mxu0 %v2581
  %3560 = vmatmul.mubr.f32.gmra.mxu0 %v2867
  %v3561 = vpop.f32.mrf.mxu0
  %v3562 = vadd.f32 %v3337, %v3561
  %v3563 = vpop.f32.mrf.mxu0
  %3564 = vmatprep.mubr.f32.mxu0 %v2583
  %3565 = vmatmul.mubr.f32.gmra.mxu0 %v2870
  %v3566 = vpop.f32.mrf.mxu0
  %v3567 = vadd.f32 %v3342, %v3566
  %v3568 = vpop.f32.mrf.mxu0
  %3569 = vmatprep.mubr.f32.mxu0 %v2589
  %3570 = vmatmul.mubr.f32.gmra.mxu0 %v2873
  %v3571 = vpop.f32.mrf.mxu0
  %v3572 = vadd.f32 %v3347, %v3571
  %v3573 = vpop.f32.mrf.mxu0
  %3574 = vmatprep.mubr.f32.mxu0 %v2591
  %3575 = vmatmul.mubr.f32.gmra.mxu0 %v2876
  %v3576 = vpop.f32.mrf.mxu0
  %v3577 = vadd.f32 %v3352, %v3576
  %v3578 = vpop.f32.mrf.mxu0
  %3579 = vmatprep.mubr.f32.mxu0 %v2593
  %3580 = vmatmul.mubr.f32.gmra.mxu0 %v2879
  %v3581 = vpop.f32.mrf.mxu0
  %v3582 = vadd.f32 %v3357, %v3581
  %v3583 = vpop.f32.mrf.mxu0
  %3584 = vmatprep.mubr.f32.mxu0 %v2595
  %3585 = vmatmul.mubr.f32.gmra.mxu0 %v2882
  %v3586 = vpop.f32.mrf.mxu0
  %v3587 = vadd.f32 %v3362, %v3586
  %v3588 = vpop.f32.mrf.mxu0
  %3589 = vmatprep.mubr.f32.mxu0 %v2597
  %3590 = vmatmul.mubr.f32.gmra.mxu0 %v2885
  %v3591 = vpop.f32.mrf.mxu0
  %v3592 = vadd.f32 %v3367, %v3591
  %v3593 = vpop.f32.mrf.mxu0
  %3594 = vmatprep.mubr.f32.mxu0 %v2599
  %3595 = vmatmul.mubr.f32.gmra.mxu0 %v2888
  %v3596 = vpop.f32.mrf.mxu0
  %v3597 = vadd.f32 %v3372, %v3596
  %v3598 = vpop.f32.mrf.mxu0
  %3599 = vmatprep.mubr.f32.mxu0 %v2601
  %3600 = vmatmul.mubr.f32.gmra.mxu0 %v2891
  %v3601 = vpop.f32.mrf.mxu0
  %v3602 = vadd.f32 %v3377, %v3601
  %v3603 = vpop.f32.mrf.mxu0
  %3604 = vmatprep.mubr.f32.mxu0 %v2603
  %3605 = vmatmul.mubr.f32.gmra.mxu0 %v2894
  %v3606 = vpop.f32.mrf.mxu0
  %v3607 = vadd.f32 %v3382, %v3606
  %v3608 = vpop.f32.mrf.mxu0
  %3609 = vdwg.mxu0
  %3610 = vmatprep.subr.mxu0 0.0
  %3611 = vmatpush1.msra.mxu0 %v3087
  %3612 = vmatprep.subr.mxu0 0.0
  %3613 = vmatpush1.msra.mxu0 %v3086
  %3614 = vmatprep.subr.mxu0 0.0
  %3615 = vmatpush1.msra.mxu0 %v3085
  %3616 = vmatprep.subr.mxu0 0.0
  %3617 = vmatpush1.msra.mxu0 %v3084
  %3618 = vmatprep.subr.mxu0 0.0
  %3619 = vmatpush1.msra.mxu0 %v3083
  %3620 = vmatprep.subr.mxu0 0.0
  %3621 = vmatpush1.msra.mxu0 %v3082
  %3622 = vmatprep.subr.mxu0 0.0
  %3623 = vmatpush1.msra.mxu0 %v3081
  %3624 = vmatprep.subr.mxu0 0.0
  %3625 = vmatpush1.msra.mxu0 %v3080
  %3626 = vmatprep.subr.mxu0 0.0
  %3627 = vmatpush1.msra.mxu0 %v3079
  %3628 = vmatprep.subr.mxu0 0.0
  %3629 = vmatpush1.msra.mxu0 %v3078
  %3630 = vmatprep.subr.mxu0 0.0
  %3631 = vmatpush1.msra.mxu0 %v3077
  %3632 = vmatprep.subr.mxu0 0.0
  %3633 = vmatpush1.msra.mxu0 %v3076
  %3634 = vmatprep.subr.mxu0 0.0
  %3635 = vmatpush1.msra.mxu0 %v3075
  %3636 = vmatprep.subr.mxu0 0.0
  %3637 = vmatpush1.msra.mxu0 %v3074
  %3638 = vmatprep.subr.mxu0 0.0
  %3639 = vmatpush1.msra.mxu0 %v3073
  %3640 = vmatprep.subr.mxu0 0.0
  %3641 = vmatpush1.msra.mxu0 %v3072
  %3642 = vmatprep.subr.mxu0 0.0
  %3643 = vmatpush2.msra.mxu0 %v3103
  %3644 = vmatprep.subr.mxu0 0.0
  %3645 = vmatpush2.msra.mxu0 %v3102
  %3646 = vmatprep.subr.mxu0 0.0
  %3647 = vmatpush2.msra.mxu0 %v3101
  %3648 = vmatprep.subr.mxu0 0.0
  %3649 = vmatpush2.msra.mxu0 %v3100
  %3650 = vmatprep.subr.mxu0 0.0
  %3651 = vmatpush2.msra.mxu0 %v3099
  %3652 = vmatprep.subr.mxu0 0.0
  %3653 = vmatpush2.msra.mxu0 %v3098
  %3654 = vmatprep.subr.mxu0 0.0
  %3655 = vmatpush2.msra.mxu0 %v3097
  %3656 = vmatprep.subr.mxu0 0.0
  %3657 = vmatpush2.msra.mxu0 %v3096
  %3658 = vmatprep.subr.mxu0 0.0
  %3659 = vmatpush2.msra.mxu0 %v3095
  %3660 = vmatprep.subr.mxu0 0.0
  %3661 = vmatpush2.msra.mxu0 %v3094
  %3662 = vmatprep.subr.mxu0 0.0
  %3663 = vmatpush2.msra.mxu0 %v3093
  %3664 = vmatprep.subr.mxu0 0.0
  %3665 = vmatpush2.msra.mxu0 %v3092
  %3666 = vmatprep.subr.mxu0 0.0
  %3667 = vmatpush2.msra.mxu0 %v3091
  %3668 = vmatprep.subr.mxu0 0.0
  %3669 = vmatpush2.msra.mxu0 %v3090
  %3670 = vmatprep.subr.mxu0 0.0
  %3671 = vmatpush2.msra.mxu0 %v3089
  %3672 = vmatprep.subr.mxu0 0.0
  %3673 = vmatpush2.msra.mxu0 %v3088
  %3674 = vmatprep.mubr.f32.mxu0 %v2804
  %3675 = vmatmul.mubr.f32.gmra.mxu0 %v2676
  %v3676 = vpop.f32.mrf.mxu0
  %v3677 = vadd.f32 %v3452, %v3676
  %v3678 = vpop.f32.mrf.mxu0
  %3679 = vmatprep.mubr.f32.mxu0 %v2807
  %3680 = vmatmul.mubr.f32.gmra.mxu0 %v2679
  %v3681 = vpop.f32.mrf.mxu0
  %v3682 = vadd.f32 %v3457, %v3681
  %v3683 = vpop.f32.mrf.mxu0
  %3684 = vmatprep.mubr.f32.mxu0 %v2810
  %3685 = vmatmul.mubr.f32.gmra.mxu0 %v2682
  %v3686 = vpop.f32.mrf.mxu0
  %v3687 = vadd.f32 %v3462, %v3686
  %v3688 = vpop.f32.mrf.mxu0
  %3689 = vmatprep.mubr.f32.mxu0 %v2813
  %3690 = vmatmul.mubr.f32.gmra.mxu0 %v2685
  %v3691 = vpop.f32.mrf.mxu0
  %v3692 = vadd.f32 %v3467, %v3691
  %v3693 = vpop.f32.mrf.mxu0
  %3694 = vmatprep.mubr.f32.mxu0 %v2816
  %3695 = vmatmul.mubr.f32.gmra.mxu0 %v2688
  %v3696 = vpop.f32.mrf.mxu0
  %v3697 = vadd.f32 %v3472, %v3696
  %v3698 = vpop.f32.mrf.mxu0
  %3699 = vmatprep.mubr.f32.mxu0 %v2819
  %3700 = vmatmul.mubr.f32.gmra.mxu0 %v2691
  %v3701 = vpop.f32.mrf.mxu0
  %v3702 = vadd.f32 %v3477, %v3701
  %v3703 = vpop.f32.mrf.mxu0
  %3704 = vmatprep.mubr.f32.mxu0 %v2822
  %3705 = vmatmul.mubr.f32.gmra.mxu0 %v2694
  %v3706 = vpop.f32.mrf.mxu0
  %v3707 = vadd.f32 %v3482, %v3706
  %v3708 = vpop.f32.mrf.mxu0
  %3709 = vmatprep.mubr.f32.mxu0 %v2953
  %3710 = vmatmul.mubr.f32.gmra.mxu0 %v2937
  %v3711 = vpop.f32.mrf.mxu0
  %v3712 = vadd.f32 %v3487, %v3711
  %v3713 = vpop.f32.mrf.mxu0
  %3714 = vmatprep.mubr.f32.mxu0 %v2828
  %3715 = vmatmul.mubr.f32.gmra.mxu0 %v2700
  %v3716 = vpop.f32.mrf.mxu0
  %v3717 = vadd.f32 %v3492, %v3716
  %v3718 = vpop.f32.mrf.mxu0
  %3719 = vmatprep.mubr.f32.mxu0 %v2831
  %3720 = vmatmul.mubr.f32.gmra.mxu0 %v2703
  %v3721 = vpop.f32.mrf.mxu0
  %v3722 = vadd.f32 %v3497, %v3721
  %v3723 = vpop.f32.mrf.mxu0
  %3724 = vmatprep.mubr.f32.mxu0 %v2834
  %3725 = vmatmul.mubr.f32.gmra.mxu0 %v2706
  %v3726 = vpop.f32.mrf.mxu0
  %v3727 = vadd.f32 %v3502, %v3726
  %v3728 = vpop.f32.mrf.mxu0
  %3729 = vmatprep.mubr.f32.mxu0 %v2837
  %3730 = vmatmul.mubr.f32.gmra.mxu0 %v2709
  %v3731 = vpop.f32.mrf.mxu0
  %v3732 = vadd.f32 %v3507, %v3731
  %v3733 = vpop.f32.mrf.mxu0
  %3734 = vmatprep.mubr.f32.mxu0 %v2840
  %3735 = vmatmul.mubr.f32.gmra.mxu0 %v2712
  %v3736 = vpop.f32.mrf.mxu0
  %v3737 = vadd.f32 %v3512, %v3736
  %v3738 = vpop.f32.mrf.mxu0
  %3739 = vmatprep.mubr.f32.mxu0 %v2843
  %3740 = vmatmul.mubr.f32.gmra.mxu0 %v2715
  %v3741 = vpop.f32.mrf.mxu0
  %v3742 = vadd.f32 %v3517, %v3741
  %v3743 = vpop.f32.mrf.mxu0
  %3744 = vmatprep.mubr.f32.mxu0 %v2846
  %3745 = vmatmul.mubr.f32.gmra.mxu0 %v2718
  %v3746 = vpop.f32.mrf.mxu0
  %v3747 = vadd.f32 %v3522, %v3746
  %v3748 = vpop.f32.mrf.mxu0
  %3749 = vmatprep.mubr.f32.mxu0 %v2956
  %3750 = vmatmul.mubr.f32.gmra.mxu0 %v2940
  %v3751 = vpop.f32.mrf.mxu0
  %v3752 = vadd.f32 %v3527, %v3751
  %v3753 = vpop.f32.mrf.mxu0
  %3754 = vmatprep.mubr.f32.mxu0 %v2852
  %3755 = vmatmul.mubr.f32.gmra.mxu0 %v2724
  %v3756 = vpop.f32.mrf.mxu0
  %v3757 = vadd.f32 %v3532, %v3756
  %v3758 = vpop.f32.mrf.mxu0
  %3759 = vmatprep.mubr.f32.mxu0 %v2855
  %3760 = vmatmul.mubr.f32.gmra.mxu0 %v2727
  %v3761 = vpop.f32.mrf.mxu0
  %v3762 = vadd.f32 %v3537, %v3761
  %v3763 = vpop.f32.mrf.mxu0
  %3764 = vmatprep.mubr.f32.mxu0 %v2858
  %3765 = vmatmul.mubr.f32.gmra.mxu0 %v2730
  %v3766 = vpop.f32.mrf.mxu0
  %v3767 = vadd.f32 %v3542, %v3766
  %v3768 = vpop.f32.mrf.mxu0
  %3769 = vmatprep.mubr.f32.mxu0 %v2861
  %3770 = vmatmul.mubr.f32.gmra.mxu0 %v2733
  %v3771 = vpop.f32.mrf.mxu0
  %v3772 = vadd.f32 %v3547, %v3771
  %v3773 = vpop.f32.mrf.mxu0
  %3774 = vmatprep.mubr.f32.mxu0 %v2864
  %3775 = vmatmul.mubr.f32.gmra.mxu0 %v2736
  %v3776 = vpop.f32.mrf.mxu0
  %v3777 = vadd.f32 %v3552, %v3776
  %v3778 = vpop.f32.mrf.mxu0
  %3779 = vmatprep.mubr.f32.mxu0 %v2867
  %3780 = vmatmul.mubr.f32.gmra.mxu0 %v2739
  %v3781 = vpop.f32.mrf.mxu0
  %v3782 = vadd.f32 %v3557, %v3781
  %v3783 = vpop.f32.mrf.mxu0
  %3784 = vmatprep.mubr.f32.mxu0 %v2870
  %3785 = vmatmul.mubr.f32.gmra.mxu0 %v2742
  %v3786 = vpop.f32.mrf.mxu0
  %v3787 = vadd.f32 %v3562, %v3786
  %v3788 = vpop.f32.mrf.mxu0
  %3789 = vmatprep.mubr.f32.mxu0 %v2959
  %3790 = vmatmul.mubr.f32.gmra.mxu0 %v2943
  %v3791 = vpop.f32.mrf.mxu0
  %v3792 = vadd.f32 %v3567, %v3791
  %v3793 = vpop.f32.mrf.mxu0
  %3794 = vmatprep.mubr.f32.mxu0 %v2876
  %3795 = vmatmul.mubr.f32.gmra.mxu0 %v2748
  %v3796 = vpop.f32.mrf.mxu0
  %v3797 = vadd.f32 %v3572, %v3796
  %v3798 = vpop.f32.mrf.mxu0
  %3799 = vmatprep.mubr.f32.mxu0 %v2879
  %3800 = vmatmul.mubr.f32.gmra.mxu0 %v2751
  %v3801 = vpop.f32.mrf.mxu0
  %v3802 = vadd.f32 %v3577, %v3801
  %v3803 = vpop.f32.mrf.mxu0
  %3804 = vmatprep.mubr.f32.mxu0 %v2882
  %3805 = vmatmul.mubr.f32.gmra.mxu0 %v2754
  %v3806 = vpop.f32.mrf.mxu0
  %v3807 = vadd.f32 %v3582, %v3806
  %v3808 = vpop.f32.mrf.mxu0
  %3809 = vmatprep.mubr.f32.mxu0 %v2885
  %3810 = vmatmul.mubr.f32.gmra.mxu0 %v2757
  %v3811 = vpop.f32.mrf.mxu0
  %v3812 = vadd.f32 %v3587, %v3811
  %v3813 = vpop.f32.mrf.mxu0
  %3814 = vmatprep.mubr.f32.mxu0 %v2888
  %3815 = vmatmul.mubr.f32.gmra.mxu0 %v2760
  %v3816 = vpop.f32.mrf.mxu0
  %v3817 = vadd.f32 %v3592, %v3816
  %v3818 = vpop.f32.mrf.mxu0
  %3819 = vmatprep.mubr.f32.mxu0 %v2891
  %3820 = vmatmul.mubr.f32.gmra.mxu0 %v2763
  %v3821 = vpop.f32.mrf.mxu0
  %v3822 = vadd.f32 %v3597, %v3821
  %v3823 = vpop.f32.mrf.mxu0
  %3824 = vmatprep.mubr.f32.mxu0 %v2894
  %3825 = vmatmul.mubr.f32.gmra.mxu0 %v2766
  %v3826 = vpop.f32.mrf.mxu0
  %v3827 = vadd.f32 %v3602, %v3826
  %v3828 = vpop.f32.mrf.mxu0
  %3829 = vmatprep.mubr.f32.mxu0 %v2962
  %3830 = vmatmul.mubr.f32.gmra.mxu0 %v2946
  %v3831 = vpop.f32.mrf.mxu0
  %v3832 = vadd.f32 %v3607, %v3831
  %v3833 = vpop.f32.mrf.mxu0
  %3834 = vdwg.mxu0
  %3835 = vmatprep.subr.mxu0 0.0
  %3836 = vmatpush1.msra.mxu0 %v3119
  %3837 = vmatprep.subr.mxu0 0.0
  %3838 = vmatpush1.msra.mxu0 %v3118
  %3839 = vmatprep.subr.mxu0 0.0
  %3840 = vmatpush1.msra.mxu0 %v3117
  %3841 = vmatprep.subr.mxu0 0.0
  %3842 = vmatpush1.msra.mxu0 %v3116
  %3843 = vmatprep.subr.mxu0 0.0
  %3844 = vmatpush1.msra.mxu0 %v3115
  %3845 = vmatprep.subr.mxu0 0.0
  %3846 = vmatpush1.msra.mxu0 %v3114
  %3847 = vmatprep.subr.mxu0 0.0
  %3848 = vmatpush1.msra.mxu0 %v3113
  %3849 = vmatprep.subr.mxu0 0.0
  %3850 = vmatpush1.msra.mxu0 %v3112
  %3851 = vmatprep.subr.mxu0 0.0
  %3852 = vmatpush1.msra.mxu0 %v3111
  %3853 = vmatprep.subr.mxu0 0.0
  %3854 = vmatpush1.msra.mxu0 %v3110
  %3855 = vmatprep.subr.mxu0 0.0
  %3856 = vmatpush1.msra.mxu0 %v3109
  %3857 = vmatprep.subr.mxu0 0.0
  %3858 = vmatpush1.msra.mxu0 %v3108
  %3859 = vmatprep.subr.mxu0 0.0
  %3860 = vmatpush1.msra.mxu0 %v3107
  %3861 = vmatprep.subr.mxu0 0.0
  %3862 = vmatpush1.msra.mxu0 %v3106
  %3863 = vmatprep.subr.mxu0 0.0
  %3864 = vmatpush1.msra.mxu0 %v3105
  %3865 = vmatprep.subr.mxu0 0.0
  %3866 = vmatpush1.msra.mxu0 %v3104
  %3867 = vmatprep.subr.mxu0 0.0
  %3868 = vmatpush2.msra.mxu0 %v3135
  %3869 = vmatprep.subr.mxu0 0.0
  %3870 = vmatpush2.msra.mxu0 %v3134
  %3871 = vmatprep.subr.mxu0 0.0
  %3872 = vmatpush2.msra.mxu0 %v3133
  %3873 = vmatprep.subr.mxu0 0.0
  %3874 = vmatpush2.msra.mxu0 %v3132
  %3875 = vmatprep.subr.mxu0 0.0
  %3876 = vmatpush2.msra.mxu0 %v3131
  %3877 = vmatprep.subr.mxu0 0.0
  %3878 = vmatpush2.msra.mxu0 %v3130
  %3879 = vmatprep.subr.mxu0 0.0
  %3880 = vmatpush2.msra.mxu0 %v3129
  %3881 = vmatprep.subr.mxu0 0.0
  %3882 = vmatpush2.msra.mxu0 %v3128
  %3883 = vmatprep.subr.mxu0 0.0
  %3884 = vmatpush2.msra.mxu0 %v3127
  %3885 = vmatprep.subr.mxu0 0.0
  %3886 = vmatpush2.msra.mxu0 %v3126
  %3887 = vmatprep.subr.mxu0 0.0
  %3888 = vmatpush2.msra.mxu0 %v3125
  %3889 = vmatprep.subr.mxu0 0.0
  %3890 = vmatpush2.msra.mxu0 %v3124
  %3891 = vmatprep.subr.mxu0 0.0
  %3892 = vmatpush2.msra.mxu0 %v3123
  %3893 = vmatprep.subr.mxu0 0.0
  %3894 = vmatpush2.msra.mxu0 %v3122
  %3895 = vmatprep.subr.mxu0 0.0
  %3896 = vmatpush2.msra.mxu0 %v3121
  %3897 = vmatprep.subr.mxu0 0.0
  %3898 = vmatpush2.msra.mxu0 %v3120
  %3899 = vmatprep.mubr.f32.mxu0 %v2679
  %3900 = vmatmul.mubr.f32.gmra.mxu0 %v2531
  %v3901 = vpop.f32.mrf.mxu0
  %v3902 = vadd.f32 %v3677, %v3901
  %v3903 = vpop.f32.mrf.mxu0
  %3904 = vmatprep.mubr.f32.mxu0 %v2682
  %3905 = vmatmul.mubr.f32.gmra.mxu0 %v2533
  %v3906 = vpop.f32.mrf.mxu0
  %v3907 = vadd.f32 %v3682, %v3906
  %v3908 = vpop.f32.mrf.mxu0
  %3909 = vmatprep.mubr.f32.mxu0 %v2685
  %3910 = vmatmul.mubr.f32.gmra.mxu0 %v2535
  %v3911 = vpop.f32.mrf.mxu0
  %v3912 = vadd.f32 %v3687, %v3911
  %v3913 = vpop.f32.mrf.mxu0
  %3914 = vmatprep.mubr.f32.mxu0 %v2688
  %3915 = vmatmul.mubr.f32.gmra.mxu0 %v2537
  %v3916 = vpop.f32.mrf.mxu0
  %v3917 = vadd.f32 %v3692, %v3916
  %v3918 = vpop.f32.mrf.mxu0
  %3919 = vmatprep.mubr.f32.mxu0 %v2691
  %3920 = vmatmul.mubr.f32.gmra.mxu0 %v2539
  %v3921 = vpop.f32.mrf.mxu0
  %v3922 = vadd.f32 %v3697, %v3921
  %v3923 = vpop.f32.mrf.mxu0
  %3924 = vmatprep.mubr.f32.mxu0 %v2694
  %3925 = vmatmul.mubr.f32.gmra.mxu0 %v2541
  %v3926 = vpop.f32.mrf.mxu0
  %v3927 = vadd.f32 %v3702, %v3926
  %v3928 = vpop.f32.mrf.mxu0
  %3929 = vmatprep.mubr.f32.mxu0 %v2937
  %3930 = vmatmul.mubr.f32.gmra.mxu0 %v2543
  %v3931 = vpop.f32.mrf.mxu0
  %v3932 = vadd.f32 %v3707, %v3931
  %v3933 = vpop.f32.mrf.mxu0
  %3934 = vmatprep.mubr.f32.mxu0 %v2977
  %3935 = vmatmul.mubr.f32.gmra.mxu0 %v2545
  %v3936 = vpop.f32.mrf.mxu0
  %v3937 = vadd.f32 %v3712, %v3936
  %v3938 = vpop.f32.mrf.mxu0
  %3939 = vmatprep.mubr.f32.mxu0 %v2703
  %3940 = vmatmul.mubr.f32.gmra.mxu0 %v2551
  %v3941 = vpop.f32.mrf.mxu0
  %v3942 = vadd.f32 %v3717, %v3941
  %v3943 = vpop.f32.mrf.mxu0
  %3944 = vmatprep.mubr.f32.mxu0 %v2706
  %3945 = vmatmul.mubr.f32.gmra.mxu0 %v2553
  %v3946 = vpop.f32.mrf.mxu0
  %v3947 = vadd.f32 %v3722, %v3946
  %v3948 = vpop.f32.mrf.mxu0
  %3949 = vmatprep.mubr.f32.mxu0 %v2709
  %3950 = vmatmul.mubr.f32.gmra.mxu0 %v2555
  %v3951 = vpop.f32.mrf.mxu0
  %v3952 = vadd.f32 %v3727, %v3951
  %v3953 = vpop.f32.mrf.mxu0
  %3954 = vmatprep.mubr.f32.mxu0 %v2712
  %3955 = vmatmul.mubr.f32.gmra.mxu0 %v2557
  %v3956 = vpop.f32.mrf.mxu0
  %v3957 = vadd.f32 %v3732, %v3956
  %v3958 = vpop.f32.mrf.mxu0
  %3959 = vmatprep.mubr.f32.mxu0 %v2715
  %3960 = vmatmul.mubr.f32.gmra.mxu0 %v2559
  %v3961 = vpop.f32.mrf.mxu0
  %v3962 = vadd.f32 %v3737, %v3961
  %v3963 = vpop.f32.mrf.mxu0
  %3964 = vmatprep.mubr.f32.mxu0 %v2718
  %3965 = vmatmul.mubr.f32.gmra.mxu0 %v2561
  %v3966 = vpop.f32.mrf.mxu0
  %v3967 = vadd.f32 %v3742, %v3966
  %v3968 = vpop.f32.mrf.mxu0
  %3969 = vmatprep.mubr.f32.mxu0 %v2940
  %3970 = vmatmul.mubr.f32.gmra.mxu0 %v2563
  %v3971 = vpop.f32.mrf.mxu0
  %v3972 = vadd.f32 %v3747, %v3971
  %v3973 = vpop.f32.mrf.mxu0
  %3974 = vmatprep.mubr.f32.mxu0 %v2980
  %3975 = vmatmul.mubr.f32.gmra.mxu0 %v2565
  %v3976 = vpop.f32.mrf.mxu0
  %v3977 = vadd.f32 %v3752, %v3976
  %v3978 = vpop.f32.mrf.mxu0
  %3979 = vmatprep.mubr.f32.mxu0 %v2727
  %3980 = vmatmul.mubr.f32.gmra.mxu0 %v2571
  %v3981 = vpop.f32.mrf.mxu0
  %v3982 = vadd.f32 %v3757, %v3981
  %v3983 = vpop.f32.mrf.mxu0
  %3984 = vmatprep.mubr.f32.mxu0 %v2730
  %3985 = vmatmul.mubr.f32.gmra.mxu0 %v2573
  %v3986 = vpop.f32.mrf.mxu0
  %v3987 = vadd.f32 %v3762, %v3986
  %v3988 = vpop.f32.mrf.mxu0
  %3989 = vmatprep.mubr.f32.mxu0 %v2733
  %3990 = vmatmul.mubr.f32.gmra.mxu0 %v2575
  %v3991 = vpop.f32.mrf.mxu0
  %v3992 = vadd.f32 %v3767, %v3991
  %v3993 = vpop.f32.mrf.mxu0
  %3994 = vmatprep.mubr.f32.mxu0 %v2736
  %3995 = vmatmul.mubr.f32.gmra.mxu0 %v2577
  %v3996 = vpop.f32.mrf.mxu0
  %v3997 = vadd.f32 %v3772, %v3996
  %v3998 = vpop.f32.mrf.mxu0
  %3999 = vmatprep.mubr.f32.mxu0 %v2739
  %4000 = vmatmul.mubr.f32.gmra.mxu0 %v2579
  %v4001 = vpop.f32.mrf.mxu0
  %v4002 = vadd.f32 %v3777, %v4001
  %v4003 = vpop.f32.mrf.mxu0
  %4004 = vmatprep.mubr.f32.mxu0 %v2742
  %4005 = vmatmul.mubr.f32.gmra.mxu0 %v2581
  %v4006 = vpop.f32.mrf.mxu0
  %v4007 = vadd.f32 %v3782, %v4006
  %v4008 = vpop.f32.mrf.mxu0
  %4009 = vmatprep.mubr.f32.mxu0 %v2943
  %4010 = vmatmul.mubr.f32.gmra.mxu0 %v2583
  %v4011 = vpop.f32.mrf.mxu0
  %v4012 = vadd.f32 %v3787, %v4011
  %v4013 = vpop.f32.mrf.mxu0
  %4014 = vmatprep.mubr.f32.mxu0 %v2983
  %4015 = vmatmul.mubr.f32.gmra.mxu0 %v2585
  %v4016 = vpop.f32.mrf.mxu0
  %v4017 = vadd.f32 %v3792, %v4016
  %v4018 = vpop.f32.mrf.mxu0
  %4019 = vmatprep.mubr.f32.mxu0 %v2751
  %4020 = vmatmul.mubr.f32.gmra.mxu0 %v2591
  %v4021 = vpop.f32.mrf.mxu0
  %v4022 = vadd.f32 %v3797, %v4021
  %v4023 = vpop.f32.mrf.mxu0
  %4024 = vmatprep.mubr.f32.mxu0 %v2754
  %4025 = vmatmul.mubr.f32.gmra.mxu0 %v2593
  %v4026 = vpop.f32.mrf.mxu0
  %v4027 = vadd.f32 %v3802, %v4026
  %v4028 = vpop.f32.mrf.mxu0
  %4029 = vmatprep.mubr.f32.mxu0 %v2757
  %4030 = vmatmul.mubr.f32.gmra.mxu0 %v2595
  %v4031 = vpop.f32.mrf.mxu0
  %v4032 = vadd.f32 %v3807, %v4031
  %v4033 = vpop.f32.mrf.mxu0
  %4034 = vmatprep.mubr.f32.mxu0 %v2760
  %4035 = vmatmul.mubr.f32.gmra.mxu0 %v2597
  %v4036 = vpop.f32.mrf.mxu0
  %v4037 = vadd.f32 %v3812, %v4036
  %v4038 = vpop.f32.mrf.mxu0
  %4039 = vmatprep.mubr.f32.mxu0 %v2763
  %4040 = vmatmul.mubr.f32.gmra.mxu0 %v2599
  %v4041 = vpop.f32.mrf.mxu0
  %v4042 = vadd.f32 %v3817, %v4041
  %v4043 = vpop.f32.mrf.mxu0
  %4044 = vmatprep.mubr.f32.mxu0 %v2766
  %4045 = vmatmul.mubr.f32.gmra.mxu0 %v2601
  %v4046 = vpop.f32.mrf.mxu0
  %v4047 = vadd.f32 %v3822, %v4046
  %v4048 = vpop.f32.mrf.mxu0
  %4049 = vmatprep.mubr.f32.mxu0 %v2946
  %4050 = vmatmul.mubr.f32.gmra.mxu0 %v2603
  %v4051 = vpop.f32.mrf.mxu0
  %v4052 = vadd.f32 %v3827, %v4051
  %v4053 = vpop.f32.mrf.mxu0
  %4054 = vmatprep.mubr.f32.mxu0 %v2986
  %4055 = vmatmul.mubr.f32.gmra.mxu0 %v2605
  %v4056 = vpop.f32.mrf.mxu0
  %v4057 = vadd.f32 %v3832, %v4056
  %v4058 = vpop.f32.mrf.mxu0
  %4059 = vdwg.mxu0
  %4060 = vmatprep.subr.mxu0 0.0
  %4061 = vmatpush1.msra.mxu0 %v3151
  %4062 = vmatprep.subr.mxu0 0.0
  %4063 = vmatpush1.msra.mxu0 %v3150
  %4064 = vmatprep.subr.mxu0 0.0
  %4065 = vmatpush1.msra.mxu0 %v3149
  %4066 = vmatprep.subr.mxu0 0.0
  %4067 = vmatpush1.msra.mxu0 %v3148
  %4068 = vmatprep.subr.mxu0 0.0
  %4069 = vmatpush1.msra.mxu0 %v3147
  %4070 = vmatprep.subr.mxu0 0.0
  %4071 = vmatpush1.msra.mxu0 %v3146
  %4072 = vmatprep.subr.mxu0 0.0
  %4073 = vmatpush1.msra.mxu0 %v3145
  %4074 = vmatprep.subr.mxu0 0.0
  %4075 = vmatpush1.msra.mxu0 %v3144
  %4076 = vmatprep.subr.mxu0 0.0
  %4077 = vmatpush1.msra.mxu0 %v3143
  %4078 = vmatprep.subr.mxu0 0.0
  %4079 = vmatpush1.msra.mxu0 %v3142
  %4080 = vmatprep.subr.mxu0 0.0
  %4081 = vmatpush1.msra.mxu0 %v3141
  %4082 = vmatprep.subr.mxu0 0.0
  %4083 = vmatpush1.msra.mxu0 %v3140
  %4084 = vmatprep.subr.mxu0 0.0
  %4085 = vmatpush1.msra.mxu0 %v3139
  %4086 = vmatprep.subr.mxu0 0.0
  %4087 = vmatpush1.msra.mxu0 %v3138
  %4088 = vmatprep.subr.mxu0 0.0
  %4089 = vmatpush1.msra.mxu0 %v3137
  %4090 = vmatprep.subr.mxu0 0.0
  %4091 = vmatpush1.msra.mxu0 %v3136
  %4092 = vmatprep.subr.mxu0 0.0
  %4093 = vmatpush2.msra.mxu0 0.0
  %4094 = vmatprep.subr.mxu0 0.0
  %4095 = vmatpush2.msra.mxu0 0.0
  %4096 = vmatprep.subr.mxu0 0.0
  %4097 = vmatpush2.msra.mxu0 0.0
  %4098 = vmatprep.subr.mxu0 0.0
  %4099 = vmatpush2.msra.mxu0 0.0
  %4100 = vmatprep.subr.mxu0 0.0
  %4101 = vmatpush2.msra.mxu0 0.0
  %4102 = vmatprep.subr.mxu0 0.0
  %4103 = vmatpush2.msra.mxu0 0.0
  %4104 = vmatprep.subr.mxu0 0.0
  %4105 = vmatpush2.msra.mxu0 0.0
  %4106 = vmatprep.subr.mxu0 0.0
  %4107 = vmatpush2.msra.mxu0 0.0
  %4108 = vmatprep.subr.mxu0 0.0
  %4109 = vmatpush2.msra.mxu0 0.0
  %4110 = vmatprep.subr.mxu0 0.0
  %4111 = vmatpush2.msra.mxu0 0.0
  %4112 = vmatprep.subr.mxu0 0.0
  %4113 = vmatpush2.msra.mxu0 0.0
  %4114 = vmatprep.subr.mxu0 0.0
  %4115 = vmatpush2.msra.mxu0 0.0
  %4116 = vmatprep.subr.mxu0 0.0
  %4117 = vmatpush2.msra.mxu0 0.0
  %4118 = vmatprep.subr.mxu0 0.0
  %4119 = vmatpush2.msra.mxu0 0.0
  %4120 = vmatprep.subr.mxu0 0.0
  %4121 = vmatpush2.msra.mxu0 0.0
  %4122 = vmatprep.subr.mxu0 0.0
  %4123 = vmatpush2.msra.mxu0 0.0
  %4124 = vmatprep.mubr.f32.mxu0 0.0
  %4125 = vmatmul.mubr.f32.gmra.mxu0 %v2807
  %v4126 = vpop.f32.mrf.mxu0
  %v4127 = vadd.f32 %v3902, %v4126
  %v4128 = vpop.f32.mrf.mxu0
  %4129 = vmatprep.mubr.f32.mxu0 0.0
  %4130 = vmatmul.mubr.f32.gmra.mxu0 %v2810
  %v4131 = vpop.f32.mrf.mxu0
  %v4132 = vadd.f32 %v3907, %v4131
  %v4133 = vpop.f32.mrf.mxu0
  %4134 = vmatprep.mubr.f32.mxu0 0.0
  %4135 = vmatmul.mubr.f32.gmra.mxu0 %v2813
  %v4136 = vpop.f32.mrf.mxu0
  %v4137 = vadd.f32 %v3912, %v4136
  %v4138 = vpop.f32.mrf.mxu0
  %4139 = vmatprep.mubr.f32.mxu0 0.0
  %4140 = vmatmul.mubr.f32.gmra.mxu0 %v2816
  %v4141 = vpop.f32.mrf.mxu0
  %v4142 = vadd.f32 %v3917, %v4141
  %v4143 = vpop.f32.mrf.mxu0
  %4144 = vmatprep.mubr.f32.mxu0 0.0
  %4145 = vmatmul.mubr.f32.gmra.mxu0 %v2819
  %v4146 = vpop.f32.mrf.mxu0
  %v4147 = vadd.f32 %v3922, %v4146
  %v4148 = vpop.f32.mrf.mxu0
  %4149 = vmatprep.mubr.f32.mxu0 0.0
  %4150 = vmatmul.mubr.f32.gmra.mxu0 %v2822
  %v4151 = vpop.f32.mrf.mxu0
  %v4152 = vadd.f32 %v3927, %v4151
  %v4153 = vpop.f32.mrf.mxu0
  %4154 = vmatprep.mubr.f32.mxu0 0.0
  %4155 = vmatmul.mubr.f32.gmra.mxu0 %v2953
  %v4156 = vpop.f32.mrf.mxu0
  %v4157 = vadd.f32 %v3932, %v4156
  %v4158 = vpop.f32.mrf.mxu0
  %4159 = vmatprep.mubr.f32.mxu0 0.0
  %4160 = vmatmul.mubr.f32.gmra.mxu0 %v2993
  %v4161 = vpop.f32.mrf.mxu0
  %v4162 = vadd.f32 %v3937, %v4161
  %v4163 = vpop.f32.mrf.mxu0
  %4164 = vmatprep.mubr.f32.mxu0 0.0
  %4165 = vmatmul.mubr.f32.gmra.mxu0 %v2831
  %v4166 = vpop.f32.mrf.mxu0
  %v4167 = vadd.f32 %v3942, %v4166
  %v4168 = vpop.f32.mrf.mxu0
  %4169 = vmatprep.mubr.f32.mxu0 0.0
  %4170 = vmatmul.mubr.f32.gmra.mxu0 %v2834
  %v4171 = vpop.f32.mrf.mxu0
  %v4172 = vadd.f32 %v3947, %v4171
  %v4173 = vpop.f32.mrf.mxu0
  %4174 = vmatprep.mubr.f32.mxu0 0.0
  %4175 = vmatmul.mubr.f32.gmra.mxu0 %v2837
  %v4176 = vpop.f32.mrf.mxu0
  %v4177 = vadd.f32 %v3952, %v4176
  %v4178 = vpop.f32.mrf.mxu0
  %4179 = vmatprep.mubr.f32.mxu0 0.0
  %4180 = vmatmul.mubr.f32.gmra.mxu0 %v2840
  %v4181 = vpop.f32.mrf.mxu0
  %v4182 = vadd.f32 %v3957, %v4181
  %v4183 = vpop.f32.mrf.mxu0
  %4184 = vmatprep.mubr.f32.mxu0 0.0
  %4185 = vmatmul.mubr.f32.gmra.mxu0 %v2843
  %v4186 = vpop.f32.mrf.mxu0
  %v4187 = vadd.f32 %v3962, %v4186
  %v4188 = vpop.f32.mrf.mxu0
  %4189 = vmatprep.mubr.f32.mxu0 0.0
  %4190 = vmatmul.mubr.f32.gmra.mxu0 %v2846
  %v4191 = vpop.f32.mrf.mxu0
  %v4192 = vadd.f32 %v3967, %v4191
  %v4193 = vpop.f32.mrf.mxu0
  %4194 = vmatprep.mubr.f32.mxu0 0.0
  %4195 = vmatmul.mubr.f32.gmra.mxu0 %v2956
  %v4196 = vpop.f32.mrf.mxu0
  %v4197 = vadd.f32 %v3972, %v4196
  %v4198 = vpop.f32.mrf.mxu0
  %4199 = vmatprep.mubr.f32.mxu0 0.0
  %4200 = vmatmul.mubr.f32.gmra.mxu0 %v2996
  %v4201 = vpop.f32.mrf.mxu0
  %v4202 = vadd.f32 %v3977, %v4201
  %v4203 = vpop.f32.mrf.mxu0
  %4204 = vmatprep.mubr.f32.mxu0 0.0
  %4205 = vmatmul.mubr.f32.gmra.mxu0 %v2855
  %v4206 = vpop.f32.mrf.mxu0
  %v4207 = vadd.f32 %v3982, %v4206
  %v4208 = vpop.f32.mrf.mxu0
  %4209 = vmatprep.mubr.f32.mxu0 0.0
  %4210 = vmatmul.mubr.f32.gmra.mxu0 %v2858
  %v4211 = vpop.f32.mrf.mxu0
  %v4212 = vadd.f32 %v3987, %v4211
  %v4213 = vpop.f32.mrf.mxu0
  %4214 = vmatprep.mubr.f32.mxu0 0.0
  %4215 = vmatmul.mubr.f32.gmra.mxu0 %v2861
  %v4216 = vpop.f32.mrf.mxu0
  %v4217 = vadd.f32 %v3992, %v4216
  %v4218 = vpop.f32.mrf.mxu0
  %4219 = vmatprep.mubr.f32.mxu0 0.0
  %4220 = vmatmul.mubr.f32.gmra.mxu0 %v2864
  %v4221 = vpop.f32.mrf.mxu0
  %v4222 = vadd.f32 %v3997, %v4221
  %v4223 = vpop.f32.mrf.mxu0
  %4224 = vmatprep.mubr.f32.mxu0 0.0
  %4225 = vmatmul.mubr.f32.gmra.mxu0 %v2867
  %v4226 = vpop.f32.mrf.mxu0
  %v4227 = vadd.f32 %v4002, %v4226
  %v4228 = vpop.f32.mrf.mxu0
  %4229 = vmatprep.mubr.f32.mxu0 0.0
  %4230 = vmatmul.mubr.f32.gmra.mxu0 %v2870
  %v4231 = vpop.f32.mrf.mxu0
  %v4232 = vadd.f32 %v4007, %v4231
  %v4233 = vpop.f32.mrf.mxu0
  %4234 = vmatprep.mubr.f32.mxu0 0.0
  %4235 = vmatmul.mubr.f32.gmra.mxu0 %v2959
  %v4236 = vpop.f32.mrf.mxu0
  %v4237 = vadd.f32 %v4012, %v4236
  %v4238 = vpop.f32.mrf.mxu0
  %4239 = vmatprep.mubr.f32.mxu0 0.0
  %4240 = vmatmul.mubr.f32.gmra.mxu0 %v2999
  %v4241 = vpop.f32.mrf.mxu0
  %v4242 = vadd.f32 %v4017, %v4241
  %v4243 = vpop.f32.mrf.mxu0
  %4244 = vmatprep.mubr.f32.mxu0 0.0
  %4245 = vmatmul.mubr.f32.gmra.mxu0 %v2879
  %v4246 = vpop.f32.mrf.mxu0
  %v4247 = vadd.f32 %v4022, %v4246
  %v4248 = vpop.f32.mrf.mxu0
  %4249 = vmatprep.mubr.f32.mxu0 0.0
  %4250 = vmatmul.mubr.f32.gmra.mxu0 %v2882
  %v4251 = vpop.f32.mrf.mxu0
  %v4252 = vadd.f32 %v4027, %v4251
  %v4253 = vpop.f32.mrf.mxu0
  %4254 = vmatprep.mubr.f32.mxu0 0.0
  %4255 = vmatmul.mubr.f32.gmra.mxu0 %v2885
  %v4256 = vpop.f32.mrf.mxu0
  %v4257 = vadd.f32 %v4032, %v4256
  %v4258 = vpop.f32.mrf.mxu0
  %4259 = vmatprep.mubr.f32.mxu0 0.0
  %4260 = vmatmul.mubr.f32.gmra.mxu0 %v2888
  %v4261 = vpop.f32.mrf.mxu0
  %v4262 = vadd.f32 %v4037, %v4261
  %v4263 = vpop.f32.mrf.mxu0
  %4264 = vmatprep.mubr.f32.mxu0 0.0
  %4265 = vmatmul.mubr.f32.gmra.mxu0 %v2891
  %v4266 = vpop.f32.mrf.mxu0
  %v4267 = vadd.f32 %v4042, %v4266
  %v4268 = vpop.f32.mrf.mxu0
  %4269 = vmatprep.mubr.f32.mxu0 0.0
  %4270 = vmatmul.mubr.f32.gmra.mxu0 %v2894
  %v4271 = vpop.f32.mrf.mxu0
  %v4272 = vadd.f32 %v4047, %v4271
  %v4273 = vpop.f32.mrf.mxu0
  %4274 = vmatprep.mubr.f32.mxu0 0.0
  %4275 = vmatmul.mubr.f32.gmra.mxu0 %v2962
  %v4276 = vpop.f32.mrf.mxu0
  %v4277 = vadd.f32 %v4052, %v4276
  %v4278 = vpop.f32.mrf.mxu0
  %4279 = vmatprep.mubr.f32.mxu0 0.0
  %4280 = vmatmul.mubr.f32.gmra.mxu0 %v3002
  %v4281 = vpop.f32.mrf.mxu0
  %v4282 = vadd.f32 %v4057, %v4281
  %v4283 = vpop.f32.mrf.mxu0
  %4284 = vdwg.mxu0
  %v4285 = vadd.f32 %v2254, %v4127
  %v4286 = vadd.f32 %v2255, %v4132
  %v4287 = vadd.f32 %v2256, %v4137
  %v4288 = vadd.f32 %v2257, %v4142
  %v4289 = vadd.f32 %v2258, %v4147
  %v4290 = vadd.f32 %v2259, %v4152
  %v4291 = vadd.f32 %v2260, %v4157
  %v4292 = vadd.f32 %v2261, %v4162
  %v4293 = vadd.f32 %v2262, %v4167
  %v4294 = vadd.f32 %v2263, %v4172
  %v4295 = vadd.f32 %v2264, %v4177
  %v4296 = vadd.f32 %v2265, %v4182
  %v4297 = vadd.f32 %v2266, %v4187
  %v4298 = vadd.f32 %v2267, %v4192
  %v4299 = vadd.f32 %v2268, %v4197
  %v4300 = vadd.f32 %v2269, %v4202
  %v4301 = vadd.f32 %v2270, %v4207
  %v4302 = vadd.f32 %v2271, %v4212
  %v4303 = vadd.f32 %v2272, %v4217
  %v4304 = vadd.f32 %v2273, %v4222
  %v4305 = vadd.f32 %v2274, %v4227
  %v4306 = vadd.f32 %v2275, %v4232
  %v4307 = vadd.f32 %v2276, %v4237
  %v4308 = vadd.f32 %v2277, %v4242
  %v4309 = vadd.f32 %v2278, %v4247
  %v4310 = vadd.f32 %v2279, %v4252
  %v4311 = vadd.f32 %v2280, %v4257
  %v4312 = vadd.f32 %v2281, %v4262
  %v4313 = vadd.f32 %v2282, %v4267
  %v4314 = vadd.f32 %v2283, %v4272
  %v4315 = vadd.f32 %v2284, %v4277
  %v4316 = vadd.f32 %v2285, %v4282
  %4317 = vst [vmem:[%s3] sm:$0xff] %v4285
  %4318 = vst [vmem:[%s3 + $0x8] sm:$0xff] %v4286
  %4319 = vst [vmem:[%s3 + $0x10] sm:$0xff] %v4287
  %4320 = vst [vmem:[%s3 + $0x18] sm:$0xff] %v4288
  %4321 = vst [vmem:[%s3 + $0x20] sm:$0xff] %v4289
  %4322 = vst [vmem:[%s3 + $0x28] sm:$0xff] %v4290
  %4323 = vst [vmem:[%s3 + $0x30] sm:$0xff] %v4291
  %4324 = vst [vmem:[%s3 + $0x38] sm:$0xff] %v4292
  %4325 = vst [vmem:[%s3 + $0x40] sm:$0xff] %v4293
  %4326 = vst [vmem:[%s3 + $0x48] sm:$0xff] %v4294
  %4327 = vst [vmem:[%s3 + $0x50] sm:$0xff] %v4295
  %4328 = vst [vmem:[%s3 + $0x58] sm:$0xff] %v4296
  %4329 = vst [vmem:[%s3 + $0x60] sm:$0xff] %v4297
  %4330 = vst [vmem:[%s3 + $0x68] sm:$0xff] %v4298
  %4331 = vst [vmem:[%s3 + $0x70] sm:$0xff] %v4299
  %4332 = vst [vmem:[%s3 + $0x78] sm:$0xff] %v4300
  %4333 = vst [vmem:[%s3 + $0x80] sm:$0xff] %v4301
  %4334 = vst [vmem:[%s3 + $0x88] sm:$0xff] %v4302
  %4335 = vst [vmem:[%s3 + $0x90] sm:$0xff] %v4303
  %4336 = vst [vmem:[%s3 + $0x98] sm:$0xff] %v4304
  %4337 = vst [vmem:[%s3 + $0xa0] sm:$0xff] %v4305
  %4338 = vst [vmem:[%s3 + $0xa8] sm:$0xff] %v4306
  %4339 = vst [vmem:[%s3 + $0xb0] sm:$0xff] %v4307
  %4340 = vst [vmem:[%s3 + $0xb8] sm:$0xff] %v4308
  %4341 = vst [vmem:[%s3 + $0xc0] sm:$0xff] %v4309
  %4342 = vst [vmem:[%s3 + $0xc8] sm:$0xff] %v4310
  %4343 = vst [vmem:[%s3 + $0xd0] sm:$0xff] %v4311
  %4344 = vst [vmem:[%s3 + $0xd8] sm:$0xff] %v4312
  %4345 = vst [vmem:[%s3 + $0xe0] sm:$0xff] %v4313
  %4346 = vst [vmem:[%s3 + $0xe8] sm:$0xff] %v4314
  %4347 = vst [vmem:[%s3 + $0xf0] sm:$0xff] %v4315
  %4348 = vst [vmem:[%s3 + $0xf8] sm:$0xff] %v4316
  // Predicated region
  $region14: #{dense_block_forward.1} parent=0 // pred_check
    _
  $region15: #{dense_block_forward.1} parent=0 // pred_check_branch
    %4350 = sbr.rel (0) target = $region17
  $region16: #{dense_block_forward.1} parent=0 // pred_region
    _
  $region17: #{dense_block_forward.1} parent=0 // pred_fallthru
    _
  // Predicated region
  $region18: #{dense_block_forward.1} parent=0 // pred_check
    _
  $region19: #{dense_block_forward.1} parent=0 // pred_check_branch
    %4352 = sbr.rel (0) target = $region21
  $region20: #{dense_block_forward.1} parent=0 // pred_region
    _
  $region21: #{dense_block_forward.1} parent=0 // pred_fallthru
    _

</llo_original>
